<compile_context>
chip_gen: v7x
topology: tpu7x:2x2x1
jax: 0.10.0
libtpu: 0.0.40
codegen_flags: <defaults>
</compile_context>

<pallas_src>
import functools

import jax
import jax.numpy as jnp
from jax.experimental import pallas as pl
from jax.experimental.pallas import tpu as pltpu

N_EMBD = 384          # from the module
HIDDEN = 4 * N_EMBD   # 1536


def _round_up(a, b):
    return ((a + b - 1) // b) * b


def ffn_kernel(x_ref, w1_ref, b1_ref, w2_ref, b2_ref, o_ref):
    """Fused Linear -> ReLU -> Linear for one tile of rows.

    x_ref : (tm, C)     VMEM (row tile)
    w1_ref: (C, 4C)     VMEM (full, resident: constant index_map, single-buffered)
    b1_ref: (1, 4C)     VMEM (full)
    w2_ref: (4C, C)     VMEM (full)
    b2_ref: (1, C)      VMEM (full)
    o_ref : (tm, C)     VMEM (row tile)
    """
    x = x_ref[...]
    # Linear1 on the MXU, f32 accumulation; bias added post-accumulation.
    h32 = jnp.dot(x, w1_ref[...], preferred_element_type=jnp.float32) + b1_ref[...]
    # Downcast to the weight dtype *before* the ReLU. ReLU commutes with the
    # downcast, so this is bit-identical to relu-then-cast, but in bf16 the
    # (tm, 4C) intermediate uses half the vregs / VALU ops / store traffic
    # (v6e/v7x). On v5e the pre-store downcast is still what relieves the single
    # vector-store slot. For f32 weights this is a no-op.
    h = jnp.maximum(h32.astype(w2_ref.dtype), 0)
    # Linear2 on the MXU, f32 accumulation.
    y = jnp.dot(h, w2_ref[...], preferred_element_type=jnp.float32) + b2_ref[...]
    # Dropout: eval-mode identity.
    o_ref[...] = y.astype(o_ref.dtype)


@functools.partial(jax.jit, static_argnames=("tm",))
def feed_forward(x, w1, b1, w2, b2, *, tm=None):
    """x: (B, T, C) -> (B, T, C). tm defaults to 512 (f32) / 1024 (bf16)."""
    B, T, C = x.shape
    Cw, H = w1.shape
    assert Cw == C, "w1 must be (C, 4C)"
    M = B * T

    # Keep activations in the weight dtype so a bf16-weight matmul never silently
    # promotes the MXU inputs to f32. Output stays in x.dtype.
    x2d = x.reshape(M, C).astype(w1.dtype)

    if tm is None:
        tm = 1024 if jnp.dtype(w1.dtype).itemsize < 4 else 512

    # No wrapper-side padding: the last (ragged) block is handled by Pallas with
    # padded reads and clipped writes; rows are independent so padding rows are
    # harmless MXU filler.
    tm_eff = min(tm, _round_up(M, 8))
    if pl.cdiv(M, tm_eff) < 2 and M > 8:
        # Ensure >= 2 grid steps so the "parallel" axis can shard across both
        # TensorCores on v7x (single-step grids leave one core idle).
        tm_eff = _round_up(pl.cdiv(M, 2), 8)
    grid = (pl.cdiv(M, tm_eff),)

    nbytes = lambda a: a.size * a.dtype.itemsize
    cost = pl.CostEstimate(
        flops=2 * M * (C * H + H * C),
        transcendentals=0,
        bytes_accessed=(nbytes(x2d) + nbytes(w1) + nbytes(b1) + nbytes(w2)
                        + nbytes(b2) + M * C * jnp.dtype(x.dtype).itemsize),
    )

    row_spec = pl.BlockSpec((tm_eff, C), lambda i: (i, 0))
    # Constant index_map => DMA'd once and resident across the row grid;
    # single-buffer so no VMEM is spent on a second copy that is never refilled.
    const_spec = lambda shape: pl.BlockSpec(
        shape, lambda i: (0, 0), pipeline_mode=pl.Buffered(1))

    out2d = pl.pallas_call(
        ffn_kernel,
        out_shape=jax.ShapeDtypeStruct((M, C), x.dtype),
        grid_spec=pltpu.PrefetchScalarGridSpec(
            num_scalar_prefetch=0,
            grid=grid,
            in_specs=[
                row_spec,              # x rows, tiled
                const_spec((C, H)),    # w1 full
                const_spec((1, H)),    # b1 full
                const_spec((H, C)),    # w2 full
                const_spec((1, C)),    # b2 full
            ],
            out_specs=pl.BlockSpec((tm_eff, C), lambda i: (i, 0)),
        ),
        compiler_params=pltpu.CompilerParams(
            dimension_semantics=("parallel",),
            vmem_limit_bytes=32 << 20,   # fits v5e/v6e/v7x; working set << 32 MiB
        ),
        cost_estimate=cost,
    )(x2d, w1, b1, w2, b2)

    return out2d.reshape(B, T, C)


def init_params(key, n_embd=N_EMBD, dtype=jnp.float32):
    """Deterministic init mimicking torch.nn.Linear's U(-1/sqrt(fan_in), 1/sqrt(fan_in))."""
    h = 4 * n_embd
    k1, k2, k3, k4 = jax.random.split(key, 4)
    bound1 = 1.0 / jnp.sqrt(n_embd)
    bound2 = 1.0 / jnp.sqrt(h)
    w1 = jax.random.uniform(k1, (n_embd, h), jnp.float32, -bound1, bound1).astype(dtype)
    b1 = jax.random.uniform(k2, (1, h), jnp.float32, -bound1, bound1).astype(dtype)
    w2 = jax.random.uniform(k3, (h, n_embd), jnp.float32, -bound2, bound2).astype(dtype)
    b2 = jax.random.uniform(k4, (1, n_embd), jnp.float32, -bound2, bound2).astype(dtype)
    return w1, b1, w2, b2


def _ref_ffn(x, w1, b1, w2, b2):
    """Pure-JAX f32 reference (eval-mode dropout = identity)."""
    B, T, C = x.shape
    xf = x.reshape(B * T, C).astype(jnp.float32)
    h = jnp.maximum(xf @ w1.astype(jnp.float32) + b1.astype(jnp.float32), 0.0)
    y = h @ w2.astype(jnp.float32) + b2.astype(jnp.float32)
    return y.reshape(B, T, C)


if __name__ == "__main__":
    key = jax.random.PRNGKey(0)
    kx, kp, kx2 = jax.random.split(key, 3)

    # Small primary test: (B, T, C) = (2, 8, 384), f32 path, strict tolerance.
    B, T, C = 2, 8, N_EMBD
    x = jax.random.normal(kx, (B, T, C), jnp.float32)
    w1, b1, w2, b2 = init_params(kp, dtype=jnp.float32)

    out = feed_forward(x, w1, b1, w2, b2)
    jax.block_until_ready(out)
    ref = _ref_ffn(x, w1, b1, w2, b2)
    assert out.shape == (B, T, C)
    assert jnp.allclose(out, ref, atol=1e-4, rtol=1e-4)

    # bf16 weight/activation path (preferred dtype on every TPU generation; MXU
    # accumulates in f32 inside the kernel), looser tolerance.
    xb = x.astype(jnp.bfloat16)
    w1b, b1b, w2b, b2b = (a.astype(jnp.bfloat16) for a in (w1, b1, w2, b2))
    out_bf16 = feed_forward(xb, w1b, b1b, w2b, b2b)
    jax.block_until_ready(out_bf16)
    assert jnp.allclose(out_bf16.astype(jnp.float32), ref, atol=6e-2, rtol=6e-2)

    # Larger test: exercises the big row tiles, the ragged (partial) last block,
    # the >=2-step grid split, and the wrapper cast of f32 x onto bf16 weights.
    B2, T2 = 2, 300
    x2 = jax.random.normal(kx2, (B2, T2, C), jnp.float32)
    out2 = feed_forward(x2, w1b, b1b, w2b, b2b)
    jax.block_until_ready(out2)
    ref2 = _ref_ffn(x2, w1, b1, w2, b2)
    assert out2.shape == (B2, T2, C)
    assert out2.dtype == x2.dtype
    assert jnp.allclose(out2, ref2, atol=6e-2, rtol=6e-2)

    print("KERNEL_OK")
</pallas_src>

<mosaic_0001>
module attributes {stable_mosaic.version = 11 : i64} {
  func.func @ffn_kernel(%arg0: i32, %arg1: memref<8x384xf32, #tpu.memory_space<vmem>>, %arg2: memref<384x1536xf32, #tpu.memory_space<vmem>>, %arg3: memref<1x1536xf32, #tpu.memory_space<vmem>>, %arg4: memref<1536x384xf32, #tpu.memory_space<vmem>>, %arg5: memref<1x384xf32, #tpu.memory_space<vmem>>, %arg6: memref<8x384xf32, #tpu.memory_space<vmem>>) attributes {dimension_semantics = [#tpu.dimension_semantics<parallel>], iteration_bounds = array<i64: 2>, scalar_prefetch = 0 : i64, scratch_operands = 0 : i64, tpu.core_type = #tpu.core_type<tc>, window_params = [{transform_indices = @transform_0, window_bounds = array<i64: 8, 384>}, {pipeline_mode = #tpu.pipeline_mode<synchronous>, transform_indices = @transform_1, window_bounds = array<i64: 384, 1536>}, {pipeline_mode = #tpu.pipeline_mode<synchronous>, transform_indices = @transform_2, window_bounds = array<i64: 1, 1536>}, {pipeline_mode = #tpu.pipeline_mode<synchronous>, transform_indices = @transform_3, window_bounds = array<i64: 1536, 384>}, {pipeline_mode = #tpu.pipeline_mode<synchronous>, transform_indices = @transform_4, window_bounds = array<i64: 1, 384>}, {transform_indices = @transform_5, window_bounds = array<i64: 8, 384>}]} {
    %c0 = arith.constant 0 : index
    %c0_0 = arith.constant 0 : index
    %0 = vector.load %arg1[%c0, %c0_0] : memref<8x384xf32, #tpu.memory_space<vmem>>, vector<8x384xf32>
    %c0_1 = arith.constant 0 : index
    %c0_2 = arith.constant 0 : index
    %1 = vector.load %arg2[%c0_1, %c0_2] : memref<384x1536xf32, #tpu.memory_space<vmem>>, vector<384x1536xf32>
    %cst = arith.constant dense<0.000000e+00> : vector<8x1536xf32>
    %2 = tpu.matmul %0, %1, %cst {dimension_numbers = #tpu.dot_dimension_numbers<[1], [0], [0], [1], [0, 0, 1, 1], [], []>} : vector<8x384xf32>, vector<384x1536xf32>, vector<8x1536xf32> -> vector<8x1536xf32>
    %c0_3 = arith.constant 0 : index
    %c0_4 = arith.constant 0 : index
    %3 = vector.load %arg3[%c0_3, %c0_4] : memref<1x1536xf32, #tpu.memory_space<vmem>>, vector<1x1536xf32>
    %4 = vector.broadcast %3 : vector<1x1536xf32> to vector<8x1536xf32>
    %5 = arith.addf %2, %4 : vector<8x1536xf32>
    %cst_5 = arith.constant 0.000000e+00 : f32
    %6 = vector.broadcast %cst_5 : f32 to vector<8x1536xf32>
    %7 = arith.maximumf %5, %6 : vector<8x1536xf32>
    %c0_6 = arith.constant 0 : index
    %c0_7 = arith.constant 0 : index
    %8 = vector.load %arg4[%c0_6, %c0_7] : memref<1536x384xf32, #tpu.memory_space<vmem>>, vector<1536x384xf32>
    %cst_8 = arith.constant dense<0.000000e+00> : vector<8x384xf32>
    %9 = tpu.matmul %7, %8, %cst_8 {dimension_numbers = #tpu.dot_dimension_numbers<[1], [0], [0], [1], [0, 0, 1, 1], [], []>} : vector<8x1536xf32>, vector<1536x384xf32>, vector<8x384xf32> -> vector<8x384xf32>
    %c0_9 = arith.constant 0 : index
    %c0_10 = arith.constant 0 : index
    %10 = vector.load %arg5[%c0_9, %c0_10] : memref<1x384xf32, #tpu.memory_space<vmem>>, vector<1x384xf32>
    %11 = vector.broadcast %10 : vector<1x384xf32> to vector<8x384xf32>
    %12 = arith.addf %9, %11 : vector<8x384xf32>
    %c0_11 = arith.constant 0 : index
    %c0_12 = arith.constant 0 : index
    %13 = vector.load %arg6[%c0_11, %c0_12] : memref<8x384xf32, #tpu.memory_space<vmem>>, vector<8x384xf32>
    tpu.vector_store %arg6[%c0_11, %c0_12], %12 {strides = array<i32>} : memref<8x384xf32, #tpu.memory_space<vmem>>, vector<8x384xf32>,
    return
  }
  func.func @transform_0(%arg0: i32) -> (i32, i32) {
    %c0_i32 = arith.constant 0 : i32
    %c0_i32_0 = arith.constant 0 : i32
    return %arg0, %c0_i32 : i32, i32
  }
  func.func @transform_1(%arg0: i32) -> (i32, i32) {
    %c0_i32 = arith.constant 0 : i32
    %c0_i32_0 = arith.constant 0 : i32
    %c0_i32_1 = arith.constant 0 : i32
    return %c0_i32, %c0_i32_0 : i32, i32
  }
  func.func @transform_2(%arg0: i32) -> (i32, i32) {
    %c0_i32 = arith.constant 0 : i32
    %c0_i32_0 = arith.constant 0 : i32
    %c0_i32_1 = arith.constant 0 : i32
    return %c0_i32, %c0_i32_0 : i32, i32
  }
  func.func @transform_3(%arg0: i32) -> (i32, i32) {
    %c0_i32 = arith.constant 0 : i32
    %c0_i32_0 = arith.constant 0 : i32
    %c0_i32_1 = arith.constant 0 : i32
    return %c0_i32, %c0_i32_0 : i32, i32
  }
  func.func @transform_4(%arg0: i32) -> (i32, i32) {
    %c0_i32 = arith.constant 0 : i32
    %c0_i32_0 = arith.constant 0 : i32
    %c0_i32_1 = arith.constant 0 : i32
    return %c0_i32, %c0_i32_0 : i32, i32
  }
  func.func @transform_5(%arg0: i32) -> (i32, i32) {
    %c0_i32 = arith.constant 0 : i32
    %c0_i32_0 = arith.constant 0 : i32
    return %arg0, %c0_i32 : i32, i32
  }
}

</mosaic_0001>

<llo_original>
// kernel: feed_forward.1
$region0: #{feed_forward.1}
  #allocation0 [shape = 'u32[]', space=smem, size = 0x4, offset = 0x4, fixed_abs, tag = 'smem constant byte address 0x4 - core index']
  #allocation1 [shape = 'u32[144,128]{1,0:T(1,128)}', space=vmem, size = 0x12000, scoped, tag = 'internal scratch']
  %s0 = inlined_call_operand.hbm [shape: f32[16,384], index: 0, kind: input, shape index: {}]
  %s1 = inlined_call_operand.hbm [shape: f32[384,1536], index: 1, kind: input, shape index: {}]
  %s2 = inlined_call_operand.hbm [shape: f32[1,1536], index: 2, kind: input, shape index: {}]
  %s3 = inlined_call_operand.hbm [shape: f32[1536,384], index: 3, kind: input, shape index: {}]
  %s4 = inlined_call_operand.hbm [shape: f32[1,384], index: 4, kind: input, shape index: {}]
  %s5 = inlined_call_operand.hbm [shape: f32[16,384], index: 5, kind: output, shape index: {}]
  %s6 = sld [smem:[#allocation0]]
  $region73: #{feed_forward.1} parent=0
    _
  %s8 = ssub.s32 1, %s6
  %s9 = scalar_select 0, %s8, %s6
  $region1: #{feed_forward.1} parent=0
    #allocation2 [shape = 'u8[24576]{0}', space=vmem, size = 0x6000, scoped, tag = 'input window, operand 0']
    #allocation3 [shape = 's32[2]{0}', space=sflag, size = 0x8, scoped, tag = 'scoped memory for feed_forward.1']
    #allocation4 [shape = 's32[2]{0}', space=sflag, size = 0x8, scoped, tag = 'scoped memory for feed_forward.1']
    #allocation5 [shape = 'u8[2359296]{0}', space=vmem, size = 0x240000, scoped, tag = 'input window, operand 1, single buffered']
    #allocation6 [shape = 's32[1]{0}', space=sflag, size = 0x4, scoped, tag = 'scoped memory for feed_forward.1']
    #allocation7 [shape = 'u8[6144]{0}', space=vmem, size = 0x1800, scoped, tag = 'input window, operand 2, single buffered']
    #allocation8 [shape = 'u8[2359296]{0}', space=vmem, size = 0x240000, scoped, tag = 'input window, operand 3, single buffered']
    #allocation9 [shape = 's32[1]{0}', space=sflag, size = 0x4, scoped, tag = 'scoped memory for feed_forward.1']
    #allocation10 [shape = 'u8[1536]{0}', space=vmem, size = 0x800, scoped, tag = 'input window, operand 4, single buffered']
    #allocation11 [shape = 'u8[24576]{0}', space=vmem, size = 0x6000, scoped, tag = 'output window, operand 0']
    %10 = vsyncpa [#allocation3], 0
    %s11 = scalar_lea.sflag [#allocation3], 1
    %12 = vsyncpa %s11, 0
    %13 = vsyncpa [#allocation6], 0
    %14 = vsyncpa [#allocation9], 0
    %15 = vsyncpa [#allocation4], 0
    %s16 = scalar_lea.sflag [#allocation4], 1
    %17 = vsyncpa %s16, 0
    loop: start=0, step=1, limit=4
    $region2: #{feed_forward.1} parent=1 // loop_pre_header
      _
    $region3: #{feed_forward.1} parent=1 // loop_header
      %s19 = sphi 0, %s23
      %p20 = scmp.ge.s32.totalorder %s19, 4
      %s29 = sphi 0, %s31
      %s32 = sphi 0, %s29
      %s33 = sphi 0, %s32
      %s49 = sphi 0, %s33
      %s53 = sphi 0, %s53
      %s55 = sphi 0, %s53
      %s56 = sphi 0, %s55
      %s70 = sphi 0, %s56
      %s74 = sphi 0, %s74
      %s76 = sphi 0, %s74
      %s77 = sphi 0, %s76
      %s91 = sphi 0, %s77
      %s95 = sphi 0, %s95
      %s97 = sphi 0, %s95
      %s98 = sphi 0, %s97
      %s112 = sphi 0, %s98
      %s116 = sphi 0, %s116
      %s118 = sphi 0, %s116
      %s119 = sphi 0, %s118
      %s133 = sphi 0, %s119
      %s139 = sphi 0, %s141
      %s142 = sphi 0, %s139
      %s143 = sphi 0, %s142
      %s159 = sphi 0, %s143
    $region4: #{feed_forward.1} parent=1 // loop_header_branch
      %22 = sbr.rel (%p20) target = $region8
    $region5: #{feed_forward.1} parent=1 // loop_body
      %s24 = ssub.s32 %s19, 1
      %s25 = ssub.s32 %s19, 2
      %s26 = sadd.s32 %s19, 1
      %s27 = ssub.s32 %s19, %s26
      %p28 = scmp.eq.s32.totalorder %s27, 0
      %s30 = sadd.s32 %s29, 1
      %s31 = scalar_select %p28, %s29, %s30
      %p34 = pneg %p28
      %p35 = scmp.eq.s32.totalorder %s19, 1
      %p36 = por %p34, %p35
      %p37 = scmp.ne.s32.totalorder %s29, %s32
      %p38 = scmp.eq.s32.totalorder %s19, 0
      %p39 = por %p37, %p38
      %p40 = scmp.ne.s32.totalorder %s29, %s32
      %p41 = scmp.eq.s32.totalorder %s24, 1
      %p42 = por %p40, %p41
      %p43 = scmp.ne.s32.totalorder %s32, %s33
      %p44 = scmp.eq.s32.totalorder %s24, 0
      %p45 = por %p43, %p44
      %p46 = scmp.ne.s32.totalorder %s32, %s33
      %p47 = scmp.eq.s32.totalorder %s25, 1
      %p48 = por %p46, %p47
      %p50 = scmp.ne.s32.totalorder %s33, %s49
      %p51 = scmp.eq.s32.totalorder %s25, 0
      %p52 = por %p50, %p51
      %s54 = sadd.s32 %s53, 1
      %p57 = scmp.eq.s32.totalorder %s19, 1
      %p58 = scmp.ne.s32.totalorder %s53, %s55
      %p59 = scmp.eq.s32.totalorder %s19, 0
      %p60 = por %p58, %p59
      %p61 = scmp.ne.s32.totalorder %s53, %s55
      %p62 = scmp.eq.s32.totalorder %s24, 1
      %p63 = por %p61, %p62
      %p64 = scmp.ne.s32.totalorder %s55, %s56
      %p65 = scmp.eq.s32.totalorder %s24, 0
      %p66 = por %p64, %p65
      %p67 = scmp.ne.s32.totalorder %s55, %s56
      %p68 = scmp.eq.s32.totalorder %s25, 1
      %p69 = por %p67, %p68
      %p71 = scmp.ne.s32.totalorder %s56, %s70
      %p72 = scmp.eq.s32.totalorder %s25, 0
      %p73 = por %p71, %p72
      %s75 = sadd.s32 %s74, 1
      %p78 = scmp.eq.s32.totalorder %s19, 1
      %p79 = scmp.ne.s32.totalorder %s74, %s76
      %p80 = scmp.eq.s32.totalorder %s19, 0
      %p81 = por %p79, %p80
      %p82 = scmp.ne.s32.totalorder %s74, %s76
      %p83 = scmp.eq.s32.totalorder %s24, 1
      %p84 = por %p82, %p83
      %p85 = scmp.ne.s32.totalorder %s76, %s77
      %p86 = scmp.eq.s32.totalorder %s24, 0
      %p87 = por %p85, %p86
      %p88 = scmp.ne.s32.totalorder %s76, %s77
      %p89 = scmp.eq.s32.totalorder %s25, 1
      %p90 = por %p88, %p89
      %p92 = scmp.ne.s32.totalorder %s77, %s91
      %p93 = scmp.eq.s32.totalorder %s25, 0
      %p94 = por %p92, %p93
      %s96 = sadd.s32 %s95, 1
      %p99 = scmp.eq.s32.totalorder %s19, 1
      %p100 = scmp.ne.s32.totalorder %s95, %s97
      %p101 = scmp.eq.s32.totalorder %s19, 0
      %p102 = por %p100, %p101
      %p103 = scmp.ne.s32.totalorder %s95, %s97
      %p104 = scmp.eq.s32.totalorder %s24, 1
      %p105 = por %p103, %p104
      %p106 = scmp.ne.s32.totalorder %s97, %s98
      %p107 = scmp.eq.s32.totalorder %s24, 0
      %p108 = por %p106, %p107
      %p109 = scmp.ne.s32.totalorder %s97, %s98
      %p110 = scmp.eq.s32.totalorder %s25, 1
      %p111 = por %p109, %p110
      %p113 = scmp.ne.s32.totalorder %s98, %s112
      %p114 = scmp.eq.s32.totalorder %s25, 0
      %p115 = por %p113, %p114
      %s117 = sadd.s32 %s116, 1
      %p120 = scmp.eq.s32.totalorder %s19, 1
      %p121 = scmp.ne.s32.totalorder %s116, %s118
      %p122 = scmp.eq.s32.totalorder %s19, 0
      %p123 = por %p121, %p122
      %p124 = scmp.ne.s32.totalorder %s116, %s118
      %p125 = scmp.eq.s32.totalorder %s24, 1
      %p126 = por %p124, %p125
      %p127 = scmp.ne.s32.totalorder %s118, %s119
      %p128 = scmp.eq.s32.totalorder %s24, 0
      %p129 = por %p127, %p128
      %p130 = scmp.ne.s32.totalorder %s118, %s119
      %p131 = scmp.eq.s32.totalorder %s25, 1
      %p132 = por %p130, %p131
      %p134 = scmp.ne.s32.totalorder %s119, %s133
      %p135 = scmp.eq.s32.totalorder %s25, 0
      %p136 = por %p134, %p135
      %s137 = ssub.s32 %s19, %s26
      %p138 = scmp.eq.s32.totalorder %s137, 0
      %s140 = sadd.s32 %s139, 1
      %s141 = scalar_select %p138, %s139, %s140
      %p144 = pneg %p138
      %p145 = scmp.eq.s32.totalorder %s19, 1
      %p146 = por %p144, %p145
      %p147 = scmp.ne.s32.totalorder %s139, %s142
      %p148 = scmp.eq.s32.totalorder %s19, 0
      %p149 = por %p147, %p148
      %p150 = scmp.ne.s32.totalorder %s139, %s142
      %p151 = scmp.eq.s32.totalorder %s24, 1
      %p152 = por %p150, %p151
      %p153 = scmp.ne.s32.totalorder %s142, %s143
      %p154 = scmp.eq.s32.totalorder %s24, 0
      %p155 = por %p153, %p154
      %p156 = scmp.ne.s32.totalorder %s142, %s143
      %p157 = scmp.eq.s32.totalorder %s25, 1
      %p158 = por %p156, %p157
      %p160 = scmp.ne.s32.totalorder %s143, %s159
      %p161 = scmp.eq.s32.totalorder %s25, 0
      %p162 = por %p160, %p161
      %p163 = scmp.le.s32.totalorder 1, %s19
      %p164 = scmp.lt.s32.totalorder %s19, 3
      %p165 = pnand %p163, %p164
      %p166 = pneg %p165
      // Predicated region
      $region9: #{feed_forward.1} parent=5 // pred_check
        _
      $region10: #{feed_forward.1} parent=5 // pred_check_branch
        %168 = sbr.rel (%p165) target = $region12
      $region11: #{feed_forward.1} parent=5 // pred_region
        %s169 = ssub.s32 %s19, 1
        // Predicated region
        $region13: #{feed_forward.1} parent=11 // pred_check
          %p170 = pneg %p66
        $region14: #{feed_forward.1} parent=11 // pred_check_branch
          %172 = sbr.rel (%p170) target = $region16
        $region15: #{feed_forward.1} parent=11 // pred_region
          %s174 = ssub.s32 73728, 73728
          %175 = vsyncadd [#allocation6], %s174
          %s176 = sshll.u32 [#allocation5], 4
          %s177 = int_to_ptr.vmem [resolvable:$true] %s176
          %182 = dma.hbm_to_vmem [thread:$0]  %s1, 73728, %s177, [#allocation6], 1536, 1536, 96
        $region16: #{feed_forward.1} parent=11 // pred_fallthru
          _
        // Predicated region
        $region17: #{feed_forward.1} parent=11 // pred_check
          %p183 = pneg %p87
        $region18: #{feed_forward.1} parent=11 // pred_check_branch
          %185 = sbr.rel (%p183) target = $region20
        $region19: #{feed_forward.1} parent=11 // pred_region
          %s187 = ssub.s32 192, 192
          %188 = vsyncadd [#allocation6], %s187
          %s190 = sshll.u32 [#allocation7], 4
          %s191 = int_to_ptr.vmem [resolvable:$true] %s190
          %193 = dma.hbm_to_vmem [thread:$0]  %s2, 192, %s191, [#allocation6]
        $region20: #{feed_forward.1} parent=11 // pred_fallthru
          _
        // Predicated region
        $region21: #{feed_forward.1} parent=11 // pred_check
          %p194 = pneg %p108
        $region22: #{feed_forward.1} parent=11 // pred_check_branch
          %196 = sbr.rel (%p194) target = $region24
        $region23: #{feed_forward.1} parent=11 // pred_region
          %s198 = ssub.s32 73728, 73728
          %199 = vsyncadd [#allocation9], %s198
          %s200 = sshll.u32 [#allocation8], 4
          %s201 = int_to_ptr.vmem [resolvable:$true] %s200
          %206 = dma.hbm_to_vmem [thread:$0]  %s3, 73728, %s201, [#allocation9], 384, 384, 24
        $region24: #{feed_forward.1} parent=11 // pred_fallthru
          _
        // Predicated region
        $region25: #{feed_forward.1} parent=11 // pred_check
          %p207 = pneg %p129
        $region26: #{feed_forward.1} parent=11 // pred_check_branch
          %209 = sbr.rel (%p207) target = $region28
        $region27: #{feed_forward.1} parent=11 // pred_region
          %s211 = ssub.s32 48, 48
          %212 = vsyncadd [#allocation9], %s211
          %s214 = sshll.u32 [#allocation10], 4
          %s215 = int_to_ptr.vmem [resolvable:$true] %s214
          %217 = dma.hbm_to_vmem [thread:$0]  %s4, 48, %s215, [#allocation9]
        $region28: #{feed_forward.1} parent=11 // pred_fallthru
          _
      $region12: #{feed_forward.1} parent=5 // pred_fallthru
        _
      %p218 = scmp.lt.s32.totalorder %s19, 2
      // Predicated region
      $region29: #{feed_forward.1} parent=5 // pred_check
        %p219 = pneg %p218
      $region30: #{feed_forward.1} parent=5 // pred_check_branch
        %221 = sbr.rel (%p219) target = $region32
      $region31: #{feed_forward.1} parent=5 // pred_region
        // Predicated region
        $region33: #{feed_forward.1} parent=31 // pred_check
          %p222 = pneg %p39
        $region34: #{feed_forward.1} parent=31 // pred_check_branch
          %224 = sbr.rel (%p222) target = $region36
        $region35: #{feed_forward.1} parent=31 // pred_region
          %s225 = sand.u32 %s29, 1
          %s226 = scalar_lea.sflag [#allocation3], %s225
          %s227 = sand.u32 %s29, 1
          %s228 = smul.addr %s227, 24
          %s229 = scalar_lea.vmem [#allocation2], %s228
          %s231 = ssub.s32 384, 384
          %232 = vsyncadd %s226, %s231
          %s233 = smul.addr %s19, 3
          %s234 = smul.addr %s233, 128
          %s235 = scalar_lea.hbm %s0, %s234
          %s237 = sshll.u32 %s229, 4
          %s238 = int_to_ptr.vmem [resolvable:$true] %s237
          %240 = dma.hbm_to_vmem [thread:$0]  %s235, 384, %s238, %s226
        $region36: #{feed_forward.1} parent=31 // pred_fallthru
          _
      $region32: #{feed_forward.1} parent=5 // pred_fallthru
        _
      %p241 = scmp.le.s32.totalorder 1, %s19
      %p242 = scmp.lt.s32.totalorder %s19, 3
      %p243 = pnand %p241, %p242
      %p244 = pneg %p243
      // Predicated region
      $region37: #{feed_forward.1} parent=5 // pred_check
        _
      $region38: #{feed_forward.1} parent=5 // pred_check_branch
        %246 = sbr.rel (%p243) target = $region40
      $region39: #{feed_forward.1} parent=5 // pred_region
        %s247 = ssub.s32 %s19, 1
        %s248 = sand.u32 %s32, 1
        %s249 = scalar_lea.sflag [#allocation3], %s248
        %s250 = sand.u32 %s32, 1
        %s251 = smul.addr %s250, 24
        %s252 = scalar_lea.vmem [#allocation2], %s251
        // Predicated region
        $region41: #{feed_forward.1} parent=39 // pred_check
          %p253 = pneg %p45
        $region42: #{feed_forward.1} parent=39 // pred_check_branch
          %255 = sbr.rel (%p253) target = $region44
        $region43: #{feed_forward.1} parent=39 // pred_region
          %256 = dma.done %s249, 384
        $region44: #{feed_forward.1} parent=39 // pred_fallthru
          _
        // Predicated region
        $region45: #{feed_forward.1} parent=39 // pred_check
          %p257 = pneg %p66
        $region46: #{feed_forward.1} parent=39 // pred_check_branch
          %259 = sbr.rel (%p257) target = $region48
        $region47: #{feed_forward.1} parent=39 // pred_region
          %260 = dma.done [#allocation6], 73728
        $region48: #{feed_forward.1} parent=39 // pred_fallthru
          _
        // Predicated region
        $region49: #{feed_forward.1} parent=39 // pred_check
          %p261 = pneg %p87
        $region50: #{feed_forward.1} parent=39 // pred_check_branch
          %263 = sbr.rel (%p261) target = $region52
        $region51: #{feed_forward.1} parent=39 // pred_region
          %264 = dma.done [#allocation6], 192
        $region52: #{feed_forward.1} parent=39 // pred_fallthru
          _
        // Predicated region
        $region53: #{feed_forward.1} parent=39 // pred_check
          %p265 = pneg %p108
        $region54: #{feed_forward.1} parent=39 // pred_check_branch
          %267 = sbr.rel (%p265) target = $region56
        $region55: #{feed_forward.1} parent=39 // pred_region
          %268 = dma.done [#allocation9], 73728
        $region56: #{feed_forward.1} parent=39 // pred_fallthru
          _
        // Predicated region
        $region57: #{feed_forward.1} parent=39 // pred_check
          %p269 = pneg %p129
        $region58: #{feed_forward.1} parent=39 // pred_check_branch
          %271 = sbr.rel (%p269) target = $region60
        $region59: #{feed_forward.1} parent=39 // pred_region
          %272 = dma.done [#allocation9], 48
        $region60: #{feed_forward.1} parent=39 // pred_fallthru
          _
        %s273 = sand.u32 %s32, 1
        %s274 = scalar_lea.sflag [#allocation3], %s273
        %s275 = sand.u32 %s32, 1
        %s276 = smul.addr %s275, 24
        %s277 = scalar_lea.vmem [#allocation2], %s276
        %p278 = pneg %p45
        %p279 = pneg %p42
        %p280 = pneg %p66
        %p281 = pneg %p63
        %p282 = pneg %p87
        %p283 = pneg %p84
        %p284 = pneg %p108
        %p285 = pneg %p105
        %p286 = pneg %p129
        %p287 = pneg %p126
        %p288 = pneg %p155
        %p289 = pneg %p152
        %s290 = sand.u32 %s142, 1
        %s291 = scalar_lea.sflag [#allocation4], %s290
        %s292 = sand.u32 %s142, 1
        %s293 = smul.addr %s292, 24
        %s294 = scalar_lea.vmem [#allocation11], %s293
        %v295 = vld [vmem:[%s252] sm:$0xff]
        %v296 = vld [vmem:[%s252 + $0x8] sm:$0xff]
        %v297 = vld [vmem:[%s252 + $0x10] sm:$0xff]
        %v298 = vld [vmem:[#allocation5] sm:$0xff]
        %v299 = vld [vmem:[#allocation5 + $0x8] sm:$0xff]
        %v300 = vld [vmem:[#allocation5 + $0x10] sm:$0xff]
        %v301 = vld [vmem:[#allocation5 + $0x18] sm:$0xff]
        %v302 = vld [vmem:[#allocation5 + $0x20] sm:$0xff]
        %v303 = vld [vmem:[#allocation5 + $0x28] sm:$0xff]
        %v304 = vld [vmem:[#allocation5 + $0x30] sm:$0xff]
        %v305 = vld [vmem:[#allocation5 + $0x38] sm:$0xff]
        %v306 = vld [vmem:[#allocation5 + $0x40] sm:$0xff]
        %v307 = vld [vmem:[#allocation5 + $0x48] sm:$0xff]
        %v308 = vld [vmem:[#allocation5 + $0x50] sm:$0xff]
        %v309 = vld [vmem:[#allocation5 + $0x58] sm:$0xff]
        %v310 = vld [vmem:[#allocation5 + $0x60] sm:$0xff]
        %v311 = vld [vmem:[#allocation5 + $0x68] sm:$0xff]
        %v312 = vld [vmem:[#allocation5 + $0x70] sm:$0xff]
        %v313 = vld [vmem:[#allocation5 + $0x78] sm:$0xff]
        %v314 = vld [vmem:[#allocation5 + $0x80] sm:$0xff]
        %v315 = vld [vmem:[#allocation5 + $0x88] sm:$0xff]
        %v316 = vld [vmem:[#allocation5 + $0x90] sm:$0xff]
        %v317 = vld [vmem:[#allocation5 + $0x98] sm:$0xff]
        %v318 = vld [vmem:[#allocation5 + $0xa0] sm:$0xff]
        %v319 = vld [vmem:[#allocation5 + $0xa8] sm:$0xff]
        %v320 = vld [vmem:[#allocation5 + $0xb0] sm:$0xff]
        %v321 = vld [vmem:[#allocation5 + $0xb8] sm:$0xff]
        %v322 = vld [vmem:[#allocation5 + $0xc0] sm:$0xff]
        %v323 = vld [vmem:[#allocation5 + $0xc8] sm:$0xff]
        %v324 = vld [vmem:[#allocation5 + $0xd0] sm:$0xff]
        %v325 = vld [vmem:[#allocation5 + $0xd8] sm:$0xff]
        %v326 = vld [vmem:[#allocation5 + $0xe0] sm:$0xff]
        %v327 = vld [vmem:[#allocation5 + $0xe8] sm:$0xff]
        %v328 = vld [vmem:[#allocation5 + $0xf0] sm:$0xff]
        %v329 = vld [vmem:[#allocation5 + $0xf8] sm:$0xff]
        %v330 = vld [vmem:[#allocation5 + $0x100] sm:$0xff]
        %v331 = vld [vmem:[#allocation5 + $0x108] sm:$0xff]
        %v332 = vld [vmem:[#allocation5 + $0x110] sm:$0xff]
        %v333 = vld [vmem:[#allocation5 + $0x118] sm:$0xff]
        %v334 = vld [vmem:[#allocation5 + $0x120] sm:$0xff]
        %v335 = vld [vmem:[#allocation5 + $0x128] sm:$0xff]
        %v336 = vld [vmem:[#allocation5 + $0x130] sm:$0xff]
        %v337 = vld [vmem:[#allocation5 + $0x138] sm:$0xff]
        %v338 = vld [vmem:[#allocation5 + $0x140] sm:$0xff]
        %v339 = vld [vmem:[#allocation5 + $0x148] sm:$0xff]
        %v340 = vld [vmem:[#allocation5 + $0x150] sm:$0xff]
        %v341 = vld [vmem:[#allocation5 + $0x158] sm:$0xff]
        %v342 = vld [vmem:[#allocation5 + $0x160] sm:$0xff]
        %v343 = vld [vmem:[#allocation5 + $0x168] sm:$0xff]
        %v344 = vld [vmem:[#allocation5 + $0x170] sm:$0xff]
        %v345 = vld [vmem:[#allocation5 + $0x178] sm:$0xff]
        %v346 = vld [vmem:[#allocation5 + $0x180] sm:$0xff]
        %v347 = vld [vmem:[#allocation5 + $0x188] sm:$0xff]
        %v348 = vld [vmem:[#allocation5 + $0x190] sm:$0xff]
        %v349 = vld [vmem:[#allocation5 + $0x198] sm:$0xff]
        %v350 = vld [vmem:[#allocation5 + $0x1a0] sm:$0xff]
        %v351 = vld [vmem:[#allocation5 + $0x1a8] sm:$0xff]
        %v352 = vld [vmem:[#allocation5 + $0x1b0] sm:$0xff]
        %v353 = vld [vmem:[#allocation5 + $0x1b8] sm:$0xff]
        %v354 = vld [vmem:[#allocation5 + $0x1c0] sm:$0xff]
        %v355 = vld [vmem:[#allocation5 + $0x1c8] sm:$0xff]
        %v356 = vld [vmem:[#allocation5 + $0x1d0] sm:$0xff]
        %v357 = vld [vmem:[#allocation5 + $0x1d8] sm:$0xff]
        %v358 = vld [vmem:[#allocation5 + $0x1e0] sm:$0xff]
        %v359 = vld [vmem:[#allocation5 + $0x1e8] sm:$0xff]
        %v360 = vld [vmem:[#allocation5 + $0x1f0] sm:$0xff]
        %v361 = vld [vmem:[#allocation5 + $0x1f8] sm:$0xff]
        %v362 = vld [vmem:[#allocation5 + $0x200] sm:$0xff]
        %v363 = vld [vmem:[#allocation5 + $0x208] sm:$0xff]
        %v364 = vld [vmem:[#allocation5 + $0x210] sm:$0xff]
        %v365 = vld [vmem:[#allocation5 + $0x218] sm:$0xff]
        %v366 = vld [vmem:[#allocation5 + $0x220] sm:$0xff]
        %v367 = vld [vmem:[#allocation5 + $0x228] sm:$0xff]
        %v368 = vld [vmem:[#allocation5 + $0x230] sm:$0xff]
        %v369 = vld [vmem:[#allocation5 + $0x238] sm:$0xff]
        %v370 = vld [vmem:[#allocation5 + $0x240] sm:$0xff]
        %v371 = vld [vmem:[#allocation5 + $0x248] sm:$0xff]
        %v372 = vld [vmem:[#allocation5 + $0x250] sm:$0xff]
        %v373 = vld [vmem:[#allocation5 + $0x258] sm:$0xff]
        %v374 = vld [vmem:[#allocation5 + $0x260] sm:$0xff]
        %v375 = vld [vmem:[#allocation5 + $0x268] sm:$0xff]
        %v376 = vld [vmem:[#allocation5 + $0x270] sm:$0xff]
        %v377 = vld [vmem:[#allocation5 + $0x278] sm:$0xff]
        %v378 = vld [vmem:[#allocation5 + $0x280] sm:$0xff]
        %v379 = vld [vmem:[#allocation5 + $0x288] sm:$0xff]
        %v380 = vld [vmem:[#allocation5 + $0x290] sm:$0xff]
        %v381 = vld [vmem:[#allocation5 + $0x298] sm:$0xff]
        %v382 = vld [vmem:[#allocation5 + $0x2a0] sm:$0xff]
        %v383 = vld [vmem:[#allocation5 + $0x2a8] sm:$0xff]
        %v384 = vld [vmem:[#allocation5 + $0x2b0] sm:$0xff]
        %v385 = vld [vmem:[#allocation5 + $0x2b8] sm:$0xff]
        %v386 = vld [vmem:[#allocation5 + $0x2c0] sm:$0xff]
        %v387 = vld [vmem:[#allocation5 + $0x2c8] sm:$0xff]
        %v388 = vld [vmem:[#allocation5 + $0x2d0] sm:$0xff]
        %v389 = vld [vmem:[#allocation5 + $0x2d8] sm:$0xff]
        %v390 = vld [vmem:[#allocation5 + $0x2e0] sm:$0xff]
        %v391 = vld [vmem:[#allocation5 + $0x2e8] sm:$0xff]
        %v392 = vld [vmem:[#allocation5 + $0x2f0] sm:$0xff]
        %v393 = vld [vmem:[#allocation5 + $0x2f8] sm:$0xff]
        %v394 = vld [vmem:[#allocation5 + $0x300] sm:$0xff]
        %v395 = vld [vmem:[#allocation5 + $0x308] sm:$0xff]
        %v396 = vld [vmem:[#allocation5 + $0x310] sm:$0xff]
        %v397 = vld [vmem:[#allocation5 + $0x318] sm:$0xff]
        %v398 = vld [vmem:[#allocation5 + $0x320] sm:$0xff]
        %v399 = vld [vmem:[#allocation5 + $0x328] sm:$0xff]
        %v400 = vld [vmem:[#allocation5 + $0x330] sm:$0xff]
        %v401 = vld [vmem:[#allocation5 + $0x338] sm:$0xff]
        %v402 = vld [vmem:[#allocation5 + $0x340] sm:$0xff]
        %v403 = vld [vmem:[#allocation5 + $0x348] sm:$0xff]
        %v404 = vld [vmem:[#allocation5 + $0x350] sm:$0xff]
        %v405 = vld [vmem:[#allocation5 + $0x358] sm:$0xff]
        %v406 = vld [vmem:[#allocation5 + $0x360] sm:$0xff]
        %v407 = vld [vmem:[#allocation5 + $0x368] sm:$0xff]
        %v408 = vld [vmem:[#allocation5 + $0x370] sm:$0xff]
        %v409 = vld [vmem:[#allocation5 + $0x378] sm:$0xff]
        %v410 = vld [vmem:[#allocation5 + $0x380] sm:$0xff]
        %v411 = vld [vmem:[#allocation5 + $0x388] sm:$0xff]
        %v412 = vld [vmem:[#allocation5 + $0x390] sm:$0xff]
        %v413 = vld [vmem:[#allocation5 + $0x398] sm:$0xff]
        %v414 = vld [vmem:[#allocation5 + $0x3a0] sm:$0xff]
        %v415 = vld [vmem:[#allocation5 + $0x3a8] sm:$0xff]
        %v416 = vld [vmem:[#allocation5 + $0x3b0] sm:$0xff]
        %v417 = vld [vmem:[#allocation5 + $0x3b8] sm:$0xff]
        %v418 = vld [vmem:[#allocation5 + $0x3c0] sm:$0xff]
        %v419 = vld [vmem:[#allocation5 + $0x3c8] sm:$0xff]
        %v420 = vld [vmem:[#allocation5 + $0x3d0] sm:$0xff]
        %v421 = vld [vmem:[#allocation5 + $0x3d8] sm:$0xff]
        %v422 = vld [vmem:[#allocation5 + $0x3e0] sm:$0xff]
        %v423 = vld [vmem:[#allocation5 + $0x3e8] sm:$0xff]
        %v424 = vld [vmem:[#allocation5 + $0x3f0] sm:$0xff]
        %v425 = vld [vmem:[#allocation5 + $0x3f8] sm:$0xff]
        %v426 = vld [vmem:[#allocation5 + $0x400] sm:$0xff]
        %v427 = vld [vmem:[#allocation5 + $0x408] sm:$0xff]
        %v428 = vld [vmem:[#allocation5 + $0x410] sm:$0xff]
        %v429 = vld [vmem:[#allocation5 + $0x418] sm:$0xff]
        %v430 = vld [vmem:[#allocation5 + $0x420] sm:$0xff]
        %v431 = vld [vmem:[#allocation5 + $0x428] sm:$0xff]
        %v432 = vld [vmem:[#allocation5 + $0x430] sm:$0xff]
        %v433 = vld [vmem:[#allocation5 + $0x438] sm:$0xff]
        %v434 = vld [vmem:[#allocation5 + $0x440] sm:$0xff]
        %v435 = vld [vmem:[#allocation5 + $0x448] sm:$0xff]
        %v436 = vld [vmem:[#allocation5 + $0x450] sm:$0xff]
        %v437 = vld [vmem:[#allocation5 + $0x458] sm:$0xff]
        %v438 = vld [vmem:[#allocation5 + $0x460] sm:$0xff]
        %v439 = vld [vmem:[#allocation5 + $0x468] sm:$0xff]
        %v440 = vld [vmem:[#allocation5 + $0x470] sm:$0xff]
        %v441 = vld [vmem:[#allocation5 + $0x478] sm:$0xff]
        %v442 = vld [vmem:[#allocation5 + $0x480] sm:$0xff]
        %v443 = vld [vmem:[#allocation5 + $0x488] sm:$0xff]
        %v444 = vld [vmem:[#allocation5 + $0x490] sm:$0xff]
        %v445 = vld [vmem:[#allocation5 + $0x498] sm:$0xff]
        %v446 = vld [vmem:[#allocation5 + $0x4a0] sm:$0xff]
        %v447 = vld [vmem:[#allocation5 + $0x4a8] sm:$0xff]
        %v448 = vld [vmem:[#allocation5 + $0x4b0] sm:$0xff]
        %v449 = vld [vmem:[#allocation5 + $0x4b8] sm:$0xff]
        %v450 = vld [vmem:[#allocation5 + $0x4c0] sm:$0xff]
        %v451 = vld [vmem:[#allocation5 + $0x4c8] sm:$0xff]
        %v452 = vld [vmem:[#allocation5 + $0x4d0] sm:$0xff]
        %v453 = vld [vmem:[#allocation5 + $0x4d8] sm:$0xff]
        %v454 = vld [vmem:[#allocation5 + $0x4e0] sm:$0xff]
        %v455 = vld [vmem:[#allocation5 + $0x4e8] sm:$0xff]
        %v456 = vld [vmem:[#allocation5 + $0x4f0] sm:$0xff]
        %v457 = vld [vmem:[#allocation5 + $0x4f8] sm:$0xff]
        %v458 = vld [vmem:[#allocation5 + $0x500] sm:$0xff]
        %v459 = vld [vmem:[#allocation5 + $0x508] sm:$0xff]
        %v460 = vld [vmem:[#allocation5 + $0x510] sm:$0xff]
        %v461 = vld [vmem:[#allocation5 + $0x518] sm:$0xff]
        %v462 = vld [vmem:[#allocation5 + $0x520] sm:$0xff]
        %v463 = vld [vmem:[#allocation5 + $0x528] sm:$0xff]
        %v464 = vld [vmem:[#allocation5 + $0x530] sm:$0xff]
        %v465 = vld [vmem:[#allocation5 + $0x538] sm:$0xff]
        %v466 = vld [vmem:[#allocation5 + $0x540] sm:$0xff]
        %v467 = vld [vmem:[#allocation5 + $0x548] sm:$0xff]
        %v468 = vld [vmem:[#allocation5 + $0x550] sm:$0xff]
        %v469 = vld [vmem:[#allocation5 + $0x558] sm:$0xff]
        %v470 = vld [vmem:[#allocation5 + $0x560] sm:$0xff]
        %v471 = vld [vmem:[#allocation5 + $0x568] sm:$0xff]
        %v472 = vld [vmem:[#allocation5 + $0x570] sm:$0xff]
        %v473 = vld [vmem:[#allocation5 + $0x578] sm:$0xff]
        %v474 = vld [vmem:[#allocation5 + $0x580] sm:$0xff]
        %v475 = vld [vmem:[#allocation5 + $0x588] sm:$0xff]
        %v476 = vld [vmem:[#allocation5 + $0x590] sm:$0xff]
        %v477 = vld [vmem:[#allocation5 + $0x598] sm:$0xff]
        %v478 = vld [vmem:[#allocation5 + $0x5a0] sm:$0xff]
        %v479 = vld [vmem:[#allocation5 + $0x5a8] sm:$0xff]
        %v480 = vld [vmem:[#allocation5 + $0x5b0] sm:$0xff]
        %v481 = vld [vmem:[#allocation5 + $0x5b8] sm:$0xff]
        %v482 = vld [vmem:[#allocation5 + $0x5c0] sm:$0xff]
        %v483 = vld [vmem:[#allocation5 + $0x5c8] sm:$0xff]
        %v484 = vld [vmem:[#allocation5 + $0x5d0] sm:$0xff]
        %v485 = vld [vmem:[#allocation5 + $0x5d8] sm:$0xff]
        %v486 = vld [vmem:[#allocation5 + $0x5e0] sm:$0xff]
        %v487 = vld [vmem:[#allocation5 + $0x5e8] sm:$0xff]
        %v488 = vld [vmem:[#allocation5 + $0x5f0] sm:$0xff]
        %v489 = vld [vmem:[#allocation5 + $0x5f8] sm:$0xff]
        %v490 = vld [vmem:[#allocation5 + $0x600] sm:$0xff]
        %v491 = vld [vmem:[#allocation5 + $0x608] sm:$0xff]
        %v492 = vld [vmem:[#allocation5 + $0x610] sm:$0xff]
        %v493 = vld [vmem:[#allocation5 + $0x618] sm:$0xff]
        %v494 = vld [vmem:[#allocation5 + $0x620] sm:$0xff]
        %v495 = vld [vmem:[#allocation5 + $0x628] sm:$0xff]
        %v496 = vld [vmem:[#allocation5 + $0x630] sm:$0xff]
        %v497 = vld [vmem:[#allocation5 + $0x638] sm:$0xff]
        %v498 = vld [vmem:[#allocation5 + $0x640] sm:$0xff]
        %v499 = vld [vmem:[#allocation5 + $0x648] sm:$0xff]
        %v500 = vld [vmem:[#allocation5 + $0x650] sm:$0xff]
        %v501 = vld [vmem:[#allocation5 + $0x658] sm:$0xff]
        %v502 = vld [vmem:[#allocation5 + $0x660] sm:$0xff]
        %v503 = vld [vmem:[#allocation5 + $0x668] sm:$0xff]
        %v504 = vld [vmem:[#allocation5 + $0x670] sm:$0xff]
        %v505 = vld [vmem:[#allocation5 + $0x678] sm:$0xff]
        %v506 = vld [vmem:[#allocation5 + $0x680] sm:$0xff]
        %v507 = vld [vmem:[#allocation5 + $0x688] sm:$0xff]
        %v508 = vld [vmem:[#allocation5 + $0x690] sm:$0xff]
        %v509 = vld [vmem:[#allocation5 + $0x698] sm:$0xff]
        %v510 = vld [vmem:[#allocation5 + $0x6a0] sm:$0xff]
        %v511 = vld [vmem:[#allocation5 + $0x6a8] sm:$0xff]
        %v512 = vld [vmem:[#allocation5 + $0x6b0] sm:$0xff]
        %v513 = vld [vmem:[#allocation5 + $0x6b8] sm:$0xff]
        %v514 = vld [vmem:[#allocation5 + $0x6c0] sm:$0xff]
        %v515 = vld [vmem:[#allocation5 + $0x6c8] sm:$0xff]
        %v516 = vld [vmem:[#allocation5 + $0x6d0] sm:$0xff]
        %v517 = vld [vmem:[#allocation5 + $0x6d8] sm:$0xff]
        %v518 = vld [vmem:[#allocation5 + $0x6e0] sm:$0xff]
        %v519 = vld [vmem:[#allocation5 + $0x6e8] sm:$0xff]
        %v520 = vld [vmem:[#allocation5 + $0x6f0] sm:$0xff]
        %v521 = vld [vmem:[#allocation5 + $0x6f8] sm:$0xff]
        %v522 = vld [vmem:[#allocation5 + $0x700] sm:$0xff]
        %v523 = vld [vmem:[#allocation5 + $0x708] sm:$0xff]
        %v524 = vld [vmem:[#allocation5 + $0x710] sm:$0xff]
        %v525 = vld [vmem:[#allocation5 + $0x718] sm:$0xff]
        %v526 = vld [vmem:[#allocation5 + $0x720] sm:$0xff]
        %v527 = vld [vmem:[#allocation5 + $0x728] sm:$0xff]
        %v528 = vld [vmem:[#allocation5 + $0x730] sm:$0xff]
        %v529 = vld [vmem:[#allocation5 + $0x738] sm:$0xff]
        %v530 = vld [vmem:[#allocation5 + $0x740] sm:$0xff]
        %v531 = vld [vmem:[#allocation5 + $0x748] sm:$0xff]
        %v532 = vld [vmem:[#allocation5 + $0x750] sm:$0xff]
        %v533 = vld [vmem:[#allocation5 + $0x758] sm:$0xff]
        %v534 = vld [vmem:[#allocation5 + $0x760] sm:$0xff]
        %v535 = vld [vmem:[#allocation5 + $0x768] sm:$0xff]
        %v536 = vld [vmem:[#allocation5 + $0x770] sm:$0xff]
        %v537 = vld [vmem:[#allocation5 + $0x778] sm:$0xff]
        %v538 = vld [vmem:[#allocation5 + $0x780] sm:$0xff]
        %v539 = vld [vmem:[#allocation5 + $0x788] sm:$0xff]
        %v540 = vld [vmem:[#allocation5 + $0x790] sm:$0xff]
        %v541 = vld [vmem:[#allocation5 + $0x798] sm:$0xff]
        %v542 = vld [vmem:[#allocation5 + $0x7a0] sm:$0xff]
        %v543 = vld [vmem:[#allocation5 + $0x7a8] sm:$0xff]
        %v544 = vld [vmem:[#allocation5 + $0x7b0] sm:$0xff]
        %v545 = vld [vmem:[#allocation5 + $0x7b8] sm:$0xff]
        %v546 = vld [vmem:[#allocation5 + $0x7c0] sm:$0xff]
        %v547 = vld [vmem:[#allocation5 + $0x7c8] sm:$0xff]
        %v548 = vld [vmem:[#allocation5 + $0x7d0] sm:$0xff]
        %v549 = vld [vmem:[#allocation5 + $0x7d8] sm:$0xff]
        %v550 = vld [vmem:[#allocation5 + $0x7e0] sm:$0xff]
        %v551 = vld [vmem:[#allocation5 + $0x7e8] sm:$0xff]
        %v552 = vld [vmem:[#allocation5 + $0x7f0] sm:$0xff]
        %v553 = vld [vmem:[#allocation5 + $0x7f8] sm:$0xff]
        %v554 = vld [vmem:[#allocation5 + $0x800] sm:$0xff]
        %v555 = vld [vmem:[#allocation5 + $0x808] sm:$0xff]
        %v556 = vld [vmem:[#allocation5 + $0x810] sm:$0xff]
        %v557 = vld [vmem:[#allocation5 + $0x818] sm:$0xff]
        %v558 = vld [vmem:[#allocation5 + $0x820] sm:$0xff]
        %v559 = vld [vmem:[#allocation5 + $0x828] sm:$0xff]
        %v560 = vld [vmem:[#allocation5 + $0x830] sm:$0xff]
        %v561 = vld [vmem:[#allocation5 + $0x838] sm:$0xff]
        %v562 = vld [vmem:[#allocation5 + $0x840] sm:$0xff]
        %v563 = vld [vmem:[#allocation5 + $0x848] sm:$0xff]
        %v564 = vld [vmem:[#allocation5 + $0x850] sm:$0xff]
        %v565 = vld [vmem:[#allocation5 + $0x858] sm:$0xff]
        %v566 = vld [vmem:[#allocation5 + $0x860] sm:$0xff]
        %v567 = vld [vmem:[#allocation5 + $0x868] sm:$0xff]
        %v568 = vld [vmem:[#allocation5 + $0x870] sm:$0xff]
        %v569 = vld [vmem:[#allocation5 + $0x878] sm:$0xff]
        %v570 = vld [vmem:[#allocation5 + $0x880] sm:$0xff]
        %v571 = vld [vmem:[#allocation5 + $0x888] sm:$0xff]
        %v572 = vld [vmem:[#allocation5 + $0x890] sm:$0xff]
        %v573 = vld [vmem:[#allocation5 + $0x898] sm:$0xff]
        %v574 = vld [vmem:[#allocation5 + $0x8a0] sm:$0xff]
        %v575 = vld [vmem:[#allocation5 + $0x8a8] sm:$0xff]
        %v576 = vld [vmem:[#allocation5 + $0x8b0] sm:$0xff]
        %v577 = vld [vmem:[#allocation5 + $0x8b8] sm:$0xff]
        %v578 = vld [vmem:[#allocation5 + $0x8c0] sm:$0xff]
        %v579 = vld [vmem:[#allocation5 + $0x8c8] sm:$0xff]
        %v580 = vld [vmem:[#allocation5 + $0x8d0] sm:$0xff]
        %v581 = vld [vmem:[#allocation5 + $0x8d8] sm:$0xff]
        %v582 = vld [vmem:[#allocation5 + $0x8e0] sm:$0xff]
        %v583 = vld [vmem:[#allocation5 + $0x8e8] sm:$0xff]
        %v584 = vld [vmem:[#allocation5 + $0x8f0] sm:$0xff]
        %v585 = vld [vmem:[#allocation5 + $0x8f8] sm:$0xff]
        %v586 = vld [vmem:[#allocation5 + $0x900] sm:$0xff]
        %v587 = vld [vmem:[#allocation5 + $0x908] sm:$0xff]
        %v588 = vld [vmem:[#allocation5 + $0x910] sm:$0xff]
        %v589 = vld [vmem:[#allocation5 + $0x918] sm:$0xff]
        %v590 = vld [vmem:[#allocation5 + $0x920] sm:$0xff]
        %v591 = vld [vmem:[#allocation5 + $0x928] sm:$0xff]
        %v592 = vld [vmem:[#allocation5 + $0x930] sm:$0xff]
        %v593 = vld [vmem:[#allocation5 + $0x938] sm:$0xff]
        %v594 = vld [vmem:[#allocation5 + $0x940] sm:$0xff]
        %v595 = vld [vmem:[#allocation5 + $0x948] sm:$0xff]
        %v596 = vld [vmem:[#allocation5 + $0x950] sm:$0xff]
        %v597 = vld [vmem:[#allocation5 + $0x958] sm:$0xff]
        %v598 = vld [vmem:[#allocation5 + $0x960] sm:$0xff]
        %v599 = vld [vmem:[#allocation5 + $0x968] sm:$0xff]
        %v600 = vld [vmem:[#allocation5 + $0x970] sm:$0xff]
        %v601 = vld [vmem:[#allocation5 + $0x978] sm:$0xff]
        %v602 = vld [vmem:[#allocation5 + $0x980] sm:$0xff]
        %v603 = vld [vmem:[#allocation5 + $0x988] sm:$0xff]
        %v604 = vld [vmem:[#allocation5 + $0x990] sm:$0xff]
        %v605 = vld [vmem:[#allocation5 + $0x998] sm:$0xff]
        %v606 = vld [vmem:[#allocation5 + $0x9a0] sm:$0xff]
        %v607 = vld [vmem:[#allocation5 + $0x9a8] sm:$0xff]
        %v608 = vld [vmem:[#allocation5 + $0x9b0] sm:$0xff]
        %v609 = vld [vmem:[#allocation5 + $0x9b8] sm:$0xff]
        %v610 = vld [vmem:[#allocation5 + $0x9c0] sm:$0xff]
        %v611 = vld [vmem:[#allocation5 + $0x9c8] sm:$0xff]
        %v612 = vld [vmem:[#allocation5 + $0x9d0] sm:$0xff]
        %v613 = vld [vmem:[#allocation5 + $0x9d8] sm:$0xff]
        %v614 = vld [vmem:[#allocation5 + $0x9e0] sm:$0xff]
        %v615 = vld [vmem:[#allocation5 + $0x9e8] sm:$0xff]
        %v616 = vld [vmem:[#allocation5 + $0x9f0] sm:$0xff]
        %v617 = vld [vmem:[#allocation5 + $0x9f8] sm:$0xff]
        %v618 = vld [vmem:[#allocation5 + $0xa00] sm:$0xff]
        %v619 = vld [vmem:[#allocation5 + $0xa08] sm:$0xff]
        %v620 = vld [vmem:[#allocation5 + $0xa10] sm:$0xff]
        %v621 = vld [vmem:[#allocation5 + $0xa18] sm:$0xff]
        %v622 = vld [vmem:[#allocation5 + $0xa20] sm:$0xff]
        %v623 = vld [vmem:[#allocation5 + $0xa28] sm:$0xff]
        %v624 = vld [vmem:[#allocation5 + $0xa30] sm:$0xff]
        %v625 = vld [vmem:[#allocation5 + $0xa38] sm:$0xff]
        %v626 = vld [vmem:[#allocation5 + $0xa40] sm:$0xff]
        %v627 = vld [vmem:[#allocation5 + $0xa48] sm:$0xff]
        %v628 = vld [vmem:[#allocation5 + $0xa50] sm:$0xff]
        %v629 = vld [vmem:[#allocation5 + $0xa58] sm:$0xff]
        %v630 = vld [vmem:[#allocation5 + $0xa60] sm:$0xff]
        %v631 = vld [vmem:[#allocation5 + $0xa68] sm:$0xff]
        %v632 = vld [vmem:[#allocation5 + $0xa70] sm:$0xff]
        %v633 = vld [vmem:[#allocation5 + $0xa78] sm:$0xff]
        %v634 = vld [vmem:[#allocation5 + $0xa80] sm:$0xff]
        %v635 = vld [vmem:[#allocation5 + $0xa88] sm:$0xff]
        %v636 = vld [vmem:[#allocation5 + $0xa90] sm:$0xff]
        %v637 = vld [vmem:[#allocation5 + $0xa98] sm:$0xff]
        %v638 = vld [vmem:[#allocation5 + $0xaa0] sm:$0xff]
        %v639 = vld [vmem:[#allocation5 + $0xaa8] sm:$0xff]
        %v640 = vld [vmem:[#allocation5 + $0xab0] sm:$0xff]
        %v641 = vld [vmem:[#allocation5 + $0xab8] sm:$0xff]
        %v642 = vld [vmem:[#allocation5 + $0xac0] sm:$0xff]
        %v643 = vld [vmem:[#allocation5 + $0xac8] sm:$0xff]
        %v644 = vld [vmem:[#allocation5 + $0xad0] sm:$0xff]
        %v645 = vld [vmem:[#allocation5 + $0xad8] sm:$0xff]
        %v646 = vld [vmem:[#allocation5 + $0xae0] sm:$0xff]
        %v647 = vld [vmem:[#allocation5 + $0xae8] sm:$0xff]
        %v648 = vld [vmem:[#allocation5 + $0xaf0] sm:$0xff]
        %v649 = vld [vmem:[#allocation5 + $0xaf8] sm:$0xff]
        %v650 = vld [vmem:[#allocation5 + $0xb00] sm:$0xff]
        %v651 = vld [vmem:[#allocation5 + $0xb08] sm:$0xff]
        %v652 = vld [vmem:[#allocation5 + $0xb10] sm:$0xff]
        %v653 = vld [vmem:[#allocation5 + $0xb18] sm:$0xff]
        %v654 = vld [vmem:[#allocation5 + $0xb20] sm:$0xff]
        %v655 = vld [vmem:[#allocation5 + $0xb28] sm:$0xff]
        %v656 = vld [vmem:[#allocation5 + $0xb30] sm:$0xff]
        %v657 = vld [vmem:[#allocation5 + $0xb38] sm:$0xff]
        %v658 = vld [vmem:[#allocation5 + $0xb40] sm:$0xff]
        %v659 = vld [vmem:[#allocation5 + $0xb48] sm:$0xff]
        %v660 = vld [vmem:[#allocation5 + $0xb50] sm:$0xff]
        %v661 = vld [vmem:[#allocation5 + $0xb58] sm:$0xff]
        %v662 = vld [vmem:[#allocation5 + $0xb60] sm:$0xff]
        %v663 = vld [vmem:[#allocation5 + $0xb68] sm:$0xff]
        %v664 = vld [vmem:[#allocation5 + $0xb70] sm:$0xff]
        %v665 = vld [vmem:[#allocation5 + $0xb78] sm:$0xff]
        %v666 = vld [vmem:[#allocation5 + $0xb80] sm:$0xff]
        %v667 = vld [vmem:[#allocation5 + $0xb88] sm:$0xff]
        %v668 = vld [vmem:[#allocation5 + $0xb90] sm:$0xff]
        %v669 = vld [vmem:[#allocation5 + $0xb98] sm:$0xff]
        %v670 = vld [vmem:[#allocation5 + $0xba0] sm:$0xff]
        %v671 = vld [vmem:[#allocation5 + $0xba8] sm:$0xff]
        %v672 = vld [vmem:[#allocation5 + $0xbb0] sm:$0xff]
        %v673 = vld [vmem:[#allocation5 + $0xbb8] sm:$0xff]
        %v674 = vld [vmem:[#allocation5 + $0xbc0] sm:$0xff]
        %v675 = vld [vmem:[#allocation5 + $0xbc8] sm:$0xff]
        %v676 = vld [vmem:[#allocation5 + $0xbd0] sm:$0xff]
        %v677 = vld [vmem:[#allocation5 + $0xbd8] sm:$0xff]
        %v678 = vld [vmem:[#allocation5 + $0xbe0] sm:$0xff]
        %v679 = vld [vmem:[#allocation5 + $0xbe8] sm:$0xff]
        %v680 = vld [vmem:[#allocation5 + $0xbf0] sm:$0xff]
        %v681 = vld [vmem:[#allocation5 + $0xbf8] sm:$0xff]
        %v682 = vld [vmem:[#allocation5 + $0xc00] sm:$0xff]
        %v683 = vld [vmem:[#allocation5 + $0xc08] sm:$0xff]
        %v684 = vld [vmem:[#allocation5 + $0xc10] sm:$0xff]
        %v685 = vld [vmem:[#allocation5 + $0xc18] sm:$0xff]
        %v686 = vld [vmem:[#allocation5 + $0xc20] sm:$0xff]
        %v687 = vld [vmem:[#allocation5 + $0xc28] sm:$0xff]
        %v688 = vld [vmem:[#allocation5 + $0xc30] sm:$0xff]
        %v689 = vld [vmem:[#allocation5 + $0xc38] sm:$0xff]
        %v690 = vld [vmem:[#allocation5 + $0xc40] sm:$0xff]
        %v691 = vld [vmem:[#allocation5 + $0xc48] sm:$0xff]
        %v692 = vld [vmem:[#allocation5 + $0xc50] sm:$0xff]
        %v693 = vld [vmem:[#allocation5 + $0xc58] sm:$0xff]
        %v694 = vld [vmem:[#allocation5 + $0xc60] sm:$0xff]
        %v695 = vld [vmem:[#allocation5 + $0xc68] sm:$0xff]
        %v696 = vld [vmem:[#allocation5 + $0xc70] sm:$0xff]
        %v697 = vld [vmem:[#allocation5 + $0xc78] sm:$0xff]
        %v698 = vld [vmem:[#allocation5 + $0xc80] sm:$0xff]
        %v699 = vld [vmem:[#allocation5 + $0xc88] sm:$0xff]
        %v700 = vld [vmem:[#allocation5 + $0xc90] sm:$0xff]
        %v701 = vld [vmem:[#allocation5 + $0xc98] sm:$0xff]
        %v702 = vld [vmem:[#allocation5 + $0xca0] sm:$0xff]
        %v703 = vld [vmem:[#allocation5 + $0xca8] sm:$0xff]
        %v704 = vld [vmem:[#allocation5 + $0xcb0] sm:$0xff]
        %v705 = vld [vmem:[#allocation5 + $0xcb8] sm:$0xff]
        %v706 = vld [vmem:[#allocation5 + $0xcc0] sm:$0xff]
        %v707 = vld [vmem:[#allocation5 + $0xcc8] sm:$0xff]
        %v708 = vld [vmem:[#allocation5 + $0xcd0] sm:$0xff]
        %v709 = vld [vmem:[#allocation5 + $0xcd8] sm:$0xff]
        %v710 = vld [vmem:[#allocation5 + $0xce0] sm:$0xff]
        %v711 = vld [vmem:[#allocation5 + $0xce8] sm:$0xff]
        %v712 = vld [vmem:[#allocation5 + $0xcf0] sm:$0xff]
        %v713 = vld [vmem:[#allocation5 + $0xcf8] sm:$0xff]
        %v714 = vld [vmem:[#allocation5 + $0xd00] sm:$0xff]
        %v715 = vld [vmem:[#allocation5 + $0xd08] sm:$0xff]
        %v716 = vld [vmem:[#allocation5 + $0xd10] sm:$0xff]
        %v717 = vld [vmem:[#allocation5 + $0xd18] sm:$0xff]
        %v718 = vld [vmem:[#allocation5 + $0xd20] sm:$0xff]
        %v719 = vld [vmem:[#allocation5 + $0xd28] sm:$0xff]
        %v720 = vld [vmem:[#allocation5 + $0xd30] sm:$0xff]
        %v721 = vld [vmem:[#allocation5 + $0xd38] sm:$0xff]
        %v722 = vld [vmem:[#allocation5 + $0xd40] sm:$0xff]
        %v723 = vld [vmem:[#allocation5 + $0xd48] sm:$0xff]
        %v724 = vld [vmem:[#allocation5 + $0xd50] sm:$0xff]
        %v725 = vld [vmem:[#allocation5 + $0xd58] sm:$0xff]
        %v726 = vld [vmem:[#allocation5 + $0xd60] sm:$0xff]
        %v727 = vld [vmem:[#allocation5 + $0xd68] sm:$0xff]
        %v728 = vld [vmem:[#allocation5 + $0xd70] sm:$0xff]
        %v729 = vld [vmem:[#allocation5 + $0xd78] sm:$0xff]
        %v730 = vld [vmem:[#allocation5 + $0xd80] sm:$0xff]
        %v731 = vld [vmem:[#allocation5 + $0xd88] sm:$0xff]
        %v732 = vld [vmem:[#allocation5 + $0xd90] sm:$0xff]
        %v733 = vld [vmem:[#allocation5 + $0xd98] sm:$0xff]
        %v734 = vld [vmem:[#allocation5 + $0xda0] sm:$0xff]
        %v735 = vld [vmem:[#allocation5 + $0xda8] sm:$0xff]
        %v736 = vld [vmem:[#allocation5 + $0xdb0] sm:$0xff]
        %v737 = vld [vmem:[#allocation5 + $0xdb8] sm:$0xff]
        %v738 = vld [vmem:[#allocation5 + $0xdc0] sm:$0xff]
        %v739 = vld [vmem:[#allocation5 + $0xdc8] sm:$0xff]
        %v740 = vld [vmem:[#allocation5 + $0xdd0] sm:$0xff]
        %v741 = vld [vmem:[#allocation5 + $0xdd8] sm:$0xff]
        %v742 = vld [vmem:[#allocation5 + $0xde0] sm:$0xff]
        %v743 = vld [vmem:[#allocation5 + $0xde8] sm:$0xff]
        %v744 = vld [vmem:[#allocation5 + $0xdf0] sm:$0xff]
        %v745 = vld [vmem:[#allocation5 + $0xdf8] sm:$0xff]
        %v746 = vld [vmem:[#allocation5 + $0xe00] sm:$0xff]
        %v747 = vld [vmem:[#allocation5 + $0xe08] sm:$0xff]
        %v748 = vld [vmem:[#allocation5 + $0xe10] sm:$0xff]
        %v749 = vld [vmem:[#allocation5 + $0xe18] sm:$0xff]
        %v750 = vld [vmem:[#allocation5 + $0xe20] sm:$0xff]
        %v751 = vld [vmem:[#allocation5 + $0xe28] sm:$0xff]
        %v752 = vld [vmem:[#allocation5 + $0xe30] sm:$0xff]
        %v753 = vld [vmem:[#allocation5 + $0xe38] sm:$0xff]
        %v754 = vld [vmem:[#allocation5 + $0xe40] sm:$0xff]
        %v755 = vld [vmem:[#allocation5 + $0xe48] sm:$0xff]
        %v756 = vld [vmem:[#allocation5 + $0xe50] sm:$0xff]
        %v757 = vld [vmem:[#allocation5 + $0xe58] sm:$0xff]
        %v758 = vld [vmem:[#allocation5 + $0xe60] sm:$0xff]
        %v759 = vld [vmem:[#allocation5 + $0xe68] sm:$0xff]
        %v760 = vld [vmem:[#allocation5 + $0xe70] sm:$0xff]
        %v761 = vld [vmem:[#allocation5 + $0xe78] sm:$0xff]
        %v762 = vld [vmem:[#allocation5 + $0xe80] sm:$0xff]
        %v763 = vld [vmem:[#allocation5 + $0xe88] sm:$0xff]
        %v764 = vld [vmem:[#allocation5 + $0xe90] sm:$0xff]
        %v765 = vld [vmem:[#allocation5 + $0xe98] sm:$0xff]
        %v766 = vld [vmem:[#allocation5 + $0xea0] sm:$0xff]
        %v767 = vld [vmem:[#allocation5 + $0xea8] sm:$0xff]
        %v768 = vld [vmem:[#allocation5 + $0xeb0] sm:$0xff]
        %v769 = vld [vmem:[#allocation5 + $0xeb8] sm:$0xff]
        %v770 = vld [vmem:[#allocation5 + $0xec0] sm:$0xff]
        %v771 = vld [vmem:[#allocation5 + $0xec8] sm:$0xff]
        %v772 = vld [vmem:[#allocation5 + $0xed0] sm:$0xff]
        %v773 = vld [vmem:[#allocation5 + $0xed8] sm:$0xff]
        %v774 = vld [vmem:[#allocation5 + $0xee0] sm:$0xff]
        %v775 = vld [vmem:[#allocation5 + $0xee8] sm:$0xff]
        %v776 = vld [vmem:[#allocation5 + $0xef0] sm:$0xff]
        %v777 = vld [vmem:[#allocation5 + $0xef8] sm:$0xff]
        %v778 = vld [vmem:[#allocation5 + $0xf00] sm:$0xff]
        %v779 = vld [vmem:[#allocation5 + $0xf08] sm:$0xff]
        %v780 = vld [vmem:[#allocation5 + $0xf10] sm:$0xff]
        %v781 = vld [vmem:[#allocation5 + $0xf18] sm:$0xff]
        %v782 = vld [vmem:[#allocation5 + $0xf20] sm:$0xff]
        %v783 = vld [vmem:[#allocation5 + $0xf28] sm:$0xff]
        %v784 = vld [vmem:[#allocation5 + $0xf30] sm:$0xff]
        %v785 = vld [vmem:[#allocation5 + $0xf38] sm:$0xff]
        %v786 = vld [vmem:[#allocation5 + $0xf40] sm:$0xff]
        %v787 = vld [vmem:[#allocation5 + $0xf48] sm:$0xff]
        %v788 = vld [vmem:[#allocation5 + $0xf50] sm:$0xff]
        %v789 = vld [vmem:[#allocation5 + $0xf58] sm:$0xff]
        %v790 = vld [vmem:[#allocation5 + $0xf60] sm:$0xff]
        %v791 = vld [vmem:[#allocation5 + $0xf68] sm:$0xff]
        %v792 = vld [vmem:[#allocation5 + $0xf70] sm:$0xff]
        %v793 = vld [vmem:[#allocation5 + $0xf78] sm:$0xff]
        %v794 = vld [vmem:[#allocation5 + $0xf80] sm:$0xff]
        %v795 = vld [vmem:[#allocation5 + $0xf88] sm:$0xff]
        %v796 = vld [vmem:[#allocation5 + $0xf90] sm:$0xff]
        %v797 = vld [vmem:[#allocation5 + $0xf98] sm:$0xff]
        %v798 = vld [vmem:[#allocation5 + $0xfa0] sm:$0xff]
        %v799 = vld [vmem:[#allocation5 + $0xfa8] sm:$0xff]
        %v800 = vld [vmem:[#allocation5 + $0xfb0] sm:$0xff]
        %v801 = vld [vmem:[#allocation5 + $0xfb8] sm:$0xff]
        %v802 = vld [vmem:[#allocation5 + $0xfc0] sm:$0xff]
        %v803 = vld [vmem:[#allocation5 + $0xfc8] sm:$0xff]
        %v804 = vld [vmem:[#allocation5 + $0xfd0] sm:$0xff]
        %v805 = vld [vmem:[#allocation5 + $0xfd8] sm:$0xff]
        %v806 = vld [vmem:[#allocation5 + $0xfe0] sm:$0xff]
        %v807 = vld [vmem:[#allocation5 + $0xfe8] sm:$0xff]
        %v808 = vld [vmem:[#allocation5 + $0xff0] sm:$0xff]
        %v809 = vld [vmem:[#allocation5 + $0xff8] sm:$0xff]
        %v810 = vld [vmem:[#allocation5 + $0x1000] sm:$0xff]
        %v811 = vld [vmem:[#allocation5 + $0x1008] sm:$0xff]
        %v812 = vld [vmem:[#allocation5 + $0x1010] sm:$0xff]
        %v813 = vld [vmem:[#allocation5 + $0x1018] sm:$0xff]
        %v814 = vld [vmem:[#allocation5 + $0x1020] sm:$0xff]
        %v815 = vld [vmem:[#allocation5 + $0x1028] sm:$0xff]
        %v816 = vld [vmem:[#allocation5 + $0x1030] sm:$0xff]
        %v817 = vld [vmem:[#allocation5 + $0x1038] sm:$0xff]
        %v818 = vld [vmem:[#allocation5 + $0x1040] sm:$0xff]
        %v819 = vld [vmem:[#allocation5 + $0x1048] sm:$0xff]
        %v820 = vld [vmem:[#allocation5 + $0x1050] sm:$0xff]
        %v821 = vld [vmem:[#allocation5 + $0x1058] sm:$0xff]
        %v822 = vld [vmem:[#allocation5 + $0x1060] sm:$0xff]
        %v823 = vld [vmem:[#allocation5 + $0x1068] sm:$0xff]
        %v824 = vld [vmem:[#allocation5 + $0x1070] sm:$0xff]
        %v825 = vld [vmem:[#allocation5 + $0x1078] sm:$0xff]
        %v826 = vld [vmem:[#allocation5 + $0x1080] sm:$0xff]
        %v827 = vld [vmem:[#allocation5 + $0x1088] sm:$0xff]
        %v828 = vld [vmem:[#allocation5 + $0x1090] sm:$0xff]
        %v829 = vld [vmem:[#allocation5 + $0x1098] sm:$0xff]
        %v830 = vld [vmem:[#allocation5 + $0x10a0] sm:$0xff]
        %v831 = vld [vmem:[#allocation5 + $0x10a8] sm:$0xff]
        %v832 = vld [vmem:[#allocation5 + $0x10b0] sm:$0xff]
        %v833 = vld [vmem:[#allocation5 + $0x10b8] sm:$0xff]
        %v834 = vld [vmem:[#allocation5 + $0x10c0] sm:$0xff]
        %v835 = vld [vmem:[#allocation5 + $0x10c8] sm:$0xff]
        %v836 = vld [vmem:[#allocation5 + $0x10d0] sm:$0xff]
        %v837 = vld [vmem:[#allocation5 + $0x10d8] sm:$0xff]
        %v838 = vld [vmem:[#allocation5 + $0x10e0] sm:$0xff]
        %v839 = vld [vmem:[#allocation5 + $0x10e8] sm:$0xff]
        %v840 = vld [vmem:[#allocation5 + $0x10f0] sm:$0xff]
        %v841 = vld [vmem:[#allocation5 + $0x10f8] sm:$0xff]
        %v842 = vld [vmem:[#allocation5 + $0x1100] sm:$0xff]
        %v843 = vld [vmem:[#allocation5 + $0x1108] sm:$0xff]
        %v844 = vld [vmem:[#allocation5 + $0x1110] sm:$0xff]
        %v845 = vld [vmem:[#allocation5 + $0x1118] sm:$0xff]
        %v846 = vld [vmem:[#allocation5 + $0x1120] sm:$0xff]
        %v847 = vld [vmem:[#allocation5 + $0x1128] sm:$0xff]
        %v848 = vld [vmem:[#allocation5 + $0x1130] sm:$0xff]
        %v849 = vld [vmem:[#allocation5 + $0x1138] sm:$0xff]
        %v850 = vld [vmem:[#allocation5 + $0x1140] sm:$0xff]
        %v851 = vld [vmem:[#allocation5 + $0x1148] sm:$0xff]
        %v852 = vld [vmem:[#allocation5 + $0x1150] sm:$0xff]
        %v853 = vld [vmem:[#allocation5 + $0x1158] sm:$0xff]
        %v854 = vld [vmem:[#allocation5 + $0x1160] sm:$0xff]
        %v855 = vld [vmem:[#allocation5 + $0x1168] sm:$0xff]
        %v856 = vld [vmem:[#allocation5 + $0x1170] sm:$0xff]
        %v857 = vld [vmem:[#allocation5 + $0x1178] sm:$0xff]
        %v858 = vld [vmem:[#allocation5 + $0x1180] sm:$0xff]
        %v859 = vld [vmem:[#allocation5 + $0x1188] sm:$0xff]
        %v860 = vld [vmem:[#allocation5 + $0x1190] sm:$0xff]
        %v861 = vld [vmem:[#allocation5 + $0x1198] sm:$0xff]
        %v862 = vld [vmem:[#allocation5 + $0x11a0] sm:$0xff]
        %v863 = vld [vmem:[#allocation5 + $0x11a8] sm:$0xff]
        %v864 = vld [vmem:[#allocation5 + $0x11b0] sm:$0xff]
        %v865 = vld [vmem:[#allocation5 + $0x11b8] sm:$0xff]
        %v866 = vld [vmem:[#allocation5 + $0x11c0] sm:$0xff]
        %v867 = vld [vmem:[#allocation5 + $0x11c8] sm:$0xff]
        %v868 = vld [vmem:[#allocation5 + $0x11d0] sm:$0xff]
        %v869 = vld [vmem:[#allocation5 + $0x11d8] sm:$0xff]
        %v870 = vld [vmem:[#allocation5 + $0x11e0] sm:$0xff]
        %v871 = vld [vmem:[#allocation5 + $0x11e8] sm:$0xff]
        %v872 = vld [vmem:[#allocation5 + $0x11f0] sm:$0xff]
        %v873 = vld [vmem:[#allocation5 + $0x11f8] sm:$0xff]
        %v874 = vld [vmem:[#allocation7] sm:$0xff]
        %v875 = vld [vmem:[#allocation7 + $0x8] sm:$0xf]
        %v878 = vlaneseq
        %v879 = vshrl.u32 %v878, 7
        %v880 = vsub.s32 0, %v879
        %v881 = vrot.slane %v874, %v880
        %v882 = vlaneseq
        %v883 = vshrl.u32 %v882, 7
        %v884 = vsub.s32 1, %v883
        %v885 = vrot.slane %v874, %v884
        %v886 = vlaneseq
        %v887 = vshrl.u32 %v886, 7
        %v888 = vsub.s32 2, %v887
        %v889 = vrot.slane %v874, %v888
        %v890 = vlaneseq
        %v891 = vshrl.u32 %v890, 7
        %v892 = vsub.s32 3, %v891
        %v893 = vrot.slane %v874, %v892
        %v894 = vlaneseq
        %v895 = vshrl.u32 %v894, 7
        %v896 = vsub.s32 4, %v895
        %v897 = vrot.slane %v874, %v896
        %v898 = vlaneseq
        %v899 = vshrl.u32 %v898, 7
        %v900 = vsub.s32 5, %v899
        %v901 = vrot.slane %v874, %v900
        %v902 = vlaneseq
        %v903 = vshrl.u32 %v902, 7
        %v904 = vsub.s32 6, %v903
        %v905 = vrot.slane %v874, %v904
        %v906 = vlaneseq
        %v907 = vshrl.u32 %v906, 7
        %v908 = vsub.s32 7, %v907
        %v909 = vrot.slane %v874, %v908
        %v910 = vlaneseq
        %v911 = vshrl.u32 %v910, 7
        %v912 = vsub.s32 0, %v911
        %v913 = vrot.slane %v875, %v912
        %v914 = vlaneseq
        %v915 = vshrl.u32 %v914, 7
        %v916 = vsub.s32 1, %v915
        %v917 = vrot.slane %v875, %v916
        %v918 = vlaneseq
        %v919 = vshrl.u32 %v918, 7
        %v920 = vsub.s32 2, %v919
        %v921 = vrot.slane %v875, %v920
        %v922 = vlaneseq
        %v923 = vshrl.u32 %v922, 7
        %v924 = vsub.s32 3, %v923
        %v925 = vrot.slane %v875, %v924
        %938 = vmatprep.subr.mxu0 %v299
        %939 = vmatpush1.msra.mxu0 %v298
        %940 = vmatprep.subr.mxu0 %v311
        %941 = vmatpush1.msra.mxu0 %v310
        %942 = vmatprep.subr.mxu0 %v323
        %943 = vmatpush1.msra.mxu0 %v322
        %944 = vmatprep.subr.mxu0 %v335
        %945 = vmatpush1.msra.mxu0 %v334
        %946 = vmatprep.subr.mxu0 %v347
        %947 = vmatpush1.msra.mxu0 %v346
        %948 = vmatprep.subr.mxu0 %v359
        %949 = vmatpush1.msra.mxu0 %v358
        %950 = vmatprep.subr.mxu0 %v371
        %951 = vmatpush1.msra.mxu0 %v370
        %952 = vmatprep.subr.mxu0 %v383
        %953 = vmatpush1.msra.mxu0 %v382
        %954 = vmatprep.subr.mxu0 %v395
        %955 = vmatpush1.msra.mxu0 %v394
        %956 = vmatprep.subr.mxu0 %v407
        %957 = vmatpush1.msra.mxu0 %v406
        %958 = vmatprep.subr.mxu0 %v419
        %959 = vmatpush1.msra.mxu0 %v418
        %960 = vmatprep.subr.mxu0 %v431
        %961 = vmatpush1.msra.mxu0 %v430
        %962 = vmatprep.subr.mxu0 %v443
        %963 = vmatpush1.msra.mxu0 %v442
        %964 = vmatprep.subr.mxu0 %v455
        %965 = vmatpush1.msra.mxu0 %v454
        %966 = vmatprep.subr.mxu0 %v467
        %967 = vmatpush1.msra.mxu0 %v466
        %968 = vmatprep.subr.mxu0 %v479
        %969 = vmatpush1.msra.mxu0 %v478
        %970 = vmatprep.subr.mxu0 %v491
        %971 = vmatpush1.msra.mxu0 %v490
        %972 = vmatprep.subr.mxu0 %v503
        %973 = vmatpush1.msra.mxu0 %v502
        %974 = vmatprep.subr.mxu0 %v515
        %975 = vmatpush1.msra.mxu0 %v514
        %976 = vmatprep.subr.mxu0 %v527
        %977 = vmatpush1.msra.mxu0 %v526
        %978 = vmatprep.subr.mxu0 %v539
        %979 = vmatpush1.msra.mxu0 %v538
        %980 = vmatprep.subr.mxu0 %v551
        %981 = vmatpush1.msra.mxu0 %v550
        %982 = vmatprep.subr.mxu0 %v563
        %983 = vmatpush1.msra.mxu0 %v562
        %984 = vmatprep.subr.mxu0 %v575
        %985 = vmatpush1.msra.mxu0 %v574
        %986 = vmatprep.subr.mxu0 %v587
        %987 = vmatpush1.msra.mxu0 %v586
        %988 = vmatprep.subr.mxu0 %v599
        %989 = vmatpush1.msra.mxu0 %v598
        %990 = vmatprep.subr.mxu0 %v611
        %991 = vmatpush1.msra.mxu0 %v610
        %992 = vmatprep.subr.mxu0 %v623
        %993 = vmatpush1.msra.mxu0 %v622
        %994 = vmatprep.subr.mxu0 %v635
        %995 = vmatpush1.msra.mxu0 %v634
        %996 = vmatprep.subr.mxu0 %v647
        %997 = vmatpush1.msra.mxu0 %v646
        %998 = vmatprep.subr.mxu0 %v659
        %999 = vmatpush1.msra.mxu0 %v658
        %1000 = vmatprep.subr.mxu0 %v671
        %1001 = vmatpush1.msra.mxu0 %v670
        %1002 = vmatprep.mubr.f32.mxu0 %v296
        %1003 = vmatmul.mubr.f32.gmra.mrb[0].mxu0 %v295
        %v1004 = vpop.f32.mrb[0].mxu0
        %v1005 = vadd.f32 %v881, %v1004
        %v1006 = vpop.f32.mrb[0].mxu0
        %v1007 = vadd.f32 %v885, %v1006
        %1008 = vdwg.mxu0
        %1009 = vmatprep.subr.mxu0 %v683
        %1010 = vmatpush1.msra.mxu0 %v682
        %1011 = vmatprep.subr.mxu0 %v695
        %1012 = vmatpush1.msra.mxu0 %v694
        %1013 = vmatprep.subr.mxu0 %v707
        %1014 = vmatpush1.msra.mxu0 %v706
        %1015 = vmatprep.subr.mxu0 %v719
        %1016 = vmatpush1.msra.mxu0 %v718
        %1017 = vmatprep.subr.mxu0 %v731
        %1018 = vmatpush1.msra.mxu0 %v730
        %1019 = vmatprep.subr.mxu0 %v743
        %1020 = vmatpush1.msra.mxu0 %v742
        %1021 = vmatprep.subr.mxu0 %v755
        %1022 = vmatpush1.msra.mxu0 %v754
        %1023 = vmatprep.subr.mxu0 %v767
        %1024 = vmatpush1.msra.mxu0 %v766
        %1025 = vmatprep.subr.mxu0 %v779
        %1026 = vmatpush1.msra.mxu0 %v778
        %1027 = vmatprep.subr.mxu0 %v791
        %1028 = vmatpush1.msra.mxu0 %v790
        %1029 = vmatprep.subr.mxu0 %v803
        %1030 = vmatpush1.msra.mxu0 %v802
        %1031 = vmatprep.subr.mxu0 %v815
        %1032 = vmatpush1.msra.mxu0 %v814
        %1033 = vmatprep.subr.mxu0 %v827
        %1034 = vmatpush1.msra.mxu0 %v826
        %1035 = vmatprep.subr.mxu0 %v839
        %1036 = vmatpush1.msra.mxu0 %v838
        %1037 = vmatprep.subr.mxu0 %v851
        %1038 = vmatpush1.msra.mxu0 %v850
        %1039 = vmatprep.subr.mxu0 %v863
        %1040 = vmatpush1.msra.mxu0 %v862
        %1041 = vmatprep.subr.mxu0 0.0
        %1042 = vmatpush1.msra.mxu0 0.0
        %1043 = vmatprep.subr.mxu0 0.0
        %1044 = vmatpush1.msra.mxu0 0.0
        %1045 = vmatprep.subr.mxu0 0.0
        %1046 = vmatpush1.msra.mxu0 0.0
        %1047 = vmatprep.subr.mxu0 0.0
        %1048 = vmatpush1.msra.mxu0 0.0
        %1049 = vmatprep.subr.mxu0 0.0
        %1050 = vmatpush1.msra.mxu0 0.0
        %1051 = vmatprep.subr.mxu0 0.0
        %1052 = vmatpush1.msra.mxu0 0.0
        %1053 = vmatprep.subr.mxu0 0.0
        %1054 = vmatpush1.msra.mxu0 0.0
        %1055 = vmatprep.subr.mxu0 0.0
        %1056 = vmatpush1.msra.mxu0 0.0
        %1057 = vmatprep.subr.mxu0 0.0
        %1058 = vmatpush1.msra.mxu0 0.0
        %1059 = vmatprep.subr.mxu0 0.0
        %1060 = vmatpush1.msra.mxu0 0.0
        %1061 = vmatprep.subr.mxu0 0.0
        %1062 = vmatpush1.msra.mxu0 0.0
        %1063 = vmatprep.subr.mxu0 0.0
        %1064 = vmatpush1.msra.mxu0 0.0
        %1065 = vmatprep.subr.mxu0 0.0
        %1066 = vmatpush1.msra.mxu0 0.0
        %1067 = vmatprep.subr.mxu0 0.0
        %1068 = vmatpush1.msra.mxu0 0.0
        %1069 = vmatprep.subr.mxu0 0.0
        %1070 = vmatpush1.msra.mxu0 0.0
        %1071 = vmatprep.subr.mxu0 0.0
        %1072 = vmatpush1.msra.mxu0 0.0
        %1073 = vmatprep.mubr.f32.mxu0 0.0
        %1074 = vmatmul.mubr.f32.gmra.mrb[0].mxu0 %v297
        %v1075 = vpop.f32.mrb[0].mxu0
        %v1076 = vadd.f32 %v1005, %v1075
        %v1077 = vpop.f32.mrb[0].mxu0
        %v1078 = vadd.f32 %v1007, %v1077
        %1079 = vdwg.mxu0
        %1080 = vmatprep.subr.mxu0 %v301
        %1081 = vmatpush1.msra.mxu0 %v300
        %1082 = vmatprep.subr.mxu0 %v313
        %1083 = vmatpush1.msra.mxu0 %v312
        %1084 = vmatprep.subr.mxu0 %v325
        %1085 = vmatpush1.msra.mxu0 %v324
        %1086 = vmatprep.subr.mxu0 %v337
        %1087 = vmatpush1.msra.mxu0 %v336
        %1088 = vmatprep.subr.mxu0 %v349
        %1089 = vmatpush1.msra.mxu0 %v348
        %1090 = vmatprep.subr.mxu0 %v361
        %1091 = vmatpush1.msra.mxu0 %v360
        %1092 = vmatprep.subr.mxu0 %v373
        %1093 = vmatpush1.msra.mxu0 %v372
        %1094 = vmatprep.subr.mxu0 %v385
        %1095 = vmatpush1.msra.mxu0 %v384
        %1096 = vmatprep.subr.mxu0 %v397
        %1097 = vmatpush1.msra.mxu0 %v396
        %1098 = vmatprep.subr.mxu0 %v409
        %1099 = vmatpush1.msra.mxu0 %v408
        %1100 = vmatprep.subr.mxu0 %v421
        %1101 = vmatpush1.msra.mxu0 %v420
        %1102 = vmatprep.subr.mxu0 %v433
        %1103 = vmatpush1.msra.mxu0 %v432
        %1104 = vmatprep.subr.mxu0 %v445
        %1105 = vmatpush1.msra.mxu0 %v444
        %1106 = vmatprep.subr.mxu0 %v457
        %1107 = vmatpush1.msra.mxu0 %v456
        %1108 = vmatprep.subr.mxu0 %v469
        %1109 = vmatpush1.msra.mxu0 %v468
        %1110 = vmatprep.subr.mxu0 %v481
        %1111 = vmatpush1.msra.mxu0 %v480
        %1112 = vmatprep.subr.mxu0 %v493
        %1113 = vmatpush1.msra.mxu0 %v492
        %1114 = vmatprep.subr.mxu0 %v505
        %1115 = vmatpush1.msra.mxu0 %v504
        %1116 = vmatprep.subr.mxu0 %v517
        %1117 = vmatpush1.msra.mxu0 %v516
        %1118 = vmatprep.subr.mxu0 %v529
        %1119 = vmatpush1.msra.mxu0 %v528
        %1120 = vmatprep.subr.mxu0 %v541
        %1121 = vmatpush1.msra.mxu0 %v540
        %1122 = vmatprep.subr.mxu0 %v553
        %1123 = vmatpush1.msra.mxu0 %v552
        %1124 = vmatprep.subr.mxu0 %v565
        %1125 = vmatpush1.msra.mxu0 %v564
        %1126 = vmatprep.subr.mxu0 %v577
        %1127 = vmatpush1.msra.mxu0 %v576
        %1128 = vmatprep.subr.mxu0 %v589
        %1129 = vmatpush1.msra.mxu0 %v588
        %1130 = vmatprep.subr.mxu0 %v601
        %1131 = vmatpush1.msra.mxu0 %v600
        %1132 = vmatprep.subr.mxu0 %v613
        %1133 = vmatpush1.msra.mxu0 %v612
        %1134 = vmatprep.subr.mxu0 %v625
        %1135 = vmatpush1.msra.mxu0 %v624
        %1136 = vmatprep.subr.mxu0 %v637
        %1137 = vmatpush1.msra.mxu0 %v636
        %1138 = vmatprep.subr.mxu0 %v649
        %1139 = vmatpush1.msra.mxu0 %v648
        %1140 = vmatprep.subr.mxu0 %v661
        %1141 = vmatpush1.msra.mxu0 %v660
        %1142 = vmatprep.subr.mxu0 %v673
        %1143 = vmatpush1.msra.mxu0 %v672
        %1144 = vmatprep.mubr.f32.mxu0 %v296
        %1145 = vmatmul.mubr.f32.gmra.mrb[0].mxu0 %v295
        %v1146 = vpop.f32.mrb[0].mxu0
        %v1147 = vadd.f32 %v889, %v1146
        %v1148 = vpop.f32.mrb[0].mxu0
        %v1149 = vadd.f32 %v893, %v1148
        %1150 = vdwg.mxu0
        %1151 = vmatprep.subr.mxu0 %v685
        %1152 = vmatpush1.msra.mxu0 %v684
        %1153 = vmatprep.subr.mxu0 %v697
        %1154 = vmatpush1.msra.mxu0 %v696
        %1155 = vmatprep.subr.mxu0 %v709
        %1156 = vmatpush1.msra.mxu0 %v708
        %1157 = vmatprep.subr.mxu0 %v721
        %1158 = vmatpush1.msra.mxu0 %v720
        %1159 = vmatprep.subr.mxu0 %v733
        %1160 = vmatpush1.msra.mxu0 %v732
        %1161 = vmatprep.subr.mxu0 %v745
        %1162 = vmatpush1.msra.mxu0 %v744
        %1163 = vmatprep.subr.mxu0 %v757
        %1164 = vmatpush1.msra.mxu0 %v756
        %1165 = vmatprep.subr.mxu0 %v769
        %1166 = vmatpush1.msra.mxu0 %v768
        %1167 = vmatprep.subr.mxu0 %v781
        %1168 = vmatpush1.msra.mxu0 %v780
        %1169 = vmatprep.subr.mxu0 %v793
        %1170 = vmatpush1.msra.mxu0 %v792
        %1171 = vmatprep.subr.mxu0 %v805
        %1172 = vmatpush1.msra.mxu0 %v804
        %1173 = vmatprep.subr.mxu0 %v817
        %1174 = vmatpush1.msra.mxu0 %v816
        %1175 = vmatprep.subr.mxu0 %v829
        %1176 = vmatpush1.msra.mxu0 %v828
        %1177 = vmatprep.subr.mxu0 %v841
        %1178 = vmatpush1.msra.mxu0 %v840
        %1179 = vmatprep.subr.mxu0 %v853
        %1180 = vmatpush1.msra.mxu0 %v852
        %1181 = vmatprep.subr.mxu0 %v865
        %1182 = vmatpush1.msra.mxu0 %v864
        %1183 = vmatprep.subr.mxu0 0.0
        %1184 = vmatpush1.msra.mxu0 0.0
        %1185 = vmatprep.subr.mxu0 0.0
        %1186 = vmatpush1.msra.mxu0 0.0
        %1187 = vmatprep.subr.mxu0 0.0
        %1188 = vmatpush1.msra.mxu0 0.0
        %1189 = vmatprep.subr.mxu0 0.0
        %1190 = vmatpush1.msra.mxu0 0.0
        %1191 = vmatprep.subr.mxu0 0.0
        %1192 = vmatpush1.msra.mxu0 0.0
        %1193 = vmatprep.subr.mxu0 0.0
        %1194 = vmatpush1.msra.mxu0 0.0
        %1195 = vmatprep.subr.mxu0 0.0
        %1196 = vmatpush1.msra.mxu0 0.0
        %1197 = vmatprep.subr.mxu0 0.0
        %1198 = vmatpush1.msra.mxu0 0.0
        %1199 = vmatprep.subr.mxu0 0.0
        %1200 = vmatpush1.msra.mxu0 0.0
        %1201 = vmatprep.subr.mxu0 0.0
        %1202 = vmatpush1.msra.mxu0 0.0
        %1203 = vmatprep.subr.mxu0 0.0
        %1204 = vmatpush1.msra.mxu0 0.0
        %1205 = vmatprep.subr.mxu0 0.0
        %1206 = vmatpush1.msra.mxu0 0.0
        %1207 = vmatprep.subr.mxu0 0.0
        %1208 = vmatpush1.msra.mxu0 0.0
        %1209 = vmatprep.subr.mxu0 0.0
        %1210 = vmatpush1.msra.mxu0 0.0
        %1211 = vmatprep.subr.mxu0 0.0
        %1212 = vmatpush1.msra.mxu0 0.0
        %1213 = vmatprep.subr.mxu0 0.0
        %1214 = vmatpush1.msra.mxu0 0.0
        %1215 = vmatprep.mubr.f32.mxu0 0.0
        %1216 = vmatmul.mubr.f32.gmra.mrb[0].mxu0 %v297
        %v1217 = vpop.f32.mrb[0].mxu0
        %v1218 = vadd.f32 %v1147, %v1217
        %v1219 = vpop.f32.mrb[0].mxu0
        %v1220 = vadd.f32 %v1149, %v1219
        %1221 = vdwg.mxu0
        %1222 = vmatprep.subr.mxu0 %v303
        %1223 = vmatpush1.msra.mxu0 %v302
        %1224 = vmatprep.subr.mxu0 %v315
        %1225 = vmatpush1.msra.mxu0 %v314
        %1226 = vmatprep.subr.mxu0 %v327
        %1227 = vmatpush1.msra.mxu0 %v326
        %1228 = vmatprep.subr.mxu0 %v339
        %1229 = vmatpush1.msra.mxu0 %v338
        %1230 = vmatprep.subr.mxu0 %v351
        %1231 = vmatpush1.msra.mxu0 %v350
        %1232 = vmatprep.subr.mxu0 %v363
        %1233 = vmatpush1.msra.mxu0 %v362
        %1234 = vmatprep.subr.mxu0 %v375
        %1235 = vmatpush1.msra.mxu0 %v374
        %1236 = vmatprep.subr.mxu0 %v387
        %1237 = vmatpush1.msra.mxu0 %v386
        %1238 = vmatprep.subr.mxu0 %v399
        %1239 = vmatpush1.msra.mxu0 %v398
        %1240 = vmatprep.subr.mxu0 %v411
        %1241 = vmatpush1.msra.mxu0 %v410
        %1242 = vmatprep.subr.mxu0 %v423
        %1243 = vmatpush1.msra.mxu0 %v422
        %1244 = vmatprep.subr.mxu0 %v435
        %1245 = vmatpush1.msra.mxu0 %v434
        %1246 = vmatprep.subr.mxu0 %v447
        %1247 = vmatpush1.msra.mxu0 %v446
        %1248 = vmatprep.subr.mxu0 %v459
        %1249 = vmatpush1.msra.mxu0 %v458
        %1250 = vmatprep.subr.mxu0 %v471
        %1251 = vmatpush1.msra.mxu0 %v470
        %1252 = vmatprep.subr.mxu0 %v483
        %1253 = vmatpush1.msra.mxu0 %v482
        %1254 = vmatprep.subr.mxu0 %v495
        %1255 = vmatpush1.msra.mxu0 %v494
        %1256 = vmatprep.subr.mxu0 %v507
        %1257 = vmatpush1.msra.mxu0 %v506
        %1258 = vmatprep.subr.mxu0 %v519
        %1259 = vmatpush1.msra.mxu0 %v518
        %1260 = vmatprep.subr.mxu0 %v531
        %1261 = vmatpush1.msra.mxu0 %v530
        %1262 = vmatprep.subr.mxu0 %v543
        %1263 = vmatpush1.msra.mxu0 %v542
        %1264 = vmatprep.subr.mxu0 %v555
        %1265 = vmatpush1.msra.mxu0 %v554
        %1266 = vmatprep.subr.mxu0 %v567
        %1267 = vmatpush1.msra.mxu0 %v566
        %1268 = vmatprep.subr.mxu0 %v579
        %1269 = vmatpush1.msra.mxu0 %v578
        %1270 = vmatprep.subr.mxu0 %v591
        %1271 = vmatpush1.msra.mxu0 %v590
        %1272 = vmatprep.subr.mxu0 %v603
        %1273 = vmatpush1.msra.mxu0 %v602
        %1274 = vmatprep.subr.mxu0 %v615
        %1275 = vmatpush1.msra.mxu0 %v614
        %1276 = vmatprep.subr.mxu0 %v627
        %1277 = vmatpush1.msra.mxu0 %v626
        %1278 = vmatprep.subr.mxu0 %v639
        %1279 = vmatpush1.msra.mxu0 %v638
        %1280 = vmatprep.subr.mxu0 %v651
        %1281 = vmatpush1.msra.mxu0 %v650
        %1282 = vmatprep.subr.mxu0 %v663
        %1283 = vmatpush1.msra.mxu0 %v662
        %1284 = vmatprep.subr.mxu0 %v675
        %1285 = vmatpush1.msra.mxu0 %v674
        %1286 = vmatprep.mubr.f32.mxu0 %v296
        %1287 = vmatmul.mubr.f32.gmra.mrb[0].mxu0 %v295
        %v1288 = vpop.f32.mrb[0].mxu0
        %v1289 = vadd.f32 %v897, %v1288
        %v1290 = vpop.f32.mrb[0].mxu0
        %v1291 = vadd.f32 %v901, %v1290
        %1292 = vdwg.mxu0
        %1293 = vmatprep.subr.mxu0 %v687
        %1294 = vmatpush1.msra.mxu0 %v686
        %1295 = vmatprep.subr.mxu0 %v699
        %1296 = vmatpush1.msra.mxu0 %v698
        %1297 = vmatprep.subr.mxu0 %v711
        %1298 = vmatpush1.msra.mxu0 %v710
        %1299 = vmatprep.subr.mxu0 %v723
        %1300 = vmatpush1.msra.mxu0 %v722
        %1301 = vmatprep.subr.mxu0 %v735
        %1302 = vmatpush1.msra.mxu0 %v734
        %1303 = vmatprep.subr.mxu0 %v747
        %1304 = vmatpush1.msra.mxu0 %v746
        %1305 = vmatprep.subr.mxu0 %v759
        %1306 = vmatpush1.msra.mxu0 %v758
        %1307 = vmatprep.subr.mxu0 %v771
        %1308 = vmatpush1.msra.mxu0 %v770
        %1309 = vmatprep.subr.mxu0 %v783
        %1310 = vmatpush1.msra.mxu0 %v782
        %1311 = vmatprep.subr.mxu0 %v795
        %1312 = vmatpush1.msra.mxu0 %v794
        %1313 = vmatprep.subr.mxu0 %v807
        %1314 = vmatpush1.msra.mxu0 %v806
        %1315 = vmatprep.subr.mxu0 %v819
        %1316 = vmatpush1.msra.mxu0 %v818
        %1317 = vmatprep.subr.mxu0 %v831
        %1318 = vmatpush1.msra.mxu0 %v830
        %1319 = vmatprep.subr.mxu0 %v843
        %1320 = vmatpush1.msra.mxu0 %v842
        %1321 = vmatprep.subr.mxu0 %v855
        %1322 = vmatpush1.msra.mxu0 %v854
        %1323 = vmatprep.subr.mxu0 %v867
        %1324 = vmatpush1.msra.mxu0 %v866
        %1325 = vmatprep.subr.mxu0 0.0
        %1326 = vmatpush1.msra.mxu0 0.0
        %1327 = vmatprep.subr.mxu0 0.0
        %1328 = vmatpush1.msra.mxu0 0.0
        %1329 = vmatprep.subr.mxu0 0.0
        %1330 = vmatpush1.msra.mxu0 0.0
        %1331 = vmatprep.subr.mxu0 0.0
        %1332 = vmatpush1.msra.mxu0 0.0
        %1333 = vmatprep.subr.mxu0 0.0
        %1334 = vmatpush1.msra.mxu0 0.0
        %1335 = vmatprep.subr.mxu0 0.0
        %1336 = vmatpush1.msra.mxu0 0.0
        %1337 = vmatprep.subr.mxu0 0.0
        %1338 = vmatpush1.msra.mxu0 0.0
        %1339 = vmatprep.subr.mxu0 0.0
        %1340 = vmatpush1.msra.mxu0 0.0
        %1341 = vmatprep.subr.mxu0 0.0
        %1342 = vmatpush1.msra.mxu0 0.0
        %1343 = vmatprep.subr.mxu0 0.0
        %1344 = vmatpush1.msra.mxu0 0.0
        %1345 = vmatprep.subr.mxu0 0.0
        %1346 = vmatpush1.msra.mxu0 0.0
        %1347 = vmatprep.subr.mxu0 0.0
        %1348 = vmatpush1.msra.mxu0 0.0
        %1349 = vmatprep.subr.mxu0 0.0
        %1350 = vmatpush1.msra.mxu0 0.0
        %1351 = vmatprep.subr.mxu0 0.0
        %1352 = vmatpush1.msra.mxu0 0.0
        %1353 = vmatprep.subr.mxu0 0.0
        %1354 = vmatpush1.msra.mxu0 0.0
        %1355 = vmatprep.subr.mxu0 0.0
        %1356 = vmatpush1.msra.mxu0 0.0
        %1357 = vmatprep.mubr.f32.mxu0 0.0
        %1358 = vmatmul.mubr.f32.gmra.mrb[0].mxu0 %v297
        %v1359 = vpop.f32.mrb[0].mxu0
        %v1360 = vadd.f32 %v1289, %v1359
        %v1361 = vpop.f32.mrb[0].mxu0
        %v1362 = vadd.f32 %v1291, %v1361
        %1363 = vdwg.mxu0
        %1364 = vmatprep.subr.mxu0 %v305
        %1365 = vmatpush1.msra.mxu0 %v304
        %1366 = vmatprep.subr.mxu0 %v317
        %1367 = vmatpush1.msra.mxu0 %v316
        %1368 = vmatprep.subr.mxu0 %v329
        %1369 = vmatpush1.msra.mxu0 %v328
        %1370 = vmatprep.subr.mxu0 %v341
        %1371 = vmatpush1.msra.mxu0 %v340
        %1372 = vmatprep.subr.mxu0 %v353
        %1373 = vmatpush1.msra.mxu0 %v352
        %1374 = vmatprep.subr.mxu0 %v365
        %1375 = vmatpush1.msra.mxu0 %v364
        %1376 = vmatprep.subr.mxu0 %v377
        %1377 = vmatpush1.msra.mxu0 %v376
        %1378 = vmatprep.subr.mxu0 %v389
        %1379 = vmatpush1.msra.mxu0 %v388
        %1380 = vmatprep.subr.mxu0 %v401
        %1381 = vmatpush1.msra.mxu0 %v400
        %1382 = vmatprep.subr.mxu0 %v413
        %1383 = vmatpush1.msra.mxu0 %v412
        %1384 = vmatprep.subr.mxu0 %v425
        %1385 = vmatpush1.msra.mxu0 %v424
        %1386 = vmatprep.subr.mxu0 %v437
        %1387 = vmatpush1.msra.mxu0 %v436
        %1388 = vmatprep.subr.mxu0 %v449
        %1389 = vmatpush1.msra.mxu0 %v448
        %1390 = vmatprep.subr.mxu0 %v461
        %1391 = vmatpush1.msra.mxu0 %v460
        %1392 = vmatprep.subr.mxu0 %v473
        %1393 = vmatpush1.msra.mxu0 %v472
        %1394 = vmatprep.subr.mxu0 %v485
        %1395 = vmatpush1.msra.mxu0 %v484
        %1396 = vmatprep.subr.mxu0 %v497
        %1397 = vmatpush1.msra.mxu0 %v496
        %1398 = vmatprep.subr.mxu0 %v509
        %1399 = vmatpush1.msra.mxu0 %v508
        %1400 = vmatprep.subr.mxu0 %v521
        %1401 = vmatpush1.msra.mxu0 %v520
        %1402 = vmatprep.subr.mxu0 %v533
        %1403 = vmatpush1.msra.mxu0 %v532
        %1404 = vmatprep.subr.mxu0 %v545
        %1405 = vmatpush1.msra.mxu0 %v544
        %1406 = vmatprep.subr.mxu0 %v557
        %1407 = vmatpush1.msra.mxu0 %v556
        %1408 = vmatprep.subr.mxu0 %v569
        %1409 = vmatpush1.msra.mxu0 %v568
        %1410 = vmatprep.subr.mxu0 %v581
        %1411 = vmatpush1.msra.mxu0 %v580
        %1412 = vmatprep.subr.mxu0 %v593
        %1413 = vmatpush1.msra.mxu0 %v592
        %1414 = vmatprep.subr.mxu0 %v605
        %1415 = vmatpush1.msra.mxu0 %v604
        %1416 = vmatprep.subr.mxu0 %v617
        %1417 = vmatpush1.msra.mxu0 %v616
        %1418 = vmatprep.subr.mxu0 %v629
        %1419 = vmatpush1.msra.mxu0 %v628
        %1420 = vmatprep.subr.mxu0 %v641
        %1421 = vmatpush1.msra.mxu0 %v640
        %1422 = vmatprep.subr.mxu0 %v653
        %1423 = vmatpush1.msra.mxu0 %v652
        %1424 = vmatprep.subr.mxu0 %v665
        %1425 = vmatpush1.msra.mxu0 %v664
        %1426 = vmatprep.subr.mxu0 %v677
        %1427 = vmatpush1.msra.mxu0 %v676
        %1428 = vmatprep.mubr.f32.mxu0 %v296
        %1429 = vmatmul.mubr.f32.gmra.mrb[0].mxu0 %v295
        %v1430 = vpop.f32.mrb[0].mxu0
        %v1431 = vadd.f32 %v905, %v1430
        %v1432 = vpop.f32.mrb[0].mxu0
        %v1433 = vadd.f32 %v909, %v1432
        %1434 = vdwg.mxu0
        %1435 = vmatprep.subr.mxu0 %v689
        %1436 = vmatpush1.msra.mxu0 %v688
        %1437 = vmatprep.subr.mxu0 %v701
        %1438 = vmatpush1.msra.mxu0 %v700
        %1439 = vmatprep.subr.mxu0 %v713
        %1440 = vmatpush1.msra.mxu0 %v712
        %1441 = vmatprep.subr.mxu0 %v725
        %1442 = vmatpush1.msra.mxu0 %v724
        %1443 = vmatprep.subr.mxu0 %v737
        %1444 = vmatpush1.msra.mxu0 %v736
        %1445 = vmatprep.subr.mxu0 %v749
        %1446 = vmatpush1.msra.mxu0 %v748
        %1447 = vmatprep.subr.mxu0 %v761
        %1448 = vmatpush1.msra.mxu0 %v760
        %1449 = vmatprep.subr.mxu0 %v773
        %1450 = vmatpush1.msra.mxu0 %v772
        %1451 = vmatprep.subr.mxu0 %v785
        %1452 = vmatpush1.msra.mxu0 %v784
        %1453 = vmatprep.subr.mxu0 %v797
        %1454 = vmatpush1.msra.mxu0 %v796
        %1455 = vmatprep.subr.mxu0 %v809
        %1456 = vmatpush1.msra.mxu0 %v808
        %1457 = vmatprep.subr.mxu0 %v821
        %1458 = vmatpush1.msra.mxu0 %v820
        %1459 = vmatprep.subr.mxu0 %v833
        %1460 = vmatpush1.msra.mxu0 %v832
        %1461 = vmatprep.subr.mxu0 %v845
        %1462 = vmatpush1.msra.mxu0 %v844
        %1463 = vmatprep.subr.mxu0 %v857
        %1464 = vmatpush1.msra.mxu0 %v856
        %1465 = vmatprep.subr.mxu0 %v869
        %1466 = vmatpush1.msra.mxu0 %v868
        %1467 = vmatprep.subr.mxu0 0.0
        %1468 = vmatpush1.msra.mxu0 0.0
        %1469 = vmatprep.subr.mxu0 0.0
        %1470 = vmatpush1.msra.mxu0 0.0
        %1471 = vmatprep.subr.mxu0 0.0
        %1472 = vmatpush1.msra.mxu0 0.0
        %1473 = vmatprep.subr.mxu0 0.0
        %1474 = vmatpush1.msra.mxu0 0.0
        %1475 = vmatprep.subr.mxu0 0.0
        %1476 = vmatpush1.msra.mxu0 0.0
        %1477 = vmatprep.subr.mxu0 0.0
        %1478 = vmatpush1.msra.mxu0 0.0
        %1479 = vmatprep.subr.mxu0 0.0
        %1480 = vmatpush1.msra.mxu0 0.0
        %1481 = vmatprep.subr.mxu0 0.0
        %1482 = vmatpush1.msra.mxu0 0.0
        %1483 = vmatprep.subr.mxu0 0.0
        %1484 = vmatpush1.msra.mxu0 0.0
        %1485 = vmatprep.subr.mxu0 0.0
        %1486 = vmatpush1.msra.mxu0 0.0
        %1487 = vmatprep.subr.mxu0 0.0
        %1488 = vmatpush1.msra.mxu0 0.0
        %1489 = vmatprep.subr.mxu0 0.0
        %1490 = vmatpush1.msra.mxu0 0.0
        %1491 = vmatprep.subr.mxu0 0.0
        %1492 = vmatpush1.msra.mxu0 0.0
        %1493 = vmatprep.subr.mxu0 0.0
        %1494 = vmatpush1.msra.mxu0 0.0
        %1495 = vmatprep.subr.mxu0 0.0
        %1496 = vmatpush1.msra.mxu0 0.0
        %1497 = vmatprep.subr.mxu0 0.0
        %1498 = vmatpush1.msra.mxu0 0.0
        %1499 = vmatprep.mubr.f32.mxu0 0.0
        %1500 = vmatmul.mubr.f32.gmra.mrb[0].mxu0 %v297
        %v1501 = vpop.f32.mrb[0].mxu0
        %v1502 = vadd.f32 %v1431, %v1501
        %v1503 = vpop.f32.mrb[0].mxu0
        %v1504 = vadd.f32 %v1433, %v1503
        %1505 = vdwg.mxu0
        %1506 = vmatprep.subr.mxu0 %v307
        %1507 = vmatpush1.msra.mxu0 %v306
        %1508 = vmatprep.subr.mxu0 %v319
        %1509 = vmatpush1.msra.mxu0 %v318
        %1510 = vmatprep.subr.mxu0 %v331
        %1511 = vmatpush1.msra.mxu0 %v330
        %1512 = vmatprep.subr.mxu0 %v343
        %1513 = vmatpush1.msra.mxu0 %v342
        %1514 = vmatprep.subr.mxu0 %v355
        %1515 = vmatpush1.msra.mxu0 %v354
        %1516 = vmatprep.subr.mxu0 %v367
        %1517 = vmatpush1.msra.mxu0 %v366
        %1518 = vmatprep.subr.mxu0 %v379
        %1519 = vmatpush1.msra.mxu0 %v378
        %1520 = vmatprep.subr.mxu0 %v391
        %1521 = vmatpush1.msra.mxu0 %v390
        %1522 = vmatprep.subr.mxu0 %v403
        %1523 = vmatpush1.msra.mxu0 %v402
        %1524 = vmatprep.subr.mxu0 %v415
        %1525 = vmatpush1.msra.mxu0 %v414
        %1526 = vmatprep.subr.mxu0 %v427
        %1527 = vmatpush1.msra.mxu0 %v426
        %1528 = vmatprep.subr.mxu0 %v439
        %1529 = vmatpush1.msra.mxu0 %v438
        %1530 = vmatprep.subr.mxu0 %v451
        %1531 = vmatpush1.msra.mxu0 %v450
        %1532 = vmatprep.subr.mxu0 %v463
        %1533 = vmatpush1.msra.mxu0 %v462
        %1534 = vmatprep.subr.mxu0 %v475
        %1535 = vmatpush1.msra.mxu0 %v474
        %1536 = vmatprep.subr.mxu0 %v487
        %1537 = vmatpush1.msra.mxu0 %v486
        %1538 = vmatprep.subr.mxu0 %v499
        %1539 = vmatpush1.msra.mxu0 %v498
        %1540 = vmatprep.subr.mxu0 %v511
        %1541 = vmatpush1.msra.mxu0 %v510
        %1542 = vmatprep.subr.mxu0 %v523
        %1543 = vmatpush1.msra.mxu0 %v522
        %1544 = vmatprep.subr.mxu0 %v535
        %1545 = vmatpush1.msra.mxu0 %v534
        %1546 = vmatprep.subr.mxu0 %v547
        %1547 = vmatpush1.msra.mxu0 %v546
        %1548 = vmatprep.subr.mxu0 %v559
        %1549 = vmatpush1.msra.mxu0 %v558
        %1550 = vmatprep.subr.mxu0 %v571
        %1551 = vmatpush1.msra.mxu0 %v570
        %1552 = vmatprep.subr.mxu0 %v583
        %1553 = vmatpush1.msra.mxu0 %v582
        %1554 = vmatprep.subr.mxu0 %v595
        %1555 = vmatpush1.msra.mxu0 %v594
        %1556 = vmatprep.subr.mxu0 %v607
        %1557 = vmatpush1.msra.mxu0 %v606
        %1558 = vmatprep.subr.mxu0 %v619
        %1559 = vmatpush1.msra.mxu0 %v618
        %1560 = vmatprep.subr.mxu0 %v631
        %1561 = vmatpush1.msra.mxu0 %v630
        %1562 = vmatprep.subr.mxu0 %v643
        %1563 = vmatpush1.msra.mxu0 %v642
        %1564 = vmatprep.subr.mxu0 %v655
        %1565 = vmatpush1.msra.mxu0 %v654
        %1566 = vmatprep.subr.mxu0 %v667
        %1567 = vmatpush1.msra.mxu0 %v666
        %1568 = vmatprep.subr.mxu0 %v679
        %1569 = vmatpush1.msra.mxu0 %v678
        %1570 = vmatprep.mubr.f32.mxu0 %v296
        %1571 = vmatmul.mubr.f32.gmra.mrb[0].mxu0 %v295
        %v1572 = vpop.f32.mrb[0].mxu0
        %v1573 = vadd.f32 %v913, %v1572
        %v1574 = vpop.f32.mrb[0].mxu0
        %v1575 = vadd.f32 %v917, %v1574
        %1576 = vdwg.mxu0
        %1577 = vmatprep.subr.mxu0 %v691
        %1578 = vmatpush1.msra.mxu0 %v690
        %1579 = vmatprep.subr.mxu0 %v703
        %1580 = vmatpush1.msra.mxu0 %v702
        %1581 = vmatprep.subr.mxu0 %v715
        %1582 = vmatpush1.msra.mxu0 %v714
        %1583 = vmatprep.subr.mxu0 %v727
        %1584 = vmatpush1.msra.mxu0 %v726
        %1585 = vmatprep.subr.mxu0 %v739
        %1586 = vmatpush1.msra.mxu0 %v738
        %1587 = vmatprep.subr.mxu0 %v751
        %1588 = vmatpush1.msra.mxu0 %v750
        %1589 = vmatprep.subr.mxu0 %v763
        %1590 = vmatpush1.msra.mxu0 %v762
        %1591 = vmatprep.subr.mxu0 %v775
        %1592 = vmatpush1.msra.mxu0 %v774
        %1593 = vmatprep.subr.mxu0 %v787
        %1594 = vmatpush1.msra.mxu0 %v786
        %1595 = vmatprep.subr.mxu0 %v799
        %1596 = vmatpush1.msra.mxu0 %v798
        %1597 = vmatprep.subr.mxu0 %v811
        %1598 = vmatpush1.msra.mxu0 %v810
        %1599 = vmatprep.subr.mxu0 %v823
        %1600 = vmatpush1.msra.mxu0 %v822
        %1601 = vmatprep.subr.mxu0 %v835
        %1602 = vmatpush1.msra.mxu0 %v834
        %1603 = vmatprep.subr.mxu0 %v847
        %1604 = vmatpush1.msra.mxu0 %v846
        %1605 = vmatprep.subr.mxu0 %v859
        %1606 = vmatpush1.msra.mxu0 %v858
        %1607 = vmatprep.subr.mxu0 %v871
        %1608 = vmatpush1.msra.mxu0 %v870
        %1609 = vmatprep.subr.mxu0 0.0
        %1610 = vmatpush1.msra.mxu0 0.0
        %1611 = vmatprep.subr.mxu0 0.0
        %1612 = vmatpush1.msra.mxu0 0.0
        %1613 = vmatprep.subr.mxu0 0.0
        %1614 = vmatpush1.msra.mxu0 0.0
        %1615 = vmatprep.subr.mxu0 0.0
        %1616 = vmatpush1.msra.mxu0 0.0
        %1617 = vmatprep.subr.mxu0 0.0
        %1618 = vmatpush1.msra.mxu0 0.0
        %1619 = vmatprep.subr.mxu0 0.0
        %1620 = vmatpush1.msra.mxu0 0.0
        %1621 = vmatprep.subr.mxu0 0.0
        %1622 = vmatpush1.msra.mxu0 0.0
        %1623 = vmatprep.subr.mxu0 0.0
        %1624 = vmatpush1.msra.mxu0 0.0
        %1625 = vmatprep.subr.mxu0 0.0
        %1626 = vmatpush1.msra.mxu0 0.0
        %1627 = vmatprep.subr.mxu0 0.0
        %1628 = vmatpush1.msra.mxu0 0.0
        %1629 = vmatprep.subr.mxu0 0.0
        %1630 = vmatpush1.msra.mxu0 0.0
        %1631 = vmatprep.subr.mxu0 0.0
        %1632 = vmatpush1.msra.mxu0 0.0
        %1633 = vmatprep.subr.mxu0 0.0
        %1634 = vmatpush1.msra.mxu0 0.0
        %1635 = vmatprep.subr.mxu0 0.0
        %1636 = vmatpush1.msra.mxu0 0.0
        %1637 = vmatprep.subr.mxu0 0.0
        %1638 = vmatpush1.msra.mxu0 0.0
        %1639 = vmatprep.subr.mxu0 0.0
        %1640 = vmatpush1.msra.mxu0 0.0
        %1641 = vmatprep.mubr.f32.mxu0 0.0
        %1642 = vmatmul.mubr.f32.gmra.mrb[0].mxu0 %v297
        %v1643 = vpop.f32.mrb[0].mxu0
        %v1644 = vadd.f32 %v1573, %v1643
        %v1645 = vpop.f32.mrb[0].mxu0
        %v1646 = vadd.f32 %v1575, %v1645
        %1647 = vdwg.mxu0
        %1648 = vmatprep.subr.mxu0 %v309
        %1649 = vmatpush1.msra.mxu0 %v308
        %1650 = vmatprep.subr.mxu0 %v321
        %1651 = vmatpush1.msra.mxu0 %v320
        %1652 = vmatprep.subr.mxu0 %v333
        %1653 = vmatpush1.msra.mxu0 %v332
        %1654 = vmatprep.subr.mxu0 %v345
        %1655 = vmatpush1.msra.mxu0 %v344
        %1656 = vmatprep.subr.mxu0 %v357
        %1657 = vmatpush1.msra.mxu0 %v356
        %1658 = vmatprep.subr.mxu0 %v369
        %1659 = vmatpush1.msra.mxu0 %v368
        %1660 = vmatprep.subr.mxu0 %v381
        %1661 = vmatpush1.msra.mxu0 %v380
        %1662 = vmatprep.subr.mxu0 %v393
        %1663 = vmatpush1.msra.mxu0 %v392
        %1664 = vmatprep.subr.mxu0 %v405
        %1665 = vmatpush1.msra.mxu0 %v404
        %1666 = vmatprep.subr.mxu0 %v417
        %1667 = vmatpush1.msra.mxu0 %v416
        %1668 = vmatprep.subr.mxu0 %v429
        %1669 = vmatpush1.msra.mxu0 %v428
        %1670 = vmatprep.subr.mxu0 %v441
        %1671 = vmatpush1.msra.mxu0 %v440
        %1672 = vmatprep.subr.mxu0 %v453
        %1673 = vmatpush1.msra.mxu0 %v452
        %1674 = vmatprep.subr.mxu0 %v465
        %1675 = vmatpush1.msra.mxu0 %v464
        %1676 = vmatprep.subr.mxu0 %v477
        %1677 = vmatpush1.msra.mxu0 %v476
        %1678 = vmatprep.subr.mxu0 %v489
        %1679 = vmatpush1.msra.mxu0 %v488
        %1680 = vmatprep.subr.mxu0 %v501
        %1681 = vmatpush1.msra.mxu0 %v500
        %1682 = vmatprep.subr.mxu0 %v513
        %1683 = vmatpush1.msra.mxu0 %v512
        %1684 = vmatprep.subr.mxu0 %v525
        %1685 = vmatpush1.msra.mxu0 %v524
        %1686 = vmatprep.subr.mxu0 %v537
        %1687 = vmatpush1.msra.mxu0 %v536
        %1688 = vmatprep.subr.mxu0 %v549
        %1689 = vmatpush1.msra.mxu0 %v548
        %1690 = vmatprep.subr.mxu0 %v561
        %1691 = vmatpush1.msra.mxu0 %v560
        %1692 = vmatprep.subr.mxu0 %v573
        %1693 = vmatpush1.msra.mxu0 %v572
        %1694 = vmatprep.subr.mxu0 %v585
        %1695 = vmatpush1.msra.mxu0 %v584
        %1696 = vmatprep.subr.mxu0 %v597
        %1697 = vmatpush1.msra.mxu0 %v596
        %1698 = vmatprep.subr.mxu0 %v609
        %1699 = vmatpush1.msra.mxu0 %v608
        %1700 = vmatprep.subr.mxu0 %v621
        %1701 = vmatpush1.msra.mxu0 %v620
        %1702 = vmatprep.subr.mxu0 %v633
        %1703 = vmatpush1.msra.mxu0 %v632
        %1704 = vmatprep.subr.mxu0 %v645
        %1705 = vmatpush1.msra.mxu0 %v644
        %1706 = vmatprep.subr.mxu0 %v657
        %1707 = vmatpush1.msra.mxu0 %v656
        %1708 = vmatprep.subr.mxu0 %v669
        %1709 = vmatpush1.msra.mxu0 %v668
        %1710 = vmatprep.subr.mxu0 %v681
        %1711 = vmatpush1.msra.mxu0 %v680
        %1712 = vmatprep.mubr.f32.mxu0 %v296
        %1713 = vmatmul.mubr.f32.gmra.mrb[0].mxu0 %v295
        %v1714 = vpop.f32.mrb[0].mxu0
        %v1715 = vadd.f32 %v921, %v1714
        %v1716 = vpop.f32.mrb[0].mxu0
        %v1717 = vadd.f32 %v925, %v1716
        %1718 = vdwg.mxu0
        %1719 = vmatprep.subr.mxu0 %v693
        %1720 = vmatpush1.msra.mxu0 %v692
        %1721 = vmatprep.subr.mxu0 %v705
        %1722 = vmatpush1.msra.mxu0 %v704
        %1723 = vmatprep.subr.mxu0 %v717
        %1724 = vmatpush1.msra.mxu0 %v716
        %1725 = vmatprep.subr.mxu0 %v729
        %1726 = vmatpush1.msra.mxu0 %v728
        %1727 = vmatprep.subr.mxu0 %v741
        %1728 = vmatpush1.msra.mxu0 %v740
        %1729 = vmatprep.subr.mxu0 %v753
        %1730 = vmatpush1.msra.mxu0 %v752
        %1731 = vmatprep.subr.mxu0 %v765
        %1732 = vmatpush1.msra.mxu0 %v764
        %1733 = vmatprep.subr.mxu0 %v777
        %1734 = vmatpush1.msra.mxu0 %v776
        %1735 = vmatprep.subr.mxu0 %v789
        %1736 = vmatpush1.msra.mxu0 %v788
        %1737 = vmatprep.subr.mxu0 %v801
        %1738 = vmatpush1.msra.mxu0 %v800
        %1739 = vmatprep.subr.mxu0 %v813
        %1740 = vmatpush1.msra.mxu0 %v812
        %1741 = vmatprep.subr.mxu0 %v825
        %1742 = vmatpush1.msra.mxu0 %v824
        %1743 = vmatprep.subr.mxu0 %v837
        %1744 = vmatpush1.msra.mxu0 %v836
        %1745 = vmatprep.subr.mxu0 %v849
        %1746 = vmatpush1.msra.mxu0 %v848
        %1747 = vmatprep.subr.mxu0 %v861
        %1748 = vmatpush1.msra.mxu0 %v860
        %1749 = vmatprep.subr.mxu0 %v873
        %1750 = vmatpush1.msra.mxu0 %v872
        %1751 = vmatprep.subr.mxu0 0.0
        %1752 = vmatpush1.msra.mxu0 0.0
        %1753 = vmatprep.subr.mxu0 0.0
        %1754 = vmatpush1.msra.mxu0 0.0
        %1755 = vmatprep.subr.mxu0 0.0
        %1756 = vmatpush1.msra.mxu0 0.0
        %1757 = vmatprep.subr.mxu0 0.0
        %1758 = vmatpush1.msra.mxu0 0.0
        %1759 = vmatprep.subr.mxu0 0.0
        %1760 = vmatpush1.msra.mxu0 0.0
        %1761 = vmatprep.subr.mxu0 0.0
        %1762 = vmatpush1.msra.mxu0 0.0
        %1763 = vmatprep.subr.mxu0 0.0
        %1764 = vmatpush1.msra.mxu0 0.0
        %1765 = vmatprep.subr.mxu0 0.0
        %1766 = vmatpush1.msra.mxu0 0.0
        %1767 = vmatprep.subr.mxu0 0.0
        %1768 = vmatpush1.msra.mxu0 0.0
        %1769 = vmatprep.subr.mxu0 0.0
        %1770 = vmatpush1.msra.mxu0 0.0
        %1771 = vmatprep.subr.mxu0 0.0
        %1772 = vmatpush1.msra.mxu0 0.0
        %1773 = vmatprep.subr.mxu0 0.0
        %1774 = vmatpush1.msra.mxu0 0.0
        %1775 = vmatprep.subr.mxu0 0.0
        %1776 = vmatpush1.msra.mxu0 0.0
        %1777 = vmatprep.subr.mxu0 0.0
        %1778 = vmatpush1.msra.mxu0 0.0
        %1779 = vmatprep.subr.mxu0 0.0
        %1780 = vmatpush1.msra.mxu0 0.0
        %1781 = vmatprep.subr.mxu0 0.0
        %1782 = vmatpush1.msra.mxu0 0.0
        %1783 = vmatprep.mubr.f32.mxu0 0.0
        %1784 = vmatmul.mubr.f32.gmra.mrb[0].mxu0 %v297
        %v1785 = vpop.f32.mrb[0].mxu0
        %v1786 = vadd.f32 %v1715, %v1785
        %v1787 = vpop.f32.mrb[0].mxu0
        %v1788 = vadd.f32 %v1717, %v1787
        %1789 = vdwg.mxu0
        %v1790 = vmax.f32 %v1076, 0.0
        %v1791 = vmax.f32 %v1078, 0.0
        %v1792 = vmax.f32 %v1218, 0.0
        %v1793 = vmax.f32 %v1220, 0.0
        %v1794 = vmax.f32 %v1360, 0.0
        %v1795 = vmax.f32 %v1362, 0.0
        %v1796 = vmax.f32 %v1502, 0.0
        %v1797 = vmax.f32 %v1504, 0.0
        %v1798 = vmax.f32 %v1644, 0.0
        %v1799 = vmax.f32 %v1646, 0.0
        %v1800 = vmax.f32 %v1786, 0.0
        %v1801 = vmax.f32 %v1788, 0.0
        %v1802 = vld [vmem:[#allocation8] sm:$0xff]
        %v1803 = vld [vmem:[#allocation8 + $0x8] sm:$0xff]
        %v1804 = vld [vmem:[#allocation8 + $0x10] sm:$0xff]
        %v1805 = vld [vmem:[#allocation8 + $0x18] sm:$0xff]
        %v1806 = vld [vmem:[#allocation8 + $0x20] sm:$0xff]
        %v1807 = vld [vmem:[#allocation8 + $0x28] sm:$0xff]
        %v1808 = vld [vmem:[#allocation8 + $0x30] sm:$0xff]
        %v1809 = vld [vmem:[#allocation8 + $0x38] sm:$0xff]
        %v1810 = vld [vmem:[#allocation8 + $0x40] sm:$0xff]
        %v1811 = vld [vmem:[#allocation8 + $0x48] sm:$0xff]
        %v1812 = vld [vmem:[#allocation8 + $0x50] sm:$0xff]
        %v1813 = vld [vmem:[#allocation8 + $0x58] sm:$0xff]
        %v1814 = vld [vmem:[#allocation8 + $0x60] sm:$0xff]
        %v1815 = vld [vmem:[#allocation8 + $0x68] sm:$0xff]
        %v1816 = vld [vmem:[#allocation8 + $0x70] sm:$0xff]
        %v1817 = vld [vmem:[#allocation8 + $0x78] sm:$0xff]
        %v1818 = vld [vmem:[#allocation8 + $0x80] sm:$0xff]
        %v1819 = vld [vmem:[#allocation8 + $0x88] sm:$0xff]
        %v1820 = vld [vmem:[#allocation8 + $0x90] sm:$0xff]
        %v1821 = vld [vmem:[#allocation8 + $0x98] sm:$0xff]
        %v1822 = vld [vmem:[#allocation8 + $0xa0] sm:$0xff]
        %v1823 = vld [vmem:[#allocation8 + $0xa8] sm:$0xff]
        %v1824 = vld [vmem:[#allocation8 + $0xb0] sm:$0xff]
        %v1825 = vld [vmem:[#allocation8 + $0xb8] sm:$0xff]
        %v1826 = vld [vmem:[#allocation8 + $0xc0] sm:$0xff]
        %v1827 = vld [vmem:[#allocation8 + $0xc8] sm:$0xff]
        %v1828 = vld [vmem:[#allocation8 + $0xd0] sm:$0xff]
        %v1829 = vld [vmem:[#allocation8 + $0xd8] sm:$0xff]
        %v1830 = vld [vmem:[#allocation8 + $0xe0] sm:$0xff]
        %v1831 = vld [vmem:[#allocation8 + $0xe8] sm:$0xff]
        %v1832 = vld [vmem:[#allocation8 + $0xf0] sm:$0xff]
        %v1833 = vld [vmem:[#allocation8 + $0xf8] sm:$0xff]
        %v1834 = vld [vmem:[#allocation8 + $0x100] sm:$0xff]
        %v1835 = vld [vmem:[#allocation8 + $0x108] sm:$0xff]
        %v1836 = vld [vmem:[#allocation8 + $0x110] sm:$0xff]
        %v1837 = vld [vmem:[#allocation8 + $0x118] sm:$0xff]
        %v1838 = vld [vmem:[#allocation8 + $0x120] sm:$0xff]
        %v1839 = vld [vmem:[#allocation8 + $0x128] sm:$0xff]
        %v1840 = vld [vmem:[#allocation8 + $0x130] sm:$0xff]
        %v1841 = vld [vmem:[#allocation8 + $0x138] sm:$0xff]
        %v1842 = vld [vmem:[#allocation8 + $0x140] sm:$0xff]
        %v1843 = vld [vmem:[#allocation8 + $0x148] sm:$0xff]
        %v1844 = vld [vmem:[#allocation8 + $0x150] sm:$0xff]
        %v1845 = vld [vmem:[#allocation8 + $0x158] sm:$0xff]
        %v1846 = vld [vmem:[#allocation8 + $0x160] sm:$0xff]
        %v1847 = vld [vmem:[#allocation8 + $0x168] sm:$0xff]
        %v1848 = vld [vmem:[#allocation8 + $0x170] sm:$0xff]
        %v1849 = vld [vmem:[#allocation8 + $0x178] sm:$0xff]
        %v1850 = vld [vmem:[#allocation8 + $0x180] sm:$0xff]
        %v1851 = vld [vmem:[#allocation8 + $0x188] sm:$0xff]
        %v1852 = vld [vmem:[#allocation8 + $0x190] sm:$0xff]
        %v1853 = vld [vmem:[#allocation8 + $0x198] sm:$0xff]
        %v1854 = vld [vmem:[#allocation8 + $0x1a0] sm:$0xff]
        %v1855 = vld [vmem:[#allocation8 + $0x1a8] sm:$0xff]
        %v1856 = vld [vmem:[#allocation8 + $0x1b0] sm:$0xff]
        %v1857 = vld [vmem:[#allocation8 + $0x1b8] sm:$0xff]
        %v1858 = vld [vmem:[#allocation8 + $0x1c0] sm:$0xff]
        %v1859 = vld [vmem:[#allocation8 + $0x1c8] sm:$0xff]
        %v1860 = vld [vmem:[#allocation8 + $0x1d0] sm:$0xff]
        %v1861 = vld [vmem:[#allocation8 + $0x1d8] sm:$0xff]
        %v1862 = vld [vmem:[#allocation8 + $0x1e0] sm:$0xff]
        %v1863 = vld [vmem:[#allocation8 + $0x1e8] sm:$0xff]
        %v1864 = vld [vmem:[#allocation8 + $0x1f0] sm:$0xff]
        %v1865 = vld [vmem:[#allocation8 + $0x1f8] sm:$0xff]
        %v1866 = vld [vmem:[#allocation8 + $0x200] sm:$0xff]
        %v1867 = vld [vmem:[#allocation8 + $0x208] sm:$0xff]
        %v1868 = vld [vmem:[#allocation8 + $0x210] sm:$0xff]
        %v1869 = vld [vmem:[#allocation8 + $0x218] sm:$0xff]
        %v1870 = vld [vmem:[#allocation8 + $0x220] sm:$0xff]
        %v1871 = vld [vmem:[#allocation8 + $0x228] sm:$0xff]
        %v1872 = vld [vmem:[#allocation8 + $0x230] sm:$0xff]
        %v1873 = vld [vmem:[#allocation8 + $0x238] sm:$0xff]
        %v1874 = vld [vmem:[#allocation8 + $0x240] sm:$0xff]
        %v1875 = vld [vmem:[#allocation8 + $0x248] sm:$0xff]
        %v1876 = vld [vmem:[#allocation8 + $0x250] sm:$0xff]
        %v1877 = vld [vmem:[#allocation8 + $0x258] sm:$0xff]
        %v1878 = vld [vmem:[#allocation8 + $0x260] sm:$0xff]
        %v1879 = vld [vmem:[#allocation8 + $0x268] sm:$0xff]
        %v1880 = vld [vmem:[#allocation8 + $0x270] sm:$0xff]
        %v1881 = vld [vmem:[#allocation8 + $0x278] sm:$0xff]
        %v1882 = vld [vmem:[#allocation8 + $0x280] sm:$0xff]
        %v1883 = vld [vmem:[#allocation8 + $0x288] sm:$0xff]
        %v1884 = vld [vmem:[#allocation8 + $0x290] sm:$0xff]
        %v1885 = vld [vmem:[#allocation8 + $0x298] sm:$0xff]
        %v1886 = vld [vmem:[#allocation8 + $0x2a0] sm:$0xff]
        %v1887 = vld [vmem:[#allocation8 + $0x2a8] sm:$0xff]
        %v1888 = vld [vmem:[#allocation8 + $0x2b0] sm:$0xff]
        %v1889 = vld [vmem:[#allocation8 + $0x2b8] sm:$0xff]
        %v1890 = vld [vmem:[#allocation8 + $0x2c0] sm:$0xff]
        %v1891 = vld [vmem:[#allocation8 + $0x2c8] sm:$0xff]
        %v1892 = vld [vmem:[#allocation8 + $0x2d0] sm:$0xff]
        %v1893 = vld [vmem:[#allocation8 + $0x2d8] sm:$0xff]
        %v1894 = vld [vmem:[#allocation8 + $0x2e0] sm:$0xff]
        %v1895 = vld [vmem:[#allocation8 + $0x2e8] sm:$0xff]
        %v1896 = vld [vmem:[#allocation8 + $0x2f0] sm:$0xff]
        %v1897 = vld [vmem:[#allocation8 + $0x2f8] sm:$0xff]
        %v1898 = vld [vmem:[#allocation8 + $0x300] sm:$0xff]
        %v1899 = vld [vmem:[#allocation8 + $0x308] sm:$0xff]
        %v1900 = vld [vmem:[#allocation8 + $0x310] sm:$0xff]
        %v1901 = vld [vmem:[#allocation8 + $0x318] sm:$0xff]
        %v1902 = vld [vmem:[#allocation8 + $0x320] sm:$0xff]
        %v1903 = vld [vmem:[#allocation8 + $0x328] sm:$0xff]
        %v1904 = vld [vmem:[#allocation8 + $0x330] sm:$0xff]
        %v1905 = vld [vmem:[#allocation8 + $0x338] sm:$0xff]
        %v1906 = vld [vmem:[#allocation8 + $0x340] sm:$0xff]
        %v1907 = vld [vmem:[#allocation8 + $0x348] sm:$0xff]
        %v1908 = vld [vmem:[#allocation8 + $0x350] sm:$0xff]
        %v1909 = vld [vmem:[#allocation8 + $0x358] sm:$0xff]
        %v1910 = vld [vmem:[#allocation8 + $0x360] sm:$0xff]
        %v1911 = vld [vmem:[#allocation8 + $0x368] sm:$0xff]
        %v1912 = vld [vmem:[#allocation8 + $0x370] sm:$0xff]
        %v1913 = vld [vmem:[#allocation8 + $0x378] sm:$0xff]
        %v1914 = vld [vmem:[#allocation8 + $0x380] sm:$0xff]
        %v1915 = vld [vmem:[#allocation8 + $0x388] sm:$0xff]
        %v1916 = vld [vmem:[#allocation8 + $0x390] sm:$0xff]
        %v1917 = vld [vmem:[#allocation8 + $0x398] sm:$0xff]
        %v1918 = vld [vmem:[#allocation8 + $0x3a0] sm:$0xff]
        %v1919 = vld [vmem:[#allocation8 + $0x3a8] sm:$0xff]
        %v1920 = vld [vmem:[#allocation8 + $0x3b0] sm:$0xff]
        %v1921 = vld [vmem:[#allocation8 + $0x3b8] sm:$0xff]
        %v1922 = vld [vmem:[#allocation8 + $0x3c0] sm:$0xff]
        %v1923 = vld [vmem:[#allocation8 + $0x3c8] sm:$0xff]
        %v1924 = vld [vmem:[#allocation8 + $0x3d0] sm:$0xff]
        %v1925 = vld [vmem:[#allocation8 + $0x3d8] sm:$0xff]
        %v1926 = vld [vmem:[#allocation8 + $0x3e0] sm:$0xff]
        %v1927 = vld [vmem:[#allocation8 + $0x3e8] sm:$0xff]
        %v1928 = vld [vmem:[#allocation8 + $0x3f0] sm:$0xff]
        %v1929 = vld [vmem:[#allocation8 + $0x3f8] sm:$0xff]
        %v1930 = vld [vmem:[#allocation8 + $0x400] sm:$0xff]
        %v1931 = vld [vmem:[#allocation8 + $0x408] sm:$0xff]
        %v1932 = vld [vmem:[#allocation8 + $0x410] sm:$0xff]
        %v1933 = vld [vmem:[#allocation8 + $0x418] sm:$0xff]
        %v1934 = vld [vmem:[#allocation8 + $0x420] sm:$0xff]
        %v1935 = vld [vmem:[#allocation8 + $0x428] sm:$0xff]
        %v1936 = vld [vmem:[#allocation8 + $0x430] sm:$0xff]
        %v1937 = vld [vmem:[#allocation8 + $0x438] sm:$0xff]
        %v1938 = vld [vmem:[#allocation8 + $0x440] sm:$0xff]
        %v1939 = vld [vmem:[#allocation8 + $0x448] sm:$0xff]
        %v1940 = vld [vmem:[#allocation8 + $0x450] sm:$0xff]
        %v1941 = vld [vmem:[#allocation8 + $0x458] sm:$0xff]
        %v1942 = vld [vmem:[#allocation8 + $0x460] sm:$0xff]
        %v1943 = vld [vmem:[#allocation8 + $0x468] sm:$0xff]
        %v1944 = vld [vmem:[#allocation8 + $0x470] sm:$0xff]
        %v1945 = vld [vmem:[#allocation8 + $0x478] sm:$0xff]
        %v1946 = vld [vmem:[#allocation8 + $0x480] sm:$0xff]
        %v1947 = vld [vmem:[#allocation8 + $0x488] sm:$0xff]
        %v1948 = vld [vmem:[#allocation8 + $0x490] sm:$0xff]
        %v1949 = vld [vmem:[#allocation8 + $0x498] sm:$0xff]
        %v1950 = vld [vmem:[#allocation8 + $0x4a0] sm:$0xff]
        %v1951 = vld [vmem:[#allocation8 + $0x4a8] sm:$0xff]
        %v1952 = vld [vmem:[#allocation8 + $0x4b0] sm:$0xff]
        %v1953 = vld [vmem:[#allocation8 + $0x4b8] sm:$0xff]
        %v1954 = vld [vmem:[#allocation8 + $0x4c0] sm:$0xff]
        %v1955 = vld [vmem:[#allocation8 + $0x4c8] sm:$0xff]
        %v1956 = vld [vmem:[#allocation8 + $0x4d0] sm:$0xff]
        %v1957 = vld [vmem:[#allocation8 + $0x4d8] sm:$0xff]
        %v1958 = vld [vmem:[#allocation8 + $0x4e0] sm:$0xff]
        %v1959 = vld [vmem:[#allocation8 + $0x4e8] sm:$0xff]
        %v1960 = vld [vmem:[#allocation8 + $0x4f0] sm:$0xff]
        %v1961 = vld [vmem:[#allocation8 + $0x4f8] sm:$0xff]
        %v1962 = vld [vmem:[#allocation8 + $0x500] sm:$0xff]
        %v1963 = vld [vmem:[#allocation8 + $0x508] sm:$0xff]
        %v1964 = vld [vmem:[#allocation8 + $0x510] sm:$0xff]
        %v1965 = vld [vmem:[#allocation8 + $0x518] sm:$0xff]
        %v1966 = vld [vmem:[#allocation8 + $0x520] sm:$0xff]
        %v1967 = vld [vmem:[#allocation8 + $0x528] sm:$0xff]
        %v1968 = vld [vmem:[#allocation8 + $0x530] sm:$0xff]
        %v1969 = vld [vmem:[#allocation8 + $0x538] sm:$0xff]
        %v1970 = vld [vmem:[#allocation8 + $0x540] sm:$0xff]
        %v1971 = vld [vmem:[#allocation8 + $0x548] sm:$0xff]
        %v1972 = vld [vmem:[#allocation8 + $0x550] sm:$0xff]
        %v1973 = vld [vmem:[#allocation8 + $0x558] sm:$0xff]
        %v1974 = vld [vmem:[#allocation8 + $0x560] sm:$0xff]
        %v1975 = vld [vmem:[#allocation8 + $0x568] sm:$0xff]
        %v1976 = vld [vmem:[#allocation8 + $0x570] sm:$0xff]
        %v1977 = vld [vmem:[#allocation8 + $0x578] sm:$0xff]
        %v1978 = vld [vmem:[#allocation8 + $0x580] sm:$0xff]
        %v1979 = vld [vmem:[#allocation8 + $0x588] sm:$0xff]
        %v1980 = vld [vmem:[#allocation8 + $0x590] sm:$0xff]
        %v1981 = vld [vmem:[#allocation8 + $0x598] sm:$0xff]
        %v1982 = vld [vmem:[#allocation8 + $0x5a0] sm:$0xff]
        %v1983 = vld [vmem:[#allocation8 + $0x5a8] sm:$0xff]
        %v1984 = vld [vmem:[#allocation8 + $0x5b0] sm:$0xff]
        %v1985 = vld [vmem:[#allocation8 + $0x5b8] sm:$0xff]
        %v1986 = vld [vmem:[#allocation8 + $0x5c0] sm:$0xff]
        %v1987 = vld [vmem:[#allocation8 + $0x5c8] sm:$0xff]
        %v1988 = vld [vmem:[#allocation8 + $0x5d0] sm:$0xff]
        %v1989 = vld [vmem:[#allocation8 + $0x5d8] sm:$0xff]
        %v1990 = vld [vmem:[#allocation8 + $0x5e0] sm:$0xff]
        %v1991 = vld [vmem:[#allocation8 + $0x5e8] sm:$0xff]
        %v1992 = vld [vmem:[#allocation8 + $0x5f0] sm:$0xff]
        %v1993 = vld [vmem:[#allocation8 + $0x5f8] sm:$0xff]
        %v1994 = vld [vmem:[#allocation8 + $0x600] sm:$0xff]
        %v1995 = vld [vmem:[#allocation8 + $0x608] sm:$0xff]
        %v1996 = vld [vmem:[#allocation8 + $0x610] sm:$0xff]
        %v1997 = vld [vmem:[#allocation8 + $0x618] sm:$0xff]
        %v1998 = vld [vmem:[#allocation8 + $0x620] sm:$0xff]
        %v1999 = vld [vmem:[#allocation8 + $0x628] sm:$0xff]
        %v2000 = vld [vmem:[#allocation8 + $0x630] sm:$0xff]
        %v2001 = vld [vmem:[#allocation8 + $0x638] sm:$0xff]
        %v2002 = vld [vmem:[#allocation8 + $0x640] sm:$0xff]
        %v2003 = vld [vmem:[#allocation8 + $0x648] sm:$0xff]
        %v2004 = vld [vmem:[#allocation8 + $0x650] sm:$0xff]
        %v2005 = vld [vmem:[#allocation8 + $0x658] sm:$0xff]
        %v2006 = vld [vmem:[#allocation8 + $0x660] sm:$0xff]
        %v2007 = vld [vmem:[#allocation8 + $0x668] sm:$0xff]
        %v2008 = vld [vmem:[#allocation8 + $0x670] sm:$0xff]
        %v2009 = vld [vmem:[#allocation8 + $0x678] sm:$0xff]
        %v2010 = vld [vmem:[#allocation8 + $0x680] sm:$0xff]
        %v2011 = vld [vmem:[#allocation8 + $0x688] sm:$0xff]
        %v2012 = vld [vmem:[#allocation8 + $0x690] sm:$0xff]
        %v2013 = vld [vmem:[#allocation8 + $0x698] sm:$0xff]
        %v2014 = vld [vmem:[#allocation8 + $0x6a0] sm:$0xff]
        %v2015 = vld [vmem:[#allocation8 + $0x6a8] sm:$0xff]
        %v2016 = vld [vmem:[#allocation8 + $0x6b0] sm:$0xff]
        %v2017 = vld [vmem:[#allocation8 + $0x6b8] sm:$0xff]
        %v2018 = vld [vmem:[#allocation8 + $0x6c0] sm:$0xff]
        %v2019 = vld [vmem:[#allocation8 + $0x6c8] sm:$0xff]
        %v2020 = vld [vmem:[#allocation8 + $0x6d0] sm:$0xff]
        %v2021 = vld [vmem:[#allocation8 + $0x6d8] sm:$0xff]
        %v2022 = vld [vmem:[#allocation8 + $0x6e0] sm:$0xff]
        %v2023 = vld [vmem:[#allocation8 + $0x6e8] sm:$0xff]
        %v2024 = vld [vmem:[#allocation8 + $0x6f0] sm:$0xff]
        %v2025 = vld [vmem:[#allocation8 + $0x6f8] sm:$0xff]
        %v2026 = vld [vmem:[#allocation8 + $0x700] sm:$0xff]
        %v2027 = vld [vmem:[#allocation8 + $0x708] sm:$0xff]
        %v2028 = vld [vmem:[#allocation8 + $0x710] sm:$0xff]
        %v2029 = vld [vmem:[#allocation8 + $0x718] sm:$0xff]
        %v2030 = vld [vmem:[#allocation8 + $0x720] sm:$0xff]
        %v2031 = vld [vmem:[#allocation8 + $0x728] sm:$0xff]
        %v2032 = vld [vmem:[#allocation8 + $0x730] sm:$0xff]
        %v2033 = vld [vmem:[#allocation8 + $0x738] sm:$0xff]
        %v2034 = vld [vmem:[#allocation8 + $0x740] sm:$0xff]
        %v2035 = vld [vmem:[#allocation8 + $0x748] sm:$0xff]
        %v2036 = vld [vmem:[#allocation8 + $0x750] sm:$0xff]
        %v2037 = vld [vmem:[#allocation8 + $0x758] sm:$0xff]
        %v2038 = vld [vmem:[#allocation8 + $0x760] sm:$0xff]
        %v2039 = vld [vmem:[#allocation8 + $0x768] sm:$0xff]
        %v2040 = vld [vmem:[#allocation8 + $0x770] sm:$0xff]
        %v2041 = vld [vmem:[#allocation8 + $0x778] sm:$0xff]
        %v2042 = vld [vmem:[#allocation8 + $0x780] sm:$0xff]
        %v2043 = vld [vmem:[#allocation8 + $0x788] sm:$0xff]
        %v2044 = vld [vmem:[#allocation8 + $0x790] sm:$0xff]
        %v2045 = vld [vmem:[#allocation8 + $0x798] sm:$0xff]
        %v2046 = vld [vmem:[#allocation8 + $0x7a0] sm:$0xff]
        %v2047 = vld [vmem:[#allocation8 + $0x7a8] sm:$0xff]
        %v2048 = vld [vmem:[#allocation8 + $0x7b0] sm:$0xff]
        %v2049 = vld [vmem:[#allocation8 + $0x7b8] sm:$0xff]
        %v2050 = vld [vmem:[#allocation8 + $0x7c0] sm:$0xff]
        %v2051 = vld [vmem:[#allocation8 + $0x7c8] sm:$0xff]
        %v2052 = vld [vmem:[#allocation8 + $0x7d0] sm:$0xff]
        %v2053 = vld [vmem:[#allocation8 + $0x7d8] sm:$0xff]
        %v2054 = vld [vmem:[#allocation8 + $0x7e0] sm:$0xff]
        %v2055 = vld [vmem:[#allocation8 + $0x7e8] sm:$0xff]
        %v2056 = vld [vmem:[#allocation8 + $0x7f0] sm:$0xff]
        %v2057 = vld [vmem:[#allocation8 + $0x7f8] sm:$0xff]
        %v2058 = vld [vmem:[#allocation8 + $0x800] sm:$0xff]
        %v2059 = vld [vmem:[#allocation8 + $0x808] sm:$0xff]
        %v2060 = vld [vmem:[#allocation8 + $0x810] sm:$0xff]
        %v2061 = vld [vmem:[#allocation8 + $0x818] sm:$0xff]
        %v2062 = vld [vmem:[#allocation8 + $0x820] sm:$0xff]
        %v2063 = vld [vmem:[#allocation8 + $0x828] sm:$0xff]
        %v2064 = vld [vmem:[#allocation8 + $0x830] sm:$0xff]
        %v2065 = vld [vmem:[#allocation8 + $0x838] sm:$0xff]
        %v2066 = vld [vmem:[#allocation8 + $0x840] sm:$0xff]
        %v2067 = vld [vmem:[#allocation8 + $0x848] sm:$0xff]
        %v2068 = vld [vmem:[#allocation8 + $0x850] sm:$0xff]
        %v2069 = vld [vmem:[#allocation8 + $0x858] sm:$0xff]
        %v2070 = vld [vmem:[#allocation8 + $0x860] sm:$0xff]
        %v2071 = vld [vmem:[#allocation8 + $0x868] sm:$0xff]
        %v2072 = vld [vmem:[#allocation8 + $0x870] sm:$0xff]
        %v2073 = vld [vmem:[#allocation8 + $0x878] sm:$0xff]
        %v2074 = vld [vmem:[#allocation8 + $0x880] sm:$0xff]
        %v2075 = vld [vmem:[#allocation8 + $0x888] sm:$0xff]
        %v2076 = vld [vmem:[#allocation8 + $0x890] sm:$0xff]
        %v2077 = vld [vmem:[#allocation8 + $0x898] sm:$0xff]
        %v2078 = vld [vmem:[#allocation8 + $0x8a0] sm:$0xff]
        %v2079 = vld [vmem:[#allocation8 + $0x8a8] sm:$0xff]
        %v2080 = vld [vmem:[#allocation8 + $0x8b0] sm:$0xff]
        %v2081 = vld [vmem:[#allocation8 + $0x8b8] sm:$0xff]
        %v2082 = vld [vmem:[#allocation8 + $0x8c0] sm:$0xff]
        %v2083 = vld [vmem:[#allocation8 + $0x8c8] sm:$0xff]
        %v2084 = vld [vmem:[#allocation8 + $0x8d0] sm:$0xff]
        %v2085 = vld [vmem:[#allocation8 + $0x8d8] sm:$0xff]
        %v2086 = vld [vmem:[#allocation8 + $0x8e0] sm:$0xff]
        %v2087 = vld [vmem:[#allocation8 + $0x8e8] sm:$0xff]
        %v2088 = vld [vmem:[#allocation8 + $0x8f0] sm:$0xff]
        %v2089 = vld [vmem:[#allocation8 + $0x8f8] sm:$0xff]
        %v2090 = vld [vmem:[#allocation8 + $0x900] sm:$0xff]
        %v2091 = vld [vmem:[#allocation8 + $0x908] sm:$0xff]
        %v2092 = vld [vmem:[#allocation8 + $0x910] sm:$0xff]
        %v2093 = vld [vmem:[#allocation8 + $0x918] sm:$0xff]
        %v2094 = vld [vmem:[#allocation8 + $0x920] sm:$0xff]
        %v2095 = vld [vmem:[#allocation8 + $0x928] sm:$0xff]
        %v2096 = vld [vmem:[#allocation8 + $0x930] sm:$0xff]
        %v2097 = vld [vmem:[#allocation8 + $0x938] sm:$0xff]
        %v2098 = vld [vmem:[#allocation8 + $0x940] sm:$0xff]
        %v2099 = vld [vmem:[#allocation8 + $0x948] sm:$0xff]
        %v2100 = vld [vmem:[#allocation8 + $0x950] sm:$0xff]
        %v2101 = vld [vmem:[#allocation8 + $0x958] sm:$0xff]
        %v2102 = vld [vmem:[#allocation8 + $0x960] sm:$0xff]
        %v2103 = vld [vmem:[#allocation8 + $0x968] sm:$0xff]
        %v2104 = vld [vmem:[#allocation8 + $0x970] sm:$0xff]
        %v2105 = vld [vmem:[#allocation8 + $0x978] sm:$0xff]
        %v2106 = vld [vmem:[#allocation8 + $0x980] sm:$0xff]
        %v2107 = vld [vmem:[#allocation8 + $0x988] sm:$0xff]
        %v2108 = vld [vmem:[#allocation8 + $0x990] sm:$0xff]
        %v2109 = vld [vmem:[#allocation8 + $0x998] sm:$0xff]
        %v2110 = vld [vmem:[#allocation8 + $0x9a0] sm:$0xff]
        %v2111 = vld [vmem:[#allocation8 + $0x9a8] sm:$0xff]
        %v2112 = vld [vmem:[#allocation8 + $0x9b0] sm:$0xff]
        %v2113 = vld [vmem:[#allocation8 + $0x9b8] sm:$0xff]
        %v2114 = vld [vmem:[#allocation8 + $0x9c0] sm:$0xff]
        %v2115 = vld [vmem:[#allocation8 + $0x9c8] sm:$0xff]
        %v2116 = vld [vmem:[#allocation8 + $0x9d0] sm:$0xff]
        %v2117 = vld [vmem:[#allocation8 + $0x9d8] sm:$0xff]
        %v2118 = vld [vmem:[#allocation8 + $0x9e0] sm:$0xff]
        %v2119 = vld [vmem:[#allocation8 + $0x9e8] sm:$0xff]
        %v2120 = vld [vmem:[#allocation8 + $0x9f0] sm:$0xff]
        %v2121 = vld [vmem:[#allocation8 + $0x9f8] sm:$0xff]
        %v2122 = vld [vmem:[#allocation8 + $0xa00] sm:$0xff]
        %v2123 = vld [vmem:[#allocation8 + $0xa08] sm:$0xff]
        %v2124 = vld [vmem:[#allocation8 + $0xa10] sm:$0xff]
        %v2125 = vld [vmem:[#allocation8 + $0xa18] sm:$0xff]
        %v2126 = vld [vmem:[#allocation8 + $0xa20] sm:$0xff]
        %v2127 = vld [vmem:[#allocation8 + $0xa28] sm:$0xff]
        %v2128 = vld [vmem:[#allocation8 + $0xa30] sm:$0xff]
        %v2129 = vld [vmem:[#allocation8 + $0xa38] sm:$0xff]
        %v2130 = vld [vmem:[#allocation8 + $0xa40] sm:$0xff]
        %v2131 = vld [vmem:[#allocation8 + $0xa48] sm:$0xff]
        %v2132 = vld [vmem:[#allocation8 + $0xa50] sm:$0xff]
        %v2133 = vld [vmem:[#allocation8 + $0xa58] sm:$0xff]
        %v2134 = vld [vmem:[#allocation8 + $0xa60] sm:$0xff]
        %v2135 = vld [vmem:[#allocation8 + $0xa68] sm:$0xff]
        %v2136 = vld [vmem:[#allocation8 + $0xa70] sm:$0xff]
        %v2137 = vld [vmem:[#allocation8 + $0xa78] sm:$0xff]
        %v2138 = vld [vmem:[#allocation8 + $0xa80] sm:$0xff]
        %v2139 = vld [vmem:[#allocation8 + $0xa88] sm:$0xff]
        %v2140 = vld [vmem:[#allocation8 + $0xa90] sm:$0xff]
        %v2141 = vld [vmem:[#allocation8 + $0xa98] sm:$0xff]
        %v2142 = vld [vmem:[#allocation8 + $0xaa0] sm:$0xff]
        %v2143 = vld [vmem:[#allocation8 + $0xaa8] sm:$0xff]
        %v2144 = vld [vmem:[#allocation8 + $0xab0] sm:$0xff]
        %v2145 = vld [vmem:[#allocation8 + $0xab8] sm:$0xff]
        %v2146 = vld [vmem:[#allocation8 + $0xac0] sm:$0xff]
        %v2147 = vld [vmem:[#allocation8 + $0xac8] sm:$0xff]
        %v2148 = vld [vmem:[#allocation8 + $0xad0] sm:$0xff]
        %v2149 = vld [vmem:[#allocation8 + $0xad8] sm:$0xff]
        %v2150 = vld [vmem:[#allocation8 + $0xae0] sm:$0xff]
        %v2151 = vld [vmem:[#allocation8 + $0xae8] sm:$0xff]
        %v2152 = vld [vmem:[#allocation8 + $0xaf0] sm:$0xff]
        %v2153 = vld [vmem:[#allocation8 + $0xaf8] sm:$0xff]
        %v2154 = vld [vmem:[#allocation8 + $0xb00] sm:$0xff]
        %v2155 = vld [vmem:[#allocation8 + $0xb08] sm:$0xff]
        %v2156 = vld [vmem:[#allocation8 + $0xb10] sm:$0xff]
        %v2157 = vld [vmem:[#allocation8 + $0xb18] sm:$0xff]
        %v2158 = vld [vmem:[#allocation8 + $0xb20] sm:$0xff]
        %v2159 = vld [vmem:[#allocation8 + $0xb28] sm:$0xff]
        %v2160 = vld [vmem:[#allocation8 + $0xb30] sm:$0xff]
        %v2161 = vld [vmem:[#allocation8 + $0xb38] sm:$0xff]
        %v2162 = vld [vmem:[#allocation8 + $0xb40] sm:$0xff]
        %v2163 = vld [vmem:[#allocation8 + $0xb48] sm:$0xff]
        %v2164 = vld [vmem:[#allocation8 + $0xb50] sm:$0xff]
        %v2165 = vld [vmem:[#allocation8 + $0xb58] sm:$0xff]
        %v2166 = vld [vmem:[#allocation8 + $0xb60] sm:$0xff]
        %v2167 = vld [vmem:[#allocation8 + $0xb68] sm:$0xff]
        %v2168 = vld [vmem:[#allocation8 + $0xb70] sm:$0xff]
        %v2169 = vld [vmem:[#allocation8 + $0xb78] sm:$0xff]
        %v2170 = vld [vmem:[#allocation8 + $0xb80] sm:$0xff]
        %v2171 = vld [vmem:[#allocation8 + $0xb88] sm:$0xff]
        %v2172 = vld [vmem:[#allocation8 + $0xb90] sm:$0xff]
        %v2173 = vld [vmem:[#allocation8 + $0xb98] sm:$0xff]
        %v2174 = vld [vmem:[#allocation8 + $0xba0] sm:$0xff]
        %v2175 = vld [vmem:[#allocation8 + $0xba8] sm:$0xff]
        %v2176 = vld [vmem:[#allocation8 + $0xbb0] sm:$0xff]
        %v2177 = vld [vmem:[#allocation8 + $0xbb8] sm:$0xff]
        %v2178 = vld [vmem:[#allocation8 + $0xbc0] sm:$0xff]
        %v2179 = vld [vmem:[#allocation8 + $0xbc8] sm:$0xff]
        %v2180 = vld [vmem:[#allocation8 + $0xbd0] sm:$0xff]
        %v2181 = vld [vmem:[#allocation8 + $0xbd8] sm:$0xff]
        %v2182 = vld [vmem:[#allocation8 + $0xbe0] sm:$0xff]
        %v2183 = vld [vmem:[#allocation8 + $0xbe8] sm:$0xff]
        %v2184 = vld [vmem:[#allocation8 + $0xbf0] sm:$0xff]
        %v2185 = vld [vmem:[#allocation8 + $0xbf8] sm:$0xff]
        %v2186 = vld [vmem:[#allocation8 + $0xc00] sm:$0xff]
        %v2187 = vld [vmem:[#allocation8 + $0xc08] sm:$0xff]
        %v2188 = vld [vmem:[#allocation8 + $0xc10] sm:$0xff]
        %v2189 = vld [vmem:[#allocation8 + $0xc18] sm:$0xff]
        %v2190 = vld [vmem:[#allocation8 + $0xc20] sm:$0xff]
        %v2191 = vld [vmem:[#allocation8 + $0xc28] sm:$0xff]
        %v2192 = vld [vmem:[#allocation8 + $0xc30] sm:$0xff]
        %v2193 = vld [vmem:[#allocation8 + $0xc38] sm:$0xff]
        %v2194 = vld [vmem:[#allocation8 + $0xc40] sm:$0xff]
        %v2195 = vld [vmem:[#allocation8 + $0xc48] sm:$0xff]
        %v2196 = vld [vmem:[#allocation8 + $0xc50] sm:$0xff]
        %v2197 = vld [vmem:[#allocation8 + $0xc58] sm:$0xff]
        %v2198 = vld [vmem:[#allocation8 + $0xc60] sm:$0xff]
        %v2199 = vld [vmem:[#allocation8 + $0xc68] sm:$0xff]
        %v2200 = vld [vmem:[#allocation8 + $0xc70] sm:$0xff]
        %v2201 = vld [vmem:[#allocation8 + $0xc78] sm:$0xff]
        %v2202 = vld [vmem:[#allocation8 + $0xc80] sm:$0xff]
        %v2203 = vld [vmem:[#allocation8 + $0xc88] sm:$0xff]
        %v2204 = vld [vmem:[#allocation8 + $0xc90] sm:$0xff]
        %v2205 = vld [vmem:[#allocation8 + $0xc98] sm:$0xff]
        %v2206 = vld [vmem:[#allocation8 + $0xca0] sm:$0xff]
        %v2207 = vld [vmem:[#allocation8 + $0xca8] sm:$0xff]
        %v2208 = vld [vmem:[#allocation8 + $0xcb0] sm:$0xff]
        %v2209 = vld [vmem:[#allocation8 + $0xcb8] sm:$0xff]
        %v2210 = vld [vmem:[#allocation8 + $0xcc0] sm:$0xff]
        %v2211 = vld [vmem:[#allocation8 + $0xcc8] sm:$0xff]
        %v2212 = vld [vmem:[#allocation8 + $0xcd0] sm:$0xff]
        %v2213 = vld [vmem:[#allocation8 + $0xcd8] sm:$0xff]
        %v2214 = vld [vmem:[#allocation8 + $0xce0] sm:$0xff]
        %v2215 = vld [vmem:[#allocation8 + $0xce8] sm:$0xff]
        %v2216 = vld [vmem:[#allocation8 + $0xcf0] sm:$0xff]
        %v2217 = vld [vmem:[#allocation8 + $0xcf8] sm:$0xff]
        %v2218 = vld [vmem:[#allocation8 + $0xd00] sm:$0xff]
        %v2219 = vld [vmem:[#allocation8 + $0xd08] sm:$0xff]
        %v2220 = vld [vmem:[#allocation8 + $0xd10] sm:$0xff]
        %v2221 = vld [vmem:[#allocation8 + $0xd18] sm:$0xff]
        %v2222 = vld [vmem:[#allocation8 + $0xd20] sm:$0xff]
        %v2223 = vld [vmem:[#allocation8 + $0xd28] sm:$0xff]
        %v2224 = vld [vmem:[#allocation8 + $0xd30] sm:$0xff]
        %v2225 = vld [vmem:[#allocation8 + $0xd38] sm:$0xff]
        %v2226 = vld [vmem:[#allocation8 + $0xd40] sm:$0xff]
        %v2227 = vld [vmem:[#allocation8 + $0xd48] sm:$0xff]
        %v2228 = vld [vmem:[#allocation8 + $0xd50] sm:$0xff]
        %v2229 = vld [vmem:[#allocation8 + $0xd58] sm:$0xff]
        %v2230 = vld [vmem:[#allocation8 + $0xd60] sm:$0xff]
        %v2231 = vld [vmem:[#allocation8 + $0xd68] sm:$0xff]
        %v2232 = vld [vmem:[#allocation8 + $0xd70] sm:$0xff]
        %v2233 = vld [vmem:[#allocation8 + $0xd78] sm:$0xff]
        %v2234 = vld [vmem:[#allocation8 + $0xd80] sm:$0xff]
        %v2235 = vld [vmem:[#allocation8 + $0xd88] sm:$0xff]
        %v2236 = vld [vmem:[#allocation8 + $0xd90] sm:$0xff]
        %v2237 = vld [vmem:[#allocation8 + $0xd98] sm:$0xff]
        %v2238 = vld [vmem:[#allocation8 + $0xda0] sm:$0xff]
        %v2239 = vld [vmem:[#allocation8 + $0xda8] sm:$0xff]
        %v2240 = vld [vmem:[#allocation8 + $0xdb0] sm:$0xff]
        %v2241 = vld [vmem:[#allocation8 + $0xdb8] sm:$0xff]
        %v2242 = vld [vmem:[#allocation8 + $0xdc0] sm:$0xff]
        %v2243 = vld [vmem:[#allocation8 + $0xdc8] sm:$0xff]
        %v2244 = vld [vmem:[#allocation8 + $0xdd0] sm:$0xff]
        %v2245 = vld [vmem:[#allocation8 + $0xdd8] sm:$0xff]
        %v2246 = vld [vmem:[#allocation8 + $0xde0] sm:$0xff]
        %v2247 = vld [vmem:[#allocation8 + $0xde8] sm:$0xff]
        %v2248 = vld [vmem:[#allocation8 + $0xdf0] sm:$0xff]
        %v2249 = vld [vmem:[#allocation8 + $0xdf8] sm:$0xff]
        %v2250 = vld [vmem:[#allocation8 + $0xe00] sm:$0xff]
        %v2251 = vld [vmem:[#allocation8 + $0xe08] sm:$0xff]
        %v2252 = vld [vmem:[#allocation8 + $0xe10] sm:$0xff]
        %v2253 = vld [vmem:[#allocation8 + $0xe18] sm:$0xff]
        %v2254 = vld [vmem:[#allocation8 + $0xe20] sm:$0xff]
        %v2255 = vld [vmem:[#allocation8 + $0xe28] sm:$0xff]
        %v2256 = vld [vmem:[#allocation8 + $0xe30] sm:$0xff]
        %v2257 = vld [vmem:[#allocation8 + $0xe38] sm:$0xff]
        %v2258 = vld [vmem:[#allocation8 + $0xe40] sm:$0xff]
        %v2259 = vld [vmem:[#allocation8 + $0xe48] sm:$0xff]
        %v2260 = vld [vmem:[#allocation8 + $0xe50] sm:$0xff]
        %v2261 = vld [vmem:[#allocation8 + $0xe58] sm:$0xff]
        %v2262 = vld [vmem:[#allocation8 + $0xe60] sm:$0xff]
        %v2263 = vld [vmem:[#allocation8 + $0xe68] sm:$0xff]
        %v2264 = vld [vmem:[#allocation8 + $0xe70] sm:$0xff]
        %v2265 = vld [vmem:[#allocation8 + $0xe78] sm:$0xff]
        %v2266 = vld [vmem:[#allocation8 + $0xe80] sm:$0xff]
        %v2267 = vld [vmem:[#allocation8 + $0xe88] sm:$0xff]
        %v2268 = vld [vmem:[#allocation8 + $0xe90] sm:$0xff]
        %v2269 = vld [vmem:[#allocation8 + $0xe98] sm:$0xff]
        %v2270 = vld [vmem:[#allocation8 + $0xea0] sm:$0xff]
        %v2271 = vld [vmem:[#allocation8 + $0xea8] sm:$0xff]
        %v2272 = vld [vmem:[#allocation8 + $0xeb0] sm:$0xff]
        %v2273 = vld [vmem:[#allocation8 + $0xeb8] sm:$0xff]
        %v2274 = vld [vmem:[#allocation8 + $0xec0] sm:$0xff]
        %v2275 = vld [vmem:[#allocation8 + $0xec8] sm:$0xff]
        %v2276 = vld [vmem:[#allocation8 + $0xed0] sm:$0xff]
        %v2277 = vld [vmem:[#allocation8 + $0xed8] sm:$0xff]
        %v2278 = vld [vmem:[#allocation8 + $0xee0] sm:$0xff]
        %v2279 = vld [vmem:[#allocation8 + $0xee8] sm:$0xff]
        %v2280 = vld [vmem:[#allocation8 + $0xef0] sm:$0xff]
        %v2281 = vld [vmem:[#allocation8 + $0xef8] sm:$0xff]
        %v2282 = vld [vmem:[#allocation8 + $0xf00] sm:$0xff]
        %v2283 = vld [vmem:[#allocation8 + $0xf08] sm:$0xff]
        %v2284 = vld [vmem:[#allocation8 + $0xf10] sm:$0xff]
        %v2285 = vld [vmem:[#allocation8 + $0xf18] sm:$0xff]
        %v2286 = vld [vmem:[#allocation8 + $0xf20] sm:$0xff]
        %v2287 = vld [vmem:[#allocation8 + $0xf28] sm:$0xff]
        %v2288 = vld [vmem:[#allocation8 + $0xf30] sm:$0xff]
        %v2289 = vld [vmem:[#allocation8 + $0xf38] sm:$0xff]
        %v2290 = vld [vmem:[#allocation8 + $0xf40] sm:$0xff]
        %v2291 = vld [vmem:[#allocation8 + $0xf48] sm:$0xff]
        %v2292 = vld [vmem:[#allocation8 + $0xf50] sm:$0xff]
        %v2293 = vld [vmem:[#allocation8 + $0xf58] sm:$0xff]
        %v2294 = vld [vmem:[#allocation8 + $0xf60] sm:$0xff]
        %v2295 = vld [vmem:[#allocation8 + $0xf68] sm:$0xff]
        %v2296 = vld [vmem:[#allocation8 + $0xf70] sm:$0xff]
        %v2297 = vld [vmem:[#allocation8 + $0xf78] sm:$0xff]
        %v2298 = vld [vmem:[#allocation8 + $0xf80] sm:$0xff]
        %v2299 = vld [vmem:[#allocation8 + $0xf88] sm:$0xff]
        %v2300 = vld [vmem:[#allocation8 + $0xf90] sm:$0xff]
        %v2301 = vld [vmem:[#allocation8 + $0xf98] sm:$0xff]
        %v2302 = vld [vmem:[#allocation8 + $0xfa0] sm:$0xff]
        %v2303 = vld [vmem:[#allocation8 + $0xfa8] sm:$0xff]
        %v2304 = vld [vmem:[#allocation8 + $0xfb0] sm:$0xff]
        %v2305 = vld [vmem:[#allocation8 + $0xfb8] sm:$0xff]
        %v2306 = vld [vmem:[#allocation8 + $0xfc0] sm:$0xff]
        %v2307 = vld [vmem:[#allocation8 + $0xfc8] sm:$0xff]
        %v2308 = vld [vmem:[#allocation8 + $0xfd0] sm:$0xff]
        %v2309 = vld [vmem:[#allocation8 + $0xfd8] sm:$0xff]
        %v2310 = vld [vmem:[#allocation8 + $0xfe0] sm:$0xff]
        %v2311 = vld [vmem:[#allocation8 + $0xfe8] sm:$0xff]
        %v2312 = vld [vmem:[#allocation8 + $0xff0] sm:$0xff]
        %v2313 = vld [vmem:[#allocation8 + $0xff8] sm:$0xff]
        %v2314 = vld [vmem:[#allocation8 + $0x1000] sm:$0xff]
        %v2315 = vld [vmem:[#allocation8 + $0x1008] sm:$0xff]
        %v2316 = vld [vmem:[#allocation8 + $0x1010] sm:$0xff]
        %v2317 = vld [vmem:[#allocation8 + $0x1018] sm:$0xff]
        %v2318 = vld [vmem:[#allocation8 + $0x1020] sm:$0xff]
        %v2319 = vld [vmem:[#allocation8 + $0x1028] sm:$0xff]
        %v2320 = vld [vmem:[#allocation8 + $0x1030] sm:$0xff]
        %v2321 = vld [vmem:[#allocation8 + $0x1038] sm:$0xff]
        %v2322 = vld [vmem:[#allocation8 + $0x1040] sm:$0xff]
        %v2323 = vld [vmem:[#allocation8 + $0x1048] sm:$0xff]
        %v2324 = vld [vmem:[#allocation8 + $0x1050] sm:$0xff]
        %v2325 = vld [vmem:[#allocation8 + $0x1058] sm:$0xff]
        %v2326 = vld [vmem:[#allocation8 + $0x1060] sm:$0xff]
        %v2327 = vld [vmem:[#allocation8 + $0x1068] sm:$0xff]
        %v2328 = vld [vmem:[#allocation8 + $0x1070] sm:$0xff]
        %v2329 = vld [vmem:[#allocation8 + $0x1078] sm:$0xff]
        %v2330 = vld [vmem:[#allocation8 + $0x1080] sm:$0xff]
        %v2331 = vld [vmem:[#allocation8 + $0x1088] sm:$0xff]
        %v2332 = vld [vmem:[#allocation8 + $0x1090] sm:$0xff]
        %v2333 = vld [vmem:[#allocation8 + $0x1098] sm:$0xff]
        %v2334 = vld [vmem:[#allocation8 + $0x10a0] sm:$0xff]
        %v2335 = vld [vmem:[#allocation8 + $0x10a8] sm:$0xff]
        %v2336 = vld [vmem:[#allocation8 + $0x10b0] sm:$0xff]
        %v2337 = vld [vmem:[#allocation8 + $0x10b8] sm:$0xff]
        %v2338 = vld [vmem:[#allocation8 + $0x10c0] sm:$0xff]
        %v2339 = vld [vmem:[#allocation8 + $0x10c8] sm:$0xff]
        %v2340 = vld [vmem:[#allocation8 + $0x10d0] sm:$0xff]
        %v2341 = vld [vmem:[#allocation8 + $0x10d8] sm:$0xff]
        %v2342 = vld [vmem:[#allocation8 + $0x10e0] sm:$0xff]
        %v2343 = vld [vmem:[#allocation8 + $0x10e8] sm:$0xff]
        %v2344 = vld [vmem:[#allocation8 + $0x10f0] sm:$0xff]
        %v2345 = vld [vmem:[#allocation8 + $0x10f8] sm:$0xff]
        %v2346 = vld [vmem:[#allocation8 + $0x1100] sm:$0xff]
        %v2347 = vld [vmem:[#allocation8 + $0x1108] sm:$0xff]
        %v2348 = vld [vmem:[#allocation8 + $0x1110] sm:$0xff]
        %v2349 = vld [vmem:[#allocation8 + $0x1118] sm:$0xff]
        %v2350 = vld [vmem:[#allocation8 + $0x1120] sm:$0xff]
        %v2351 = vld [vmem:[#allocation8 + $0x1128] sm:$0xff]
        %v2352 = vld [vmem:[#allocation8 + $0x1130] sm:$0xff]
        %v2353 = vld [vmem:[#allocation8 + $0x1138] sm:$0xff]
        %v2354 = vld [vmem:[#allocation8 + $0x1140] sm:$0xff]
        %v2355 = vld [vmem:[#allocation8 + $0x1148] sm:$0xff]
        %v2356 = vld [vmem:[#allocation8 + $0x1150] sm:$0xff]
        %v2357 = vld [vmem:[#allocation8 + $0x1158] sm:$0xff]
        %v2358 = vld [vmem:[#allocation8 + $0x1160] sm:$0xff]
        %v2359 = vld [vmem:[#allocation8 + $0x1168] sm:$0xff]
        %v2360 = vld [vmem:[#allocation8 + $0x1170] sm:$0xff]
        %v2361 = vld [vmem:[#allocation8 + $0x1178] sm:$0xff]
        %v2362 = vld [vmem:[#allocation8 + $0x1180] sm:$0xff]
        %v2363 = vld [vmem:[#allocation8 + $0x1188] sm:$0xff]
        %v2364 = vld [vmem:[#allocation8 + $0x1190] sm:$0xff]
        %v2365 = vld [vmem:[#allocation8 + $0x1198] sm:$0xff]
        %v2366 = vld [vmem:[#allocation8 + $0x11a0] sm:$0xff]
        %v2367 = vld [vmem:[#allocation8 + $0x11a8] sm:$0xff]
        %v2368 = vld [vmem:[#allocation8 + $0x11b0] sm:$0xff]
        %v2369 = vld [vmem:[#allocation8 + $0x11b8] sm:$0xff]
        %v2370 = vld [vmem:[#allocation8 + $0x11c0] sm:$0xff]
        %v2371 = vld [vmem:[#allocation8 + $0x11c8] sm:$0xff]
        %v2372 = vld [vmem:[#allocation8 + $0x11d0] sm:$0xff]
        %v2373 = vld [vmem:[#allocation8 + $0x11d8] sm:$0xff]
        %v2374 = vld [vmem:[#allocation8 + $0x11e0] sm:$0xff]
        %v2375 = vld [vmem:[#allocation8 + $0x11e8] sm:$0xff]
        %v2376 = vld [vmem:[#allocation8 + $0x11f0] sm:$0xff]
        %v2377 = vld [vmem:[#allocation8 + $0x11f8] sm:$0xff]
        %v2378 = vld [vmem:[#allocation10] sm:$0x7]
        %v2380 = vlaneseq
        %v2381 = vshrl.u32 %v2380, 7
        %v2382 = vsub.s32 0, %v2381
        %v2383 = vrot.slane %v2378, %v2382
        %v2384 = vlaneseq
        %v2385 = vshrl.u32 %v2384, 7
        %v2386 = vsub.s32 1, %v2385
        %v2387 = vrot.slane %v2378, %v2386
        %v2388 = vlaneseq
        %v2389 = vshrl.u32 %v2388, 7
        %v2390 = vsub.s32 2, %v2389
        %v2391 = vrot.slane %v2378, %v2390
        %2395 = vmatprep.subr.mxu0 %v1803
        %2396 = vmatpush1.msra.mxu0 %v1802
        %2397 = vmatprep.subr.mxu0 %v1806
        %2398 = vmatpush1.msra.mxu0 %v1805
        %2399 = vmatprep.subr.mxu0 %v1809
        %2400 = vmatpush1.msra.mxu0 %v1808
        %2401 = vmatprep.subr.mxu0 %v1812
        %2402 = vmatpush1.msra.mxu0 %v1811
        %2403 = vmatprep.subr.mxu0 %v1815
        %2404 = vmatpush1.msra.mxu0 %v1814
        %2405 = vmatprep.subr.mxu0 %v1818
        %2406 = vmatpush1.msra.mxu0 %v1817
        %2407 = vmatprep.subr.mxu0 %v1821
        %2408 = vmatpush1.msra.mxu0 %v1820
        %2409 = vmatprep.subr.mxu0 %v1824
        %2410 = vmatpush1.msra.mxu0 %v1823
        %2411 = vmatprep.subr.mxu0 %v1827
        %2412 = vmatpush1.msra.mxu0 %v1826
        %2413 = vmatprep.subr.mxu0 %v1830
        %2414 = vmatpush1.msra.mxu0 %v1829
        %2415 = vmatprep.subr.mxu0 %v1833
        %2416 = vmatpush1.msra.mxu0 %v1832
        %2417 = vmatprep.subr.mxu0 %v1836
        %2418 = vmatpush1.msra.mxu0 %v1835
        %2419 = vmatprep.subr.mxu0 %v1839
        %2420 = vmatpush1.msra.mxu0 %v1838
        %2421 = vmatprep.subr.mxu0 %v1842
        %2422 = vmatpush1.msra.mxu0 %v1841
        %2423 = vmatprep.subr.mxu0 %v1845
        %2424 = vmatpush1.msra.mxu0 %v1844
        %2425 = vmatprep.subr.mxu0 %v1848
        %2426 = vmatpush1.msra.mxu0 %v1847
        %2427 = vmatprep.subr.mxu0 %v1851
        %2428 = vmatpush1.msra.mxu0 %v1850
        %2429 = vmatprep.subr.mxu0 %v1854
        %2430 = vmatpush1.msra.mxu0 %v1853
        %2431 = vmatprep.subr.mxu0 %v1857
        %2432 = vmatpush1.msra.mxu0 %v1856
        %2433 = vmatprep.subr.mxu0 %v1860
        %2434 = vmatpush1.msra.mxu0 %v1859
        %2435 = vmatprep.subr.mxu0 %v1863
        %2436 = vmatpush1.msra.mxu0 %v1862
        %2437 = vmatprep.subr.mxu0 %v1866
        %2438 = vmatpush1.msra.mxu0 %v1865
        %2439 = vmatprep.subr.mxu0 %v1869
        %2440 = vmatpush1.msra.mxu0 %v1868
        %2441 = vmatprep.subr.mxu0 %v1872
        %2442 = vmatpush1.msra.mxu0 %v1871
        %2443 = vmatprep.subr.mxu0 %v1875
        %2444 = vmatpush1.msra.mxu0 %v1874
        %2445 = vmatprep.subr.mxu0 %v1878
        %2446 = vmatpush1.msra.mxu0 %v1877
        %2447 = vmatprep.subr.mxu0 %v1881
        %2448 = vmatpush1.msra.mxu0 %v1880
        %2449 = vmatprep.subr.mxu0 %v1884
        %2450 = vmatpush1.msra.mxu0 %v1883
        %2451 = vmatprep.subr.mxu0 %v1887
        %2452 = vmatpush1.msra.mxu0 %v1886
        %2453 = vmatprep.subr.mxu0 %v1890
        %2454 = vmatpush1.msra.mxu0 %v1889
        %2455 = vmatprep.subr.mxu0 %v1893
        %2456 = vmatpush1.msra.mxu0 %v1892
        %2457 = vmatprep.subr.mxu0 %v1896
        %2458 = vmatpush1.msra.mxu0 %v1895
        %2459 = vmatprep.mubr.f32.mxu0 %v1791
        %2460 = vmatmul.mubr.f32.gmra.mrb[0].mxu0 %v1790
        %v2461 = vpop.f32.mrb[0].mxu0
        %v2462 = vadd.f32 %v2383, %v2461
        %v2463 = vpop.f32.mrb[0].mxu0
        %v2464 = vadd.f32 %v2387, %v2463
        %2465 = vdwg.mxu0
        %2466 = vmatprep.subr.mxu0 %v1899
        %2467 = vmatpush1.msra.mxu0 %v1898
        %2468 = vmatprep.subr.mxu0 %v1902
        %2469 = vmatpush1.msra.mxu0 %v1901
        %2470 = vmatprep.subr.mxu0 %v1905
        %2471 = vmatpush1.msra.mxu0 %v1904
        %2472 = vmatprep.subr.mxu0 %v1908
        %2473 = vmatpush1.msra.mxu0 %v1907
        %2474 = vmatprep.subr.mxu0 %v1911
        %2475 = vmatpush1.msra.mxu0 %v1910
        %2476 = vmatprep.subr.mxu0 %v1914
        %2477 = vmatpush1.msra.mxu0 %v1913
        %2478 = vmatprep.subr.mxu0 %v1917
        %2479 = vmatpush1.msra.mxu0 %v1916
        %2480 = vmatprep.subr.mxu0 %v1920
        %2481 = vmatpush1.msra.mxu0 %v1919
        %2482 = vmatprep.subr.mxu0 %v1923
        %2483 = vmatpush1.msra.mxu0 %v1922
        %2484 = vmatprep.subr.mxu0 %v1926
        %2485 = vmatpush1.msra.mxu0 %v1925
        %2486 = vmatprep.subr.mxu0 %v1929
        %2487 = vmatpush1.msra.mxu0 %v1928
        %2488 = vmatprep.subr.mxu0 %v1932
        %2489 = vmatpush1.msra.mxu0 %v1931
        %2490 = vmatprep.subr.mxu0 %v1935
        %2491 = vmatpush1.msra.mxu0 %v1934
        %2492 = vmatprep.subr.mxu0 %v1938
        %2493 = vmatpush1.msra.mxu0 %v1937
        %2494 = vmatprep.subr.mxu0 %v1941
        %2495 = vmatpush1.msra.mxu0 %v1940
        %2496 = vmatprep.subr.mxu0 %v1944
        %2497 = vmatpush1.msra.mxu0 %v1943
        %2498 = vmatprep.subr.mxu0 %v1947
        %2499 = vmatpush1.msra.mxu0 %v1946
        %2500 = vmatprep.subr.mxu0 %v1950
        %2501 = vmatpush1.msra.mxu0 %v1949
        %2502 = vmatprep.subr.mxu0 %v1953
        %2503 = vmatpush1.msra.mxu0 %v1952
        %2504 = vmatprep.subr.mxu0 %v1956
        %2505 = vmatpush1.msra.mxu0 %v1955
        %2506 = vmatprep.subr.mxu0 %v1959
        %2507 = vmatpush1.msra.mxu0 %v1958
        %2508 = vmatprep.subr.mxu0 %v1962
        %2509 = vmatpush1.msra.mxu0 %v1961
        %2510 = vmatprep.subr.mxu0 %v1965
        %2511 = vmatpush1.msra.mxu0 %v1964
        %2512 = vmatprep.subr.mxu0 %v1968
        %2513 = vmatpush1.msra.mxu0 %v1967
        %2514 = vmatprep.subr.mxu0 %v1971
        %2515 = vmatpush1.msra.mxu0 %v1970
        %2516 = vmatprep.subr.mxu0 %v1974
        %2517 = vmatpush1.msra.mxu0 %v1973
        %2518 = vmatprep.subr.mxu0 %v1977
        %2519 = vmatpush1.msra.mxu0 %v1976
        %2520 = vmatprep.subr.mxu0 %v1980
        %2521 = vmatpush1.msra.mxu0 %v1979
        %2522 = vmatprep.subr.mxu0 %v1983
        %2523 = vmatpush1.msra.mxu0 %v1982
        %2524 = vmatprep.subr.mxu0 %v1986
        %2525 = vmatpush1.msra.mxu0 %v1985
        %2526 = vmatprep.subr.mxu0 %v1989
        %2527 = vmatpush1.msra.mxu0 %v1988
        %2528 = vmatprep.subr.mxu0 %v1992
        %2529 = vmatpush1.msra.mxu0 %v1991
        %2530 = vmatprep.mubr.f32.mxu0 %v1793
        %2531 = vmatmul.mubr.f32.gmra.mrb[0].mxu0 %v1792
        %v2532 = vpop.f32.mrb[0].mxu0
        %v2533 = vadd.f32 %v2462, %v2532
        %v2534 = vpop.f32.mrb[0].mxu0
        %v2535 = vadd.f32 %v2464, %v2534
        %2536 = vdwg.mxu0
        %2537 = vmatprep.subr.mxu0 %v1995
        %2538 = vmatpush1.msra.mxu0 %v1994
        %2539 = vmatprep.subr.mxu0 %v1998
        %2540 = vmatpush1.msra.mxu0 %v1997
        %2541 = vmatprep.subr.mxu0 %v2001
        %2542 = vmatpush1.msra.mxu0 %v2000
        %2543 = vmatprep.subr.mxu0 %v2004
        %2544 = vmatpush1.msra.mxu0 %v2003
        %2545 = vmatprep.subr.mxu0 %v2007
        %2546 = vmatpush1.msra.mxu0 %v2006
        %2547 = vmatprep.subr.mxu0 %v2010
        %2548 = vmatpush1.msra.mxu0 %v2009
        %2549 = vmatprep.subr.mxu0 %v2013
        %2550 = vmatpush1.msra.mxu0 %v2012
        %2551 = vmatprep.subr.mxu0 %v2016
        %2552 = vmatpush1.msra.mxu0 %v2015
        %2553 = vmatprep.subr.mxu0 %v2019
        %2554 = vmatpush1.msra.mxu0 %v2018
        %2555 = vmatprep.subr.mxu0 %v2022
        %2556 = vmatpush1.msra.mxu0 %v2021
        %2557 = vmatprep.subr.mxu0 %v2025
        %2558 = vmatpush1.msra.mxu0 %v2024
        %2559 = vmatprep.subr.mxu0 %v2028
        %2560 = vmatpush1.msra.mxu0 %v2027
        %2561 = vmatprep.subr.mxu0 %v2031
        %2562 = vmatpush1.msra.mxu0 %v2030
        %2563 = vmatprep.subr.mxu0 %v2034
        %2564 = vmatpush1.msra.mxu0 %v2033
        %2565 = vmatprep.subr.mxu0 %v2037
        %2566 = vmatpush1.msra.mxu0 %v2036
        %2567 = vmatprep.subr.mxu0 %v2040
        %2568 = vmatpush1.msra.mxu0 %v2039
        %2569 = vmatprep.subr.mxu0 %v2043
        %2570 = vmatpush1.msra.mxu0 %v2042
        %2571 = vmatprep.subr.mxu0 %v2046
        %2572 = vmatpush1.msra.mxu0 %v2045
        %2573 = vmatprep.subr.mxu0 %v2049
        %2574 = vmatpush1.msra.mxu0 %v2048
        %2575 = vmatprep.subr.mxu0 %v2052
        %2576 = vmatpush1.msra.mxu0 %v2051
        %2577 = vmatprep.subr.mxu0 %v2055
        %2578 = vmatpush1.msra.mxu0 %v2054
        %2579 = vmatprep.subr.mxu0 %v2058
        %2580 = vmatpush1.msra.mxu0 %v2057
        %2581 = vmatprep.subr.mxu0 %v2061
        %2582 = vmatpush1.msra.mxu0 %v2060
        %2583 = vmatprep.subr.mxu0 %v2064
        %2584 = vmatpush1.msra.mxu0 %v2063
        %2585 = vmatprep.subr.mxu0 %v2067
        %2586 = vmatpush1.msra.mxu0 %v2066
        %2587 = vmatprep.subr.mxu0 %v2070
        %2588 = vmatpush1.msra.mxu0 %v2069
        %2589 = vmatprep.subr.mxu0 %v2073
        %2590 = vmatpush1.msra.mxu0 %v2072
        %2591 = vmatprep.subr.mxu0 %v2076
        %2592 = vmatpush1.msra.mxu0 %v2075
        %2593 = vmatprep.subr.mxu0 %v2079
        %2594 = vmatpush1.msra.mxu0 %v2078
        %2595 = vmatprep.subr.mxu0 %v2082
        %2596 = vmatpush1.msra.mxu0 %v2081
        %2597 = vmatprep.subr.mxu0 %v2085
        %2598 = vmatpush1.msra.mxu0 %v2084
        %2599 = vmatprep.subr.mxu0 %v2088
        %2600 = vmatpush1.msra.mxu0 %v2087
        %2601 = vmatprep.mubr.f32.mxu0 %v1795
        %2602 = vmatmul.mubr.f32.gmra.mrb[0].mxu0 %v1794
        %v2603 = vpop.f32.mrb[0].mxu0
        %v2604 = vadd.f32 %v2533, %v2603
        %v2605 = vpop.f32.mrb[0].mxu0
        %v2606 = vadd.f32 %v2535, %v2605
        %2607 = vdwg.mxu0
        %2608 = vmatprep.subr.mxu0 %v2091
        %2609 = vmatpush1.msra.mxu0 %v2090
        %2610 = vmatprep.subr.mxu0 %v2094
        %2611 = vmatpush1.msra.mxu0 %v2093
        %2612 = vmatprep.subr.mxu0 %v2097
        %2613 = vmatpush1.msra.mxu0 %v2096
        %2614 = vmatprep.subr.mxu0 %v2100
        %2615 = vmatpush1.msra.mxu0 %v2099
        %2616 = vmatprep.subr.mxu0 %v2103
        %2617 = vmatpush1.msra.mxu0 %v2102
        %2618 = vmatprep.subr.mxu0 %v2106
        %2619 = vmatpush1.msra.mxu0 %v2105
        %2620 = vmatprep.subr.mxu0 %v2109
        %2621 = vmatpush1.msra.mxu0 %v2108
        %2622 = vmatprep.subr.mxu0 %v2112
        %2623 = vmatpush1.msra.mxu0 %v2111
        %2624 = vmatprep.subr.mxu0 %v2115
        %2625 = vmatpush1.msra.mxu0 %v2114
        %2626 = vmatprep.subr.mxu0 %v2118
        %2627 = vmatpush1.msra.mxu0 %v2117
        %2628 = vmatprep.subr.mxu0 %v2121
        %2629 = vmatpush1.msra.mxu0 %v2120
        %2630 = vmatprep.subr.mxu0 %v2124
        %2631 = vmatpush1.msra.mxu0 %v2123
        %2632 = vmatprep.subr.mxu0 %v2127
        %2633 = vmatpush1.msra.mxu0 %v2126
        %2634 = vmatprep.subr.mxu0 %v2130
        %2635 = vmatpush1.msra.mxu0 %v2129
        %2636 = vmatprep.subr.mxu0 %v2133
        %2637 = vmatpush1.msra.mxu0 %v2132
        %2638 = vmatprep.subr.mxu0 %v2136
        %2639 = vmatpush1.msra.mxu0 %v2135
        %2640 = vmatprep.subr.mxu0 %v2139
        %2641 = vmatpush1.msra.mxu0 %v2138
        %2642 = vmatprep.subr.mxu0 %v2142
        %2643 = vmatpush1.msra.mxu0 %v2141
        %2644 = vmatprep.subr.mxu0 %v2145
        %2645 = vmatpush1.msra.mxu0 %v2144
        %2646 = vmatprep.subr.mxu0 %v2148
        %2647 = vmatpush1.msra.mxu0 %v2147
        %2648 = vmatprep.subr.mxu0 %v2151
        %2649 = vmatpush1.msra.mxu0 %v2150
        %2650 = vmatprep.subr.mxu0 %v2154
        %2651 = vmatpush1.msra.mxu0 %v2153
        %2652 = vmatprep.subr.mxu0 %v2157
        %2653 = vmatpush1.msra.mxu0 %v2156
        %2654 = vmatprep.subr.mxu0 %v2160
        %2655 = vmatpush1.msra.mxu0 %v2159
        %2656 = vmatprep.subr.mxu0 %v2163
        %2657 = vmatpush1.msra.mxu0 %v2162
        %2658 = vmatprep.subr.mxu0 %v2166
        %2659 = vmatpush1.msra.mxu0 %v2165
        %2660 = vmatprep.subr.mxu0 %v2169
        %2661 = vmatpush1.msra.mxu0 %v2168
        %2662 = vmatprep.subr.mxu0 %v2172
        %2663 = vmatpush1.msra.mxu0 %v2171
        %2664 = vmatprep.subr.mxu0 %v2175
        %2665 = vmatpush1.msra.mxu0 %v2174
        %2666 = vmatprep.subr.mxu0 %v2178
        %2667 = vmatpush1.msra.mxu0 %v2177
        %2668 = vmatprep.subr.mxu0 %v2181
        %2669 = vmatpush1.msra.mxu0 %v2180
        %2670 = vmatprep.subr.mxu0 %v2184
        %2671 = vmatpush1.msra.mxu0 %v2183
        %2672 = vmatprep.mubr.f32.mxu0 %v1797
        %2673 = vmatmul.mubr.f32.gmra.mrb[0].mxu0 %v1796
        %v2674 = vpop.f32.mrb[0].mxu0
        %v2675 = vadd.f32 %v2604, %v2674
        %v2676 = vpop.f32.mrb[0].mxu0
        %v2677 = vadd.f32 %v2606, %v2676
        %2678 = vdwg.mxu0
        %2679 = vmatprep.subr.mxu0 %v2187
        %2680 = vmatpush1.msra.mxu0 %v2186
        %2681 = vmatprep.subr.mxu0 %v2190
        %2682 = vmatpush1.msra.mxu0 %v2189
        %2683 = vmatprep.subr.mxu0 %v2193
        %2684 = vmatpush1.msra.mxu0 %v2192
        %2685 = vmatprep.subr.mxu0 %v2196
        %2686 = vmatpush1.msra.mxu0 %v2195
        %2687 = vmatprep.subr.mxu0 %v2199
        %2688 = vmatpush1.msra.mxu0 %v2198
        %2689 = vmatprep.subr.mxu0 %v2202
        %2690 = vmatpush1.msra.mxu0 %v2201
        %2691 = vmatprep.subr.mxu0 %v2205
        %2692 = vmatpush1.msra.mxu0 %v2204
        %2693 = vmatprep.subr.mxu0 %v2208
        %2694 = vmatpush1.msra.mxu0 %v2207
        %2695 = vmatprep.subr.mxu0 %v2211
        %2696 = vmatpush1.msra.mxu0 %v2210
        %2697 = vmatprep.subr.mxu0 %v2214
        %2698 = vmatpush1.msra.mxu0 %v2213
        %2699 = vmatprep.subr.mxu0 %v2217
        %2700 = vmatpush1.msra.mxu0 %v2216
        %2701 = vmatprep.subr.mxu0 %v2220
        %2702 = vmatpush1.msra.mxu0 %v2219
        %2703 = vmatprep.subr.mxu0 %v2223
        %2704 = vmatpush1.msra.mxu0 %v2222
        %2705 = vmatprep.subr.mxu0 %v2226
        %2706 = vmatpush1.msra.mxu0 %v2225
        %2707 = vmatprep.subr.mxu0 %v2229
        %2708 = vmatpush1.msra.mxu0 %v2228
        %2709 = vmatprep.subr.mxu0 %v2232
        %2710 = vmatpush1.msra.mxu0 %v2231
        %2711 = vmatprep.subr.mxu0 %v2235
        %2712 = vmatpush1.msra.mxu0 %v2234
        %2713 = vmatprep.subr.mxu0 %v2238
        %2714 = vmatpush1.msra.mxu0 %v2237
        %2715 = vmatprep.subr.mxu0 %v2241
        %2716 = vmatpush1.msra.mxu0 %v2240
        %2717 = vmatprep.subr.mxu0 %v2244
        %2718 = vmatpush1.msra.mxu0 %v2243
        %2719 = vmatprep.subr.mxu0 %v2247
        %2720 = vmatpush1.msra.mxu0 %v2246
        %2721 = vmatprep.subr.mxu0 %v2250
        %2722 = vmatpush1.msra.mxu0 %v2249
        %2723 = vmatprep.subr.mxu0 %v2253
        %2724 = vmatpush1.msra.mxu0 %v2252
        %2725 = vmatprep.subr.mxu0 %v2256
        %2726 = vmatpush1.msra.mxu0 %v2255
        %2727 = vmatprep.subr.mxu0 %v2259
        %2728 = vmatpush1.msra.mxu0 %v2258
        %2729 = vmatprep.subr.mxu0 %v2262
        %2730 = vmatpush1.msra.mxu0 %v2261
        %2731 = vmatprep.subr.mxu0 %v2265
        %2732 = vmatpush1.msra.mxu0 %v2264
        %2733 = vmatprep.subr.mxu0 %v2268
        %2734 = vmatpush1.msra.mxu0 %v2267
        %2735 = vmatprep.subr.mxu0 %v2271
        %2736 = vmatpush1.msra.mxu0 %v2270
        %2737 = vmatprep.subr.mxu0 %v2274
        %2738 = vmatpush1.msra.mxu0 %v2273
        %2739 = vmatprep.subr.mxu0 %v2277
        %2740 = vmatpush1.msra.mxu0 %v2276
        %2741 = vmatprep.subr.mxu0 %v2280
        %2742 = vmatpush1.msra.mxu0 %v2279
        %2743 = vmatprep.mubr.f32.mxu0 %v1799
        %2744 = vmatmul.mubr.f32.gmra.mrb[0].mxu0 %v1798
        %v2745 = vpop.f32.mrb[0].mxu0
        %v2746 = vadd.f32 %v2675, %v2745
        %v2747 = vpop.f32.mrb[0].mxu0
        %v2748 = vadd.f32 %v2677, %v2747
        %2749 = vdwg.mxu0
        %2750 = vmatprep.subr.mxu0 %v2283
        %2751 = vmatpush1.msra.mxu0 %v2282
        %2752 = vmatprep.subr.mxu0 %v2286
        %2753 = vmatpush1.msra.mxu0 %v2285
        %2754 = vmatprep.subr.mxu0 %v2289
        %2755 = vmatpush1.msra.mxu0 %v2288
        %2756 = vmatprep.subr.mxu0 %v2292
        %2757 = vmatpush1.msra.mxu0 %v2291
        %2758 = vmatprep.subr.mxu0 %v2295
        %2759 = vmatpush1.msra.mxu0 %v2294
        %2760 = vmatprep.subr.mxu0 %v2298
        %2761 = vmatpush1.msra.mxu0 %v2297
        %2762 = vmatprep.subr.mxu0 %v2301
        %2763 = vmatpush1.msra.mxu0 %v2300
        %2764 = vmatprep.subr.mxu0 %v2304
        %2765 = vmatpush1.msra.mxu0 %v2303
        %2766 = vmatprep.subr.mxu0 %v2307
        %2767 = vmatpush1.msra.mxu0 %v2306
        %2768 = vmatprep.subr.mxu0 %v2310
        %2769 = vmatpush1.msra.mxu0 %v2309
        %2770 = vmatprep.subr.mxu0 %v2313
        %2771 = vmatpush1.msra.mxu0 %v2312
        %2772 = vmatprep.subr.mxu0 %v2316
        %2773 = vmatpush1.msra.mxu0 %v2315
        %2774 = vmatprep.subr.mxu0 %v2319
        %2775 = vmatpush1.msra.mxu0 %v2318
        %2776 = vmatprep.subr.mxu0 %v2322
        %2777 = vmatpush1.msra.mxu0 %v2321
        %2778 = vmatprep.subr.mxu0 %v2325
        %2779 = vmatpush1.msra.mxu0 %v2324
        %2780 = vmatprep.subr.mxu0 %v2328
        %2781 = vmatpush1.msra.mxu0 %v2327
        %2782 = vmatprep.subr.mxu0 %v2331
        %2783 = vmatpush1.msra.mxu0 %v2330
        %2784 = vmatprep.subr.mxu0 %v2334
        %2785 = vmatpush1.msra.mxu0 %v2333
        %2786 = vmatprep.subr.mxu0 %v2337
        %2787 = vmatpush1.msra.mxu0 %v2336
        %2788 = vmatprep.subr.mxu0 %v2340
        %2789 = vmatpush1.msra.mxu0 %v2339
        %2790 = vmatprep.subr.mxu0 %v2343
        %2791 = vmatpush1.msra.mxu0 %v2342
        %2792 = vmatprep.subr.mxu0 %v2346
        %2793 = vmatpush1.msra.mxu0 %v2345
        %2794 = vmatprep.subr.mxu0 %v2349
        %2795 = vmatpush1.msra.mxu0 %v2348
        %2796 = vmatprep.subr.mxu0 %v2352
        %2797 = vmatpush1.msra.mxu0 %v2351
        %2798 = vmatprep.subr.mxu0 %v2355
        %2799 = vmatpush1.msra.mxu0 %v2354
        %2800 = vmatprep.subr.mxu0 %v2358
        %2801 = vmatpush1.msra.mxu0 %v2357
        %2802 = vmatprep.subr.mxu0 %v2361
        %2803 = vmatpush1.msra.mxu0 %v2360
        %2804 = vmatprep.subr.mxu0 %v2364
        %2805 = vmatpush1.msra.mxu0 %v2363
        %2806 = vmatprep.subr.mxu0 %v2367
        %2807 = vmatpush1.msra.mxu0 %v2366
        %2808 = vmatprep.subr.mxu0 %v2370
        %2809 = vmatpush1.msra.mxu0 %v2369
        %2810 = vmatprep.subr.mxu0 %v2373
        %2811 = vmatpush1.msra.mxu0 %v2372
        %2812 = vmatprep.subr.mxu0 %v2376
        %2813 = vmatpush1.msra.mxu0 %v2375
        %2814 = vmatprep.mubr.f32.mxu0 %v1801
        %2815 = vmatmul.mubr.f32.gmra.mrb[0].mxu0 %v1800
        %v2816 = vpop.f32.mrb[0].mxu0
        %v2817 = vadd.f32 %v2746, %v2816
        %v2818 = vpop.f32.mrb[0].mxu0
        %v2819 = vadd.f32 %v2748, %v2818
        %2820 = vdwg.mxu0
        %2821 = vmatprep.subr.mxu0 0.0
        %2822 = vmatpush1.msra.mxu0 %v1804
        %2823 = vmatprep.subr.mxu0 0.0
        %2824 = vmatpush1.msra.mxu0 %v1807
        %2825 = vmatprep.subr.mxu0 0.0
        %2826 = vmatpush1.msra.mxu0 %v1810
        %2827 = vmatprep.subr.mxu0 0.0
        %2828 = vmatpush1.msra.mxu0 %v1813
        %2829 = vmatprep.subr.mxu0 0.0
        %2830 = vmatpush1.msra.mxu0 %v1816
        %2831 = vmatprep.subr.mxu0 0.0
        %2832 = vmatpush1.msra.mxu0 %v1819
        %2833 = vmatprep.subr.mxu0 0.0
        %2834 = vmatpush1.msra.mxu0 %v1822
        %2835 = vmatprep.subr.mxu0 0.0
        %2836 = vmatpush1.msra.mxu0 %v1825
        %2837 = vmatprep.subr.mxu0 0.0
        %2838 = vmatpush1.msra.mxu0 %v1828
        %2839 = vmatprep.subr.mxu0 0.0
        %2840 = vmatpush1.msra.mxu0 %v1831
        %2841 = vmatprep.subr.mxu0 0.0
        %2842 = vmatpush1.msra.mxu0 %v1834
        %2843 = vmatprep.subr.mxu0 0.0
        %2844 = vmatpush1.msra.mxu0 %v1837
        %2845 = vmatprep.subr.mxu0 0.0
        %2846 = vmatpush1.msra.mxu0 %v1840
        %2847 = vmatprep.subr.mxu0 0.0
        %2848 = vmatpush1.msra.mxu0 %v1843
        %2849 = vmatprep.subr.mxu0 0.0
        %2850 = vmatpush1.msra.mxu0 %v1846
        %2851 = vmatprep.subr.mxu0 0.0
        %2852 = vmatpush1.msra.mxu0 %v1849
        %2853 = vmatprep.subr.mxu0 0.0
        %2854 = vmatpush1.msra.mxu0 %v1852
        %2855 = vmatprep.subr.mxu0 0.0
        %2856 = vmatpush1.msra.mxu0 %v1855
        %2857 = vmatprep.subr.mxu0 0.0
        %2858 = vmatpush1.msra.mxu0 %v1858
        %2859 = vmatprep.subr.mxu0 0.0
        %2860 = vmatpush1.msra.mxu0 %v1861
        %2861 = vmatprep.subr.mxu0 0.0
        %2862 = vmatpush1.msra.mxu0 %v1864
        %2863 = vmatprep.subr.mxu0 0.0
        %2864 = vmatpush1.msra.mxu0 %v1867
        %2865 = vmatprep.subr.mxu0 0.0
        %2866 = vmatpush1.msra.mxu0 %v1870
        %2867 = vmatprep.subr.mxu0 0.0
        %2868 = vmatpush1.msra.mxu0 %v1873
        %2869 = vmatprep.subr.mxu0 0.0
        %2870 = vmatpush1.msra.mxu0 %v1876
        %2871 = vmatprep.subr.mxu0 0.0
        %2872 = vmatpush1.msra.mxu0 %v1879
        %2873 = vmatprep.subr.mxu0 0.0
        %2874 = vmatpush1.msra.mxu0 %v1882
        %2875 = vmatprep.subr.mxu0 0.0
        %2876 = vmatpush1.msra.mxu0 %v1885
        %2877 = vmatprep.subr.mxu0 0.0
        %2878 = vmatpush1.msra.mxu0 %v1888
        %2879 = vmatprep.subr.mxu0 0.0
        %2880 = vmatpush1.msra.mxu0 %v1891
        %2881 = vmatprep.subr.mxu0 0.0
        %2882 = vmatpush1.msra.mxu0 %v1894
        %2883 = vmatprep.subr.mxu0 0.0
        %2884 = vmatpush1.msra.mxu0 %v1897
        %2885 = vmatprep.mubr.f32.mxu0 %v1791
        %2886 = vmatmul.mubr.f32.gmra.mrb[0].mxu0 %v1790
        %v2887 = vpop.f32.mrb[0].mxu0
        %v2888 = vadd.f32 %v2391, %v2887
        %v2889 = vpop.f32.mrb[0].mxu0
        %2890 = vdwg.mxu0
        %2891 = vmatprep.subr.mxu0 0.0
        %2892 = vmatpush1.msra.mxu0 %v1900
        %2893 = vmatprep.subr.mxu0 0.0
        %2894 = vmatpush1.msra.mxu0 %v1903
        %2895 = vmatprep.subr.mxu0 0.0
        %2896 = vmatpush1.msra.mxu0 %v1906
        %2897 = vmatprep.subr.mxu0 0.0
        %2898 = vmatpush1.msra.mxu0 %v1909
        %2899 = vmatprep.subr.mxu0 0.0
        %2900 = vmatpush1.msra.mxu0 %v1912
        %2901 = vmatprep.subr.mxu0 0.0
        %2902 = vmatpush1.msra.mxu0 %v1915
        %2903 = vmatprep.subr.mxu0 0.0
        %2904 = vmatpush1.msra.mxu0 %v1918
        %2905 = vmatprep.subr.mxu0 0.0
        %2906 = vmatpush1.msra.mxu0 %v1921
        %2907 = vmatprep.subr.mxu0 0.0
        %2908 = vmatpush1.msra.mxu0 %v1924
        %2909 = vmatprep.subr.mxu0 0.0
        %2910 = vmatpush1.msra.mxu0 %v1927
        %2911 = vmatprep.subr.mxu0 0.0
        %2912 = vmatpush1.msra.mxu0 %v1930
        %2913 = vmatprep.subr.mxu0 0.0
        %2914 = vmatpush1.msra.mxu0 %v1933
        %2915 = vmatprep.subr.mxu0 0.0
        %2916 = vmatpush1.msra.mxu0 %v1936
        %2917 = vmatprep.subr.mxu0 0.0
        %2918 = vmatpush1.msra.mxu0 %v1939
        %2919 = vmatprep.subr.mxu0 0.0
        %2920 = vmatpush1.msra.mxu0 %v1942
        %2921 = vmatprep.subr.mxu0 0.0
        %2922 = vmatpush1.msra.mxu0 %v1945
        %2923 = vmatprep.subr.mxu0 0.0
        %2924 = vmatpush1.msra.mxu0 %v1948
        %2925 = vmatprep.subr.mxu0 0.0
        %2926 = vmatpush1.msra.mxu0 %v1951
        %2927 = vmatprep.subr.mxu0 0.0
        %2928 = vmatpush1.msra.mxu0 %v1954
        %2929 = vmatprep.subr.mxu0 0.0
        %2930 = vmatpush1.msra.mxu0 %v1957
        %2931 = vmatprep.subr.mxu0 0.0
        %2932 = vmatpush1.msra.mxu0 %v1960
        %2933 = vmatprep.subr.mxu0 0.0
        %2934 = vmatpush1.msra.mxu0 %v1963
        %2935 = vmatprep.subr.mxu0 0.0
        %2936 = vmatpush1.msra.mxu0 %v1966
        %2937 = vmatprep.subr.mxu0 0.0
        %2938 = vmatpush1.msra.mxu0 %v1969
        %2939 = vmatprep.subr.mxu0 0.0
        %2940 = vmatpush1.msra.mxu0 %v1972
        %2941 = vmatprep.subr.mxu0 0.0
        %2942 = vmatpush1.msra.mxu0 %v1975
        %2943 = vmatprep.subr.mxu0 0.0
        %2944 = vmatpush1.msra.mxu0 %v1978
        %2945 = vmatprep.subr.mxu0 0.0
        %2946 = vmatpush1.msra.mxu0 %v1981
        %2947 = vmatprep.subr.mxu0 0.0
        %2948 = vmatpush1.msra.mxu0 %v1984
        %2949 = vmatprep.subr.mxu0 0.0
        %2950 = vmatpush1.msra.mxu0 %v1987
        %2951 = vmatprep.subr.mxu0 0.0
        %2952 = vmatpush1.msra.mxu0 %v1990
        %2953 = vmatprep.subr.mxu0 0.0
        %2954 = vmatpush1.msra.mxu0 %v1993
        %2955 = vmatprep.mubr.f32.mxu0 %v1793
        %2956 = vmatmul.mubr.f32.gmra.mrb[0].mxu0 %v1792
        %v2957 = vpop.f32.mrb[0].mxu0
        %v2958 = vadd.f32 %v2888, %v2957
        %v2959 = vpop.f32.mrb[0].mxu0
        %2960 = vdwg.mxu0
        %2961 = vmatprep.subr.mxu0 0.0
        %2962 = vmatpush1.msra.mxu0 %v1996
        %2963 = vmatprep.subr.mxu0 0.0
        %2964 = vmatpush1.msra.mxu0 %v1999
        %2965 = vmatprep.subr.mxu0 0.0
        %2966 = vmatpush1.msra.mxu0 %v2002
        %2967 = vmatprep.subr.mxu0 0.0
        %2968 = vmatpush1.msra.mxu0 %v2005
        %2969 = vmatprep.subr.mxu0 0.0
        %2970 = vmatpush1.msra.mxu0 %v2008
        %2971 = vmatprep.subr.mxu0 0.0
        %2972 = vmatpush1.msra.mxu0 %v2011
        %2973 = vmatprep.subr.mxu0 0.0
        %2974 = vmatpush1.msra.mxu0 %v2014
        %2975 = vmatprep.subr.mxu0 0.0
        %2976 = vmatpush1.msra.mxu0 %v2017
        %2977 = vmatprep.subr.mxu0 0.0
        %2978 = vmatpush1.msra.mxu0 %v2020
        %2979 = vmatprep.subr.mxu0 0.0
        %2980 = vmatpush1.msra.mxu0 %v2023
        %2981 = vmatprep.subr.mxu0 0.0
        %2982 = vmatpush1.msra.mxu0 %v2026
        %2983 = vmatprep.subr.mxu0 0.0
        %2984 = vmatpush1.msra.mxu0 %v2029
        %2985 = vmatprep.subr.mxu0 0.0
        %2986 = vmatpush1.msra.mxu0 %v2032
        %2987 = vmatprep.subr.mxu0 0.0
        %2988 = vmatpush1.msra.mxu0 %v2035
        %2989 = vmatprep.subr.mxu0 0.0
        %2990 = vmatpush1.msra.mxu0 %v2038
        %2991 = vmatprep.subr.mxu0 0.0
        %2992 = vmatpush1.msra.mxu0 %v2041
        %2993 = vmatprep.subr.mxu0 0.0
        %2994 = vmatpush1.msra.mxu0 %v2044
        %2995 = vmatprep.subr.mxu0 0.0
        %2996 = vmatpush1.msra.mxu0 %v2047
        %2997 = vmatprep.subr.mxu0 0.0
        %2998 = vmatpush1.msra.mxu0 %v2050
        %2999 = vmatprep.subr.mxu0 0.0
        %3000 = vmatpush1.msra.mxu0 %v2053
        %3001 = vmatprep.subr.mxu0 0.0
        %3002 = vmatpush1.msra.mxu0 %v2056
        %3003 = vmatprep.subr.mxu0 0.0
        %3004 = vmatpush1.msra.mxu0 %v2059
        %3005 = vmatprep.subr.mxu0 0.0
        %3006 = vmatpush1.msra.mxu0 %v2062
        %3007 = vmatprep.subr.mxu0 0.0
        %3008 = vmatpush1.msra.mxu0 %v2065
        %3009 = vmatprep.subr.mxu0 0.0
        %3010 = vmatpush1.msra.mxu0 %v2068
        %3011 = vmatprep.subr.mxu0 0.0
        %3012 = vmatpush1.msra.mxu0 %v2071
        %3013 = vmatprep.subr.mxu0 0.0
        %3014 = vmatpush1.msra.mxu0 %v2074
        %3015 = vmatprep.subr.mxu0 0.0
        %3016 = vmatpush1.msra.mxu0 %v2077
        %3017 = vmatprep.subr.mxu0 0.0
        %3018 = vmatpush1.msra.mxu0 %v2080
        %3019 = vmatprep.subr.mxu0 0.0
        %3020 = vmatpush1.msra.mxu0 %v2083
        %3021 = vmatprep.subr.mxu0 0.0
        %3022 = vmatpush1.msra.mxu0 %v2086
        %3023 = vmatprep.subr.mxu0 0.0
        %3024 = vmatpush1.msra.mxu0 %v2089
        %3025 = vmatprep.mubr.f32.mxu0 %v1795
        %3026 = vmatmul.mubr.f32.gmra.mrb[0].mxu0 %v1794
        %v3027 = vpop.f32.mrb[0].mxu0
        %v3028 = vadd.f32 %v2958, %v3027
        %v3029 = vpop.f32.mrb[0].mxu0
        %3030 = vdwg.mxu0
        %3031 = vmatprep.subr.mxu0 0.0
        %3032 = vmatpush1.msra.mxu0 %v2092
        %3033 = vmatprep.subr.mxu0 0.0
        %3034 = vmatpush1.msra.mxu0 %v2095
        %3035 = vmatprep.subr.mxu0 0.0
        %3036 = vmatpush1.msra.mxu0 %v2098
        %3037 = vmatprep.subr.mxu0 0.0
        %3038 = vmatpush1.msra.mxu0 %v2101
        %3039 = vmatprep.subr.mxu0 0.0
        %3040 = vmatpush1.msra.mxu0 %v2104
        %3041 = vmatprep.subr.mxu0 0.0
        %3042 = vmatpush1.msra.mxu0 %v2107
        %3043 = vmatprep.subr.mxu0 0.0
        %3044 = vmatpush1.msra.mxu0 %v2110
        %3045 = vmatprep.subr.mxu0 0.0
        %3046 = vmatpush1.msra.mxu0 %v2113
        %3047 = vmatprep.subr.mxu0 0.0
        %3048 = vmatpush1.msra.mxu0 %v2116
        %3049 = vmatprep.subr.mxu0 0.0
        %3050 = vmatpush1.msra.mxu0 %v2119
        %3051 = vmatprep.subr.mxu0 0.0
        %3052 = vmatpush1.msra.mxu0 %v2122
        %3053 = vmatprep.subr.mxu0 0.0
        %3054 = vmatpush1.msra.mxu0 %v2125
        %3055 = vmatprep.subr.mxu0 0.0
        %3056 = vmatpush1.msra.mxu0 %v2128
        %3057 = vmatprep.subr.mxu0 0.0
        %3058 = vmatpush1.msra.mxu0 %v2131
        %3059 = vmatprep.subr.mxu0 0.0
        %3060 = vmatpush1.msra.mxu0 %v2134
        %3061 = vmatprep.subr.mxu0 0.0
        %3062 = vmatpush1.msra.mxu0 %v2137
        %3063 = vmatprep.subr.mxu0 0.0
        %3064 = vmatpush1.msra.mxu0 %v2140
        %3065 = vmatprep.subr.mxu0 0.0
        %3066 = vmatpush1.msra.mxu0 %v2143
        %3067 = vmatprep.subr.mxu0 0.0
        %3068 = vmatpush1.msra.mxu0 %v2146
        %3069 = vmatprep.subr.mxu0 0.0
        %3070 = vmatpush1.msra.mxu0 %v2149
        %3071 = vmatprep.subr.mxu0 0.0
        %3072 = vmatpush1.msra.mxu0 %v2152
        %3073 = vmatprep.subr.mxu0 0.0
        %3074 = vmatpush1.msra.mxu0 %v2155
        %3075 = vmatprep.subr.mxu0 0.0
        %3076 = vmatpush1.msra.mxu0 %v2158
        %3077 = vmatprep.subr.mxu0 0.0
        %3078 = vmatpush1.msra.mxu0 %v2161
        %3079 = vmatprep.subr.mxu0 0.0
        %3080 = vmatpush1.msra.mxu0 %v2164
        %3081 = vmatprep.subr.mxu0 0.0
        %3082 = vmatpush1.msra.mxu0 %v2167
        %3083 = vmatprep.subr.mxu0 0.0
        %3084 = vmatpush1.msra.mxu0 %v2170
        %3085 = vmatprep.subr.mxu0 0.0
        %3086 = vmatpush1.msra.mxu0 %v2173
        %3087 = vmatprep.subr.mxu0 0.0
        %3088 = vmatpush1.msra.mxu0 %v2176
        %3089 = vmatprep.subr.mxu0 0.0
        %3090 = vmatpush1.msra.mxu0 %v2179
        %3091 = vmatprep.subr.mxu0 0.0
        %3092 = vmatpush1.msra.mxu0 %v2182
        %3093 = vmatprep.subr.mxu0 0.0
        %3094 = vmatpush1.msra.mxu0 %v2185
        %3095 = vmatprep.mubr.f32.mxu0 %v1797
        %3096 = vmatmul.mubr.f32.gmra.mrb[0].mxu0 %v1796
        %v3097 = vpop.f32.mrb[0].mxu0
        %v3098 = vadd.f32 %v3028, %v3097
        %v3099 = vpop.f32.mrb[0].mxu0
        %3100 = vdwg.mxu0
        %3101 = vmatprep.subr.mxu0 0.0
        %3102 = vmatpush1.msra.mxu0 %v2188
        %3103 = vmatprep.subr.mxu0 0.0
        %3104 = vmatpush1.msra.mxu0 %v2191
        %3105 = vmatprep.subr.mxu0 0.0
        %3106 = vmatpush1.msra.mxu0 %v2194
        %3107 = vmatprep.subr.mxu0 0.0
        %3108 = vmatpush1.msra.mxu0 %v2197
        %3109 = vmatprep.subr.mxu0 0.0
        %3110 = vmatpush1.msra.mxu0 %v2200
        %3111 = vmatprep.subr.mxu0 0.0
        %3112 = vmatpush1.msra.mxu0 %v2203
        %3113 = vmatprep.subr.mxu0 0.0
        %3114 = vmatpush1.msra.mxu0 %v2206
        %3115 = vmatprep.subr.mxu0 0.0
        %3116 = vmatpush1.msra.mxu0 %v2209
        %3117 = vmatprep.subr.mxu0 0.0
        %3118 = vmatpush1.msra.mxu0 %v2212
        %3119 = vmatprep.subr.mxu0 0.0
        %3120 = vmatpush1.msra.mxu0 %v2215
        %3121 = vmatprep.subr.mxu0 0.0
        %3122 = vmatpush1.msra.mxu0 %v2218
        %3123 = vmatprep.subr.mxu0 0.0
        %3124 = vmatpush1.msra.mxu0 %v2221
        %3125 = vmatprep.subr.mxu0 0.0
        %3126 = vmatpush1.msra.mxu0 %v2224
        %3127 = vmatprep.subr.mxu0 0.0
        %3128 = vmatpush1.msra.mxu0 %v2227
        %3129 = vmatprep.subr.mxu0 0.0
        %3130 = vmatpush1.msra.mxu0 %v2230
        %3131 = vmatprep.subr.mxu0 0.0
        %3132 = vmatpush1.msra.mxu0 %v2233
        %3133 = vmatprep.subr.mxu0 0.0
        %3134 = vmatpush1.msra.mxu0 %v2236
        %3135 = vmatprep.subr.mxu0 0.0
        %3136 = vmatpush1.msra.mxu0 %v2239
        %3137 = vmatprep.subr.mxu0 0.0
        %3138 = vmatpush1.msra.mxu0 %v2242
        %3139 = vmatprep.subr.mxu0 0.0
        %3140 = vmatpush1.msra.mxu0 %v2245
        %3141 = vmatprep.subr.mxu0 0.0
        %3142 = vmatpush1.msra.mxu0 %v2248
        %3143 = vmatprep.subr.mxu0 0.0
        %3144 = vmatpush1.msra.mxu0 %v2251
        %3145 = vmatprep.subr.mxu0 0.0
        %3146 = vmatpush1.msra.mxu0 %v2254
        %3147 = vmatprep.subr.mxu0 0.0
        %3148 = vmatpush1.msra.mxu0 %v2257
        %3149 = vmatprep.subr.mxu0 0.0
        %3150 = vmatpush1.msra.mxu0 %v2260
        %3151 = vmatprep.subr.mxu0 0.0
        %3152 = vmatpush1.msra.mxu0 %v2263
        %3153 = vmatprep.subr.mxu0 0.0
        %3154 = vmatpush1.msra.mxu0 %v2266
        %3155 = vmatprep.subr.mxu0 0.0
        %3156 = vmatpush1.msra.mxu0 %v2269
        %3157 = vmatprep.subr.mxu0 0.0
        %3158 = vmatpush1.msra.mxu0 %v2272
        %3159 = vmatprep.subr.mxu0 0.0
        %3160 = vmatpush1.msra.mxu0 %v2275
        %3161 = vmatprep.subr.mxu0 0.0
        %3162 = vmatpush1.msra.mxu0 %v2278
        %3163 = vmatprep.subr.mxu0 0.0
        %3164 = vmatpush1.msra.mxu0 %v2281
        %3165 = vmatprep.mubr.f32.mxu0 %v1799
        %3166 = vmatmul.mubr.f32.gmra.mrb[0].mxu0 %v1798
        %v3167 = vpop.f32.mrb[0].mxu0
        %v3168 = vadd.f32 %v3098, %v3167
        %v3169 = vpop.f32.mrb[0].mxu0
        %3170 = vdwg.mxu0
        %3171 = vmatprep.subr.mxu0 0.0
        %3172 = vmatpush1.msra.mxu0 %v2284
        %3173 = vmatprep.subr.mxu0 0.0
        %3174 = vmatpush1.msra.mxu0 %v2287
        %3175 = vmatprep.subr.mxu0 0.0
        %3176 = vmatpush1.msra.mxu0 %v2290
        %3177 = vmatprep.subr.mxu0 0.0
        %3178 = vmatpush1.msra.mxu0 %v2293
        %3179 = vmatprep.subr.mxu0 0.0
        %3180 = vmatpush1.msra.mxu0 %v2296
        %3181 = vmatprep.subr.mxu0 0.0
        %3182 = vmatpush1.msra.mxu0 %v2299
        %3183 = vmatprep.subr.mxu0 0.0
        %3184 = vmatpush1.msra.mxu0 %v2302
        %3185 = vmatprep.subr.mxu0 0.0
        %3186 = vmatpush1.msra.mxu0 %v2305
        %3187 = vmatprep.subr.mxu0 0.0
        %3188 = vmatpush1.msra.mxu0 %v2308
        %3189 = vmatprep.subr.mxu0 0.0
        %3190 = vmatpush1.msra.mxu0 %v2311
        %3191 = vmatprep.subr.mxu0 0.0
        %3192 = vmatpush1.msra.mxu0 %v2314
        %3193 = vmatprep.subr.mxu0 0.0
        %3194 = vmatpush1.msra.mxu0 %v2317
        %3195 = vmatprep.subr.mxu0 0.0
        %3196 = vmatpush1.msra.mxu0 %v2320
        %3197 = vmatprep.subr.mxu0 0.0
        %3198 = vmatpush1.msra.mxu0 %v2323
        %3199 = vmatprep.subr.mxu0 0.0
        %3200 = vmatpush1.msra.mxu0 %v2326
        %3201 = vmatprep.subr.mxu0 0.0
        %3202 = vmatpush1.msra.mxu0 %v2329
        %3203 = vmatprep.subr.mxu0 0.0
        %3204 = vmatpush1.msra.mxu0 %v2332
        %3205 = vmatprep.subr.mxu0 0.0
        %3206 = vmatpush1.msra.mxu0 %v2335
        %3207 = vmatprep.subr.mxu0 0.0
        %3208 = vmatpush1.msra.mxu0 %v2338
        %3209 = vmatprep.subr.mxu0 0.0
        %3210 = vmatpush1.msra.mxu0 %v2341
        %3211 = vmatprep.subr.mxu0 0.0
        %3212 = vmatpush1.msra.mxu0 %v2344
        %3213 = vmatprep.subr.mxu0 0.0
        %3214 = vmatpush1.msra.mxu0 %v2347
        %3215 = vmatprep.subr.mxu0 0.0
        %3216 = vmatpush1.msra.mxu0 %v2350
        %3217 = vmatprep.subr.mxu0 0.0
        %3218 = vmatpush1.msra.mxu0 %v2353
        %3219 = vmatprep.subr.mxu0 0.0
        %3220 = vmatpush1.msra.mxu0 %v2356
        %3221 = vmatprep.subr.mxu0 0.0
        %3222 = vmatpush1.msra.mxu0 %v2359
        %3223 = vmatprep.subr.mxu0 0.0
        %3224 = vmatpush1.msra.mxu0 %v2362
        %3225 = vmatprep.subr.mxu0 0.0
        %3226 = vmatpush1.msra.mxu0 %v2365
        %3227 = vmatprep.subr.mxu0 0.0
        %3228 = vmatpush1.msra.mxu0 %v2368
        %3229 = vmatprep.subr.mxu0 0.0
        %3230 = vmatpush1.msra.mxu0 %v2371
        %3231 = vmatprep.subr.mxu0 0.0
        %3232 = vmatpush1.msra.mxu0 %v2374
        %3233 = vmatprep.subr.mxu0 0.0
        %3234 = vmatpush1.msra.mxu0 %v2377
        %3235 = vmatprep.mubr.f32.mxu0 %v1801
        %3236 = vmatmul.mubr.f32.gmra.mrb[0].mxu0 %v1800
        %v3237 = vpop.f32.mrb[0].mxu0
        %v3238 = vadd.f32 %v3168, %v3237
        %v3239 = vpop.f32.mrb[0].mxu0
        %3240 = vdwg.mxu0
        %3241 = vst [vmem:[%s294] sm:$0xff] %v2817
        %3242 = vst [vmem:[%s294 + $0x8] sm:$0xff] %v2819
        %3243 = vst [vmem:[%s294 + $0x10] sm:$0xff] %v3238
        %s3244 = sand.u32 %s142, 1
        %s3245 = scalar_lea.sflag [#allocation4], %s3244
        %s3246 = sand.u32 %s142, 1
        %s3247 = smul.addr %s3246, 24
        %s3248 = scalar_lea.vmem [#allocation11], %s3247
        // Predicated region
        $region61: #{feed_forward.1} parent=39 // pred_check
          %p3249 = pneg %p152
        $region62: #{feed_forward.1} parent=39 // pred_check_branch
          %3251 = sbr.rel (%p3249) target = $region64
        $region63: #{feed_forward.1} parent=39 // pred_region
          %s3253 = ssub.s32 384, 384
          %3254 = vsyncadd %s3245, %s3253
          %s3255 = smul.addr %s24, 3
          %s3256 = smul.addr %s3255, 128
          %s3257 = scalar_lea.hbm %s5, %s3256
          %s3259 = sshll.u32 %s3248, 4
          %s3260 = int_to_ptr.vmem [resolvable:$true] %s3259
          %3262 = dma.vmem_to_hbm [thread:$0]  %s3260, 384, %s3257, %s3245
        $region64: #{feed_forward.1} parent=39 // pred_fallthru
          _
      $region40: #{feed_forward.1} parent=5 // pred_fallthru
        _
      %p3263 = scmp.le.s32.totalorder 2, %s19
      // Predicated region
      $region65: #{feed_forward.1} parent=5 // pred_check
        %p3264 = pneg %p3263
      $region66: #{feed_forward.1} parent=5 // pred_check_branch
        %3266 = sbr.rel (%p3264) target = $region68
      $region67: #{feed_forward.1} parent=5 // pred_region
        %s3267 = ssub.s32 %s19, 2
        // Predicated region
        $region69: #{feed_forward.1} parent=67 // pred_check
          %p3268 = pneg %p158
        $region70: #{feed_forward.1} parent=67 // pred_check_branch
          %3270 = sbr.rel (%p3268) target = $region72
        $region71: #{feed_forward.1} parent=67 // pred_region
          %s3271 = sand.u32 %s143, 1
          %s3272 = scalar_lea.sflag [#allocation4], %s3271
          %s3273 = sand.u32 %s143, 1
          %s3274 = smul.addr %s3273, 24
          %s3275 = scalar_lea.vmem [#allocation11], %s3274
          %3276 = dma.done %s3272, 384
        $region72: #{feed_forward.1} parent=67 // pred_fallthru
          _
      $region68: #{feed_forward.1} parent=5 // pred_fallthru
        _
    $region6: #{feed_forward.1} parent=1 // loop_footer
      %s23 = sadd.s32 1, %s19
    $region7: #{feed_forward.1} parent=1 // loop_footer_branch
      %18 = sbr.rel target = $region3
    $region8: #{feed_forward.1} parent=1 // loop_exit
      _
    %3277 = vsyncpa [#allocation3], 1
    %s3278 = scalar_lea.sflag [#allocation3], 1
    %3279 = vsyncpa %s3278, 1
    %3280 = vsyncpa [#allocation6], 1
    %3281 = vsyncpa [#allocation9], 1
    %3282 = vsyncpa [#allocation4], 1
    %s3283 = scalar_lea.sflag [#allocation4], 1
    %3284 = vsyncpa %s3283, 1

</llo_original>
